<compile_context>
chip_gen: v6e
topology: v6e:2x2x1
jax: 0.10.0
libtpu: 0.0.40
codegen_flags: <defaults>
</compile_context>

<pallas_src>
import jax
import jax.numpy as jnp
from jax import lax
from jax.experimental import pallas as pl
from jax.experimental.pallas import tpu as pltpu

# ----------------------------------------------------------------------------
# Model geometry (synthetic CNN encoder: Conv2d(4,8,3,p=1)+ReLU+Flatten+Linear(2048,230))
# ----------------------------------------------------------------------------
C_IN = 4
C_MID = 8
H = W = 16
P256 = H * W                 # 256 spatial positions (one lane per output pixel)
LANEW = 512                  # lane-padded input slab width (zero margins for shifts)
OFF = 128                    # image offset inside the slab (128-aligned)
D230 = 230
D256 = 256                   # 230 padded up to a lane multiple
DH = 128
DZ = 64
OUT_W = 2 * D256 + 4 * DZ    # 768 = [cls | x1 | z1 z4 | z2 z3]


# ----------------------------------------------------------------------------
# Fused Pallas kernel: conv (masked lane shifts + 1 matmul) + fc + all five heads
# ----------------------------------------------------------------------------
def _fused_kernel(x_ref, wconv_ref, bconv_ref, wfc_ref, bfc_ref,
                  wa1_ref, ba1_ref, wa2_ref, ba2_ref,
                  wd1_ref, bd1_ref, wd2_ref, bd2_ref,
                  wb1_ref, bb1_ref, wb2_ref, bb2_ref,
                  out_ref):
    f32 = jnp.float32
    bf16 = jnp.bfloat16
    BC = x_ref.shape[0]              # B * C_IN
    B = BC // C_IN

    # ---- In-kernel zero padding (no wrapper jnp.pad): (B*C, 256) -> (B*C, 512).
    xv = x_ref[...]
    zpad = jnp.zeros((BC, OFF), f32)
    xs = jnp.concatenate([zpad, xv, zpad], axis=1)            # (BC, 512)

    # Column masks kill row wrap-around for the left/right kernel taps; vertical
    # overflow lands in the zero margins automatically.
    col = lax.broadcasted_iota(jnp.int32, (BC, LANEW), 1) % W
    src_l = jnp.where(col == W - 1, 0.0, xs)                  # kw == 0 taps
    src_r = jnp.where(col == 0, 0.0, xs)                      # kw == 2 taps

    # ---- 9 lane-shifted slabs, hoisted out of the batch loop, stacked on sublanes.
    slabs = []
    for kh in range(3):
        for kw in range(3):
            src = src_l if kw == 0 else (src_r if kw == 2 else xs)
            s = OFF + (kh - 1) * W + (kw - 1)
            slabs.append(src[:, s:s + P256])                  # (BC, 256)
    rhs = jnp.concatenate(slabs, axis=0)                      # (9*BC, 256)

    # ---- Conv2d(4->8, 3x3, pad=1) + bias + ReLU: ONE matmul, rows = (co, b).
    conv = jnp.dot(wconv_ref[...], rhs, preferred_element_type=f32)   # (8*B, 256)
    conv = jnp.maximum(conv + bconv_ref[...], 0.0)

    # ---- NCHW flatten -> (B, 2048) lane row (channel-major), then one FC matmul.
    fc_in = jnp.concatenate(
        [conv[co * B:(co + 1) * B, :] for co in range(C_MID)], axis=1)  # (B, 2048)
    cls = jnp.dot(fc_in.astype(bf16), wfc_ref[...],
                  preferred_element_type=f32) + bfc_ref[...]            # (B, 256)

    # ---- encoder1 + discriminator(cls): stacked layer-1, block-diag layer-2.
    hA = jnp.maximum(jnp.dot(cls.astype(bf16), wa1_ref[...],
                             preferred_element_type=f32) + ba1_ref[...], 0.0)
    zA = jnp.dot(hA.astype(bf16), wa2_ref[...],
                 preferred_element_type=f32) + ba2_ref[...]   # (B, 128) = [z1 | z4]

    # ---- decoder: 64 -> 128 -> 230(256).
    z1 = zA[:, :DZ]
    hD = jnp.maximum(jnp.dot(z1.astype(bf16), wd1_ref[...],
                             preferred_element_type=f32) + bd1_ref[...], 0.0)
    x1 = jnp.dot(hD.astype(bf16), wd2_ref[...],
                 preferred_element_type=f32) + bd2_ref[...]   # (B, 256)

    # ---- encoder2 + discriminator(x1): stacked layer-1, block-diag layer-2.
    hB = jnp.maximum(jnp.dot(x1.astype(bf16), wb1_ref[...],
                             preferred_element_type=f32) + bb1_ref[...], 0.0)
    zB = jnp.dot(hB.astype(bf16), wb2_ref[...],
                 preferred_element_type=f32) + bb2_ref[...]   # (B, 128) = [z2 | z3]

    # ---- one lane-dense output slab (all offsets are multiples of 128).
    out_ref[...] = jnp.concatenate([cls, x1, zA, zB], axis=1)  # (B, 768)


# ----------------------------------------------------------------------------
# Parameter init (PyTorch-style layouts) and one-time folding into kernel layout
# ----------------------------------------------------------------------------
def _init_linear(key, fan_in, fan_out):
    kw, kb = jax.random.split(key)
    bound = 1.0 / jnp.sqrt(float(fan_in))
    w = jax.random.uniform(kw, (fan_out, fan_in), jnp.float32, -bound, bound)
    b = jax.random.uniform(kb, (fan_out,), jnp.float32, -bound, bound)
    return w, b


def _init_conv(key, c_in, c_out, k):
    kw, kb = jax.random.split(key)
    fan_in = c_in * k * k
    bound = 1.0 / jnp.sqrt(float(fan_in))
    w = jax.random.uniform(kw, (c_out, c_in, k, k), jnp.float32, -bound, bound)
    b = jax.random.uniform(kb, (c_out,), jnp.float32, -bound, bound)
    return w, b


def init_params(key):
    keys = jax.random.split(key, 10)
    p = {}
    p["conv_w"], p["conv_b"] = _init_conv(keys[0], C_IN, C_MID, 3)
    p["fc_w"], p["fc_b"] = _init_linear(keys[1], C_MID * H * W, D230)
    p["enc1_w1"], p["enc1_b1"] = _init_linear(keys[2], D230, DH)
    p["enc1_w2"], p["enc1_b2"] = _init_linear(keys[3], DH, DZ)
    p["dec_w1"], p["dec_b1"] = _init_linear(keys[4], DZ, DH)
    p["dec_w2"], p["dec_b2"] = _init_linear(keys[5], DH, D230)
    p["enc2_w1"], p["enc2_b1"] = _init_linear(keys[6], D230, DH)
    p["enc2_w2"], p["enc2_b2"] = _init_linear(keys[7], DH, DZ)
    p["disc_w1"], p["disc_b1"] = _init_linear(keys[8], D230, DH)
    p["disc_w2"], p["disc_b2"] = _init_linear(keys[9], DH, DZ)
    return p


def prepare_kernel_params(p, batch):
    """One-time fold of PyTorch-layout params into kernel-ready layout."""
    bf16 = jnp.bfloat16
    B = batch
    kp = {}

    # Conv weight -> batch-block-diagonal (8B, 9*B*C_IN) f32 (tiny, stays f32):
    #   rows (co, b), cols (k=kh*3+kw, b', ci); value w[co,ci,kh,kw] * delta_{bb'}.
    eye = jnp.eye(B, dtype=jnp.float32)
    blocks = []
    for kh in range(3):
        for kw in range(3):
            wk = p["conv_w"][:, :, kh, kw]                        # (8, 4)
            blk = wk[:, None, None, :] * eye[None, :, :, None]    # (8, B, B, 4)
            blocks.append(blk.reshape(C_MID * B, B * C_IN))
    kp["wconv"] = jnp.concatenate(blocks, axis=1)                 # (8B, 36B)
    kp["bconv"] = jnp.repeat(p["conv_b"], B).reshape(C_MID * B, 1)

    # FC: rows = co*256 + oy*16 + ox (exactly the NCHW flatten order), N padded to 256.
    kp["wfc"] = jnp.pad(p["fc_w"].T, ((0, 0), (0, D256 - D230))).astype(bf16)
    kp["bfc"] = jnp.pad(p["fc_b"], (0, D256 - D230)).reshape(1, D256)

    def t(w):  # (out, in) -> (in, out)
        return w.T

    def blockdiag2(w_top, w_bot):
        wbd = jnp.zeros((2 * DH, 2 * DZ), jnp.float32)
        wbd = wbd.at[:DH, :DZ].set(t(w_top))
        wbd = wbd.at[DH:, DZ:].set(t(w_bot))
        return wbd.astype(bf16)

    # Stage A (input = cls): [enc1_w1 | disc_w1] stacked on N; layer-2 block-diag.
    wa1 = jnp.concatenate([t(p["enc1_w1"]), t(p["disc_w1"])], axis=1)   # (230, 256)
    kp["wa1"] = jnp.pad(wa1, ((0, D256 - D230), (0, 0))).astype(bf16)
    kp["ba1"] = jnp.concatenate([p["enc1_b1"], p["disc_b1"]]).reshape(1, 2 * DH)
    kp["wa2"] = blockdiag2(p["enc1_w2"], p["disc_w2"])                  # (256, 128)
    kp["ba2"] = jnp.concatenate([p["enc1_b2"], p["disc_b2"]]).reshape(1, 2 * DZ)

    # Decoder.
    kp["wd1"] = t(p["dec_w1"]).astype(bf16)
    kp["bd1"] = p["dec_b1"].reshape(1, DH)
    kp["wd2"] = jnp.pad(t(p["dec_w2"]), ((0, 0), (0, D256 - D230))).astype(bf16)
    kp["bd2"] = jnp.pad(p["dec_b2"], (0, D256 - D230)).reshape(1, D256)

    # Stage B (input = x1): [enc2_w1 | disc_w1]; layer-2 block-diag.
    wb1 = jnp.concatenate([t(p["enc2_w1"]), t(p["disc_w1"])], axis=1)
    kp["wb1"] = jnp.pad(wb1, ((0, D256 - D230), (0, 0))).astype(bf16)
    kp["bb1"] = jnp.concatenate([p["enc2_b1"], p["disc_b1"]]).reshape(1, 2 * DH)
    kp["wb2"] = blockdiag2(p["enc2_w2"], p["disc_w2"])
    kp["bb2"] = jnp.concatenate([p["enc2_b2"], p["disc_b2"]]).reshape(1, 2 * DZ)
    return kp


# ----------------------------------------------------------------------------
# Forward pass: one fused, grid-less pallas_call (everything VMEM-resident)
# ----------------------------------------------------------------------------
@jax.jit
def cnn_ae_forward(kp, x):
    B = x.shape[0]
    xr = x.reshape(B * C_IN, H * W)          # contiguous reshape: free, no pad op

    vmem = pl.BlockSpec(memory_space=pltpu.MemorySpace.VMEM)
    out = pl.pallas_call(
        _fused_kernel,
        out_shape=jax.ShapeDtypeStruct((B, OUT_W), jnp.float32),
        in_specs=[vmem] * 17,
        out_specs=vmem,
    )(xr, kp["wconv"], kp["bconv"], kp["wfc"], kp["bfc"],
      kp["wa1"], kp["ba1"], kp["wa2"], kp["ba2"],
      kp["wd1"], kp["bd1"], kp["wd2"], kp["bd2"],
      kp["wb1"], kp["bb1"], kp["wb2"], kp["bb2"])

    cls = out[:, :D230]
    x1 = out[:, D256:D256 + D230]
    base = 2 * D256
    z1 = out[:, base + 0 * DZ: base + 1 * DZ]
    z4 = out[:, base + 1 * DZ: base + 2 * DZ]
    z2 = out[:, base + 2 * DZ: base + 3 * DZ]
    z3 = out[:, base + 3 * DZ: base + 4 * DZ]
    return (cls, x1, z1, z2, z3, z4)


# ----------------------------------------------------------------------------
# Pure-JAX reference (PyTorch semantics, f32) for a correctness check
# ----------------------------------------------------------------------------
def reference_forward(p, x):
    B = x.shape[0]
    conv = lax.conv_general_dilated(
        x, p["conv_w"], window_strides=(1, 1), padding="SAME",
        dimension_numbers=("NCHW", "OIHW", "NCHW"))
    conv = jnp.maximum(conv + p["conv_b"][None, :, None, None], 0.0)
    flat = conv.reshape(B, -1)
    cls = flat @ p["fc_w"].T + p["fc_b"]

    def mlp(xx, w1, b1, w2, b2):
        h = jnp.maximum(xx @ w1.T + b1, 0.0)
        return h @ w2.T + b2

    z1 = mlp(cls, p["enc1_w1"], p["enc1_b1"], p["enc1_w2"], p["enc1_b2"])
    x1 = mlp(z1, p["dec_w1"], p["dec_b1"], p["dec_w2"], p["dec_b2"])
    z2 = mlp(x1, p["enc2_w1"], p["enc2_b1"], p["enc2_w2"], p["enc2_b2"])
    z3 = mlp(x1, p["disc_w1"], p["disc_b1"], p["disc_w2"], p["disc_b2"])
    z4 = mlp(cls, p["disc_w1"], p["disc_b1"], p["disc_w2"], p["disc_b2"])
    return (cls, x1, z1, z2, z3, z4)


# ----------------------------------------------------------------------------
if __name__ == "__main__":
    key = jax.random.PRNGKey(0)
    k_params, k_input = jax.random.split(key)

    B = 2
    params = init_params(k_params)
    kparams = prepare_kernel_params(params, batch=B)     # one-time weight folding
    x = jax.random.normal(k_input, (B, C_IN, H, W), jnp.float32)

    outs = cnn_ae_forward(kparams, x)
    outs = jax.block_until_ready(outs)

    cls_vector, x1, z1, z2, z3, z4 = outs
    assert cls_vector.shape == (B, D230)
    assert x1.shape == (B, D230)
    assert z1.shape == (B, DZ)
    assert z2.shape == (B, DZ)
    assert z3.shape == (B, DZ)
    assert z4.shape == (B, DZ)

    # Numerical check vs. the f32 reference; relative-style tolerance (bf16 weights).
    refs = reference_forward(params, x)
    names = ["cls", "x1", "z1", "z2", "z3", "z4"]
    for name, got, ref in zip(names, outs, refs):
        err = float(jnp.max(jnp.abs(got - ref)))
        tol = 1e-2 + 2e-2 * float(jnp.max(jnp.abs(ref)))
        assert err < tol, f"{name}: err={err} tol={tol}"

    print("KERNEL_OK")
</pallas_src>

<mosaic_0001>
module attributes {stable_mosaic.version = 11 : i64} {
  func.func @_fused_kernel(%arg0: memref<8x256xf32, #tpu.memory_space<vmem>>, %arg1: memref<16x72xf32, #tpu.memory_space<vmem>>, %arg2: memref<16x1xf32, #tpu.memory_space<vmem>>, %arg3: memref<2048x256xbf16, #tpu.memory_space<vmem>>, %arg4: memref<1x256xf32, #tpu.memory_space<vmem>>, %arg5: memref<256x256xbf16, #tpu.memory_space<vmem>>, %arg6: memref<1x256xf32, #tpu.memory_space<vmem>>, %arg7: memref<256x128xbf16, #tpu.memory_space<vmem>>, %arg8: memref<1x128xf32, #tpu.memory_space<vmem>>, %arg9: memref<64x128xbf16, #tpu.memory_space<vmem>>, %arg10: memref<1x128xf32, #tpu.memory_space<vmem>>, %arg11: memref<128x256xbf16, #tpu.memory_space<vmem>>, %arg12: memref<1x256xf32, #tpu.memory_space<vmem>>, %arg13: memref<256x256xbf16, #tpu.memory_space<vmem>>, %arg14: memref<1x256xf32, #tpu.memory_space<vmem>>, %arg15: memref<256x128xbf16, #tpu.memory_space<vmem>>, %arg16: memref<1x128xf32, #tpu.memory_space<vmem>>, %arg17: memref<2x768xf32, #tpu.memory_space<vmem>>) attributes {dimension_semantics = [], scalar_prefetch = 0 : i64, scratch_operands = 0 : i64, tpu.core_type = #tpu.core_type<tc>} {
    %c0 = arith.constant 0 : index
    %c0_0 = arith.constant 0 : index
    %0 = vector.load %arg0[%c0, %c0_0] : memref<8x256xf32, #tpu.memory_space<vmem>>, vector<8x256xf32>
    %cst = arith.constant 0.000000e+00 : f32
    %1 = vector.broadcast %cst : f32 to vector<8x128xf32>
    %2 = tpu.concatenate %1, %0, %1 in 1 : vector<8x128xf32>, vector<8x256xf32>, vector<8x128xf32> -> vector<8x512xf32>
    %3 = tpu.iota {dimensions = array<i32: 1>} : vector<8x512xi32>
    %c16_i32 = arith.constant 16 : i32
    %c0_i32 = arith.constant 0 : i32
    %4 = arith.cmpi eq, %c16_i32, %c0_i32 : i32
    %c1_i32 = arith.constant 1 : i32
    %5 = arith.select %4, %c1_i32, %c16_i32 : i32
    %6 = vector.broadcast %5 : i32 to vector<8x512xi32>
    %7 = arith.remsi %3, %6 : vector<8x512xi32>
    %c0_i32_1 = arith.constant 0 : i32
    %8 = vector.broadcast %c0_i32_1 : i32 to vector<8x512xi32>
    %9 = arith.cmpi ne, %7, %8 : vector<8x512xi32>
    %c0_i32_2 = arith.constant 0 : i32
    %10 = vector.broadcast %c0_i32_2 : i32 to vector<8x512xi32>
    %11 = arith.cmpi slt, %7, %10 : vector<8x512xi32>
    %c0_i32_3 = arith.constant 0 : i32
    %12 = arith.cmpi slt, %5, %c0_i32_3 : i32
    %13 = vector.broadcast %12 : i1 to vector<8x512xi1>
    %14 = vector.broadcast %13 : vector<8x512xi1> to vector<8x512xi1>
    %15 = arith.xori %11, %14 : vector<8x512xi1>
    %16 = arith.andi %15, %9 : vector<8x512xi1>
    %17 = vector.broadcast %5 : i32 to vector<8x512xi32>
    %18 = arith.addi %7, %17 : vector<8x512xi32>
    %19 = arith.select %16, %18, %7 : vector<8x512xi1>, vector<8x512xi32>
    %c15_i32 = arith.constant 15 : i32
    %20 = vector.broadcast %c15_i32 : i32 to vector<8x512xi32>
    %21 = arith.cmpi eq, %19, %20 : vector<8x512xi32>
    %cst_4 = arith.constant 0.000000e+00 : f32
    %22 = vector.broadcast %cst_4 : f32 to vector<8x512xf32>
    %23 = arith.select %21, %22, %2 : vector<8x512xi1>, vector<8x512xf32>
    %c0_i32_5 = arith.constant 0 : i32
    %24 = vector.broadcast %c0_i32_5 : i32 to vector<8x512xi32>
    %25 = arith.cmpi eq, %19, %24 : vector<8x512xi32>
    %cst_6 = arith.constant 0.000000e+00 : f32
    %26 = vector.broadcast %cst_6 : f32 to vector<8x512xf32>
    %27 = arith.select %25, %26, %2 : vector<8x512xi1>, vector<8x512xf32>
    %28 = vector.extract_strided_slice %23 {offsets = [0, 111], sizes = [8, 256], strides = [1, 1]} : vector<8x512xf32> to vector<8x256xf32>
    %29 = vector.extract_strided_slice %2 {offsets = [0, 112], sizes = [8, 256], strides = [1, 1]} : vector<8x512xf32> to vector<8x256xf32>
    %30 = vector.extract_strided_slice %27 {offsets = [0, 113], sizes = [8, 256], strides = [1, 1]} : vector<8x512xf32> to vector<8x256xf32>
    %31 = vector.extract_strided_slice %23 {offsets = [0, 127], sizes = [8, 256], strides = [1, 1]} : vector<8x512xf32> to vector<8x256xf32>
    %32 = vector.extract_strided_slice %2 {offsets = [0, 128], sizes = [8, 256], strides = [1, 1]} : vector<8x512xf32> to vector<8x256xf32>
    %33 = vector.extract_strided_slice %27 {offsets = [0, 129], sizes = [8, 256], strides = [1, 1]} : vector<8x512xf32> to vector<8x256xf32>
    %34 = vector.extract_strided_slice %23 {offsets = [0, 143], sizes = [8, 256], strides = [1, 1]} : vector<8x512xf32> to vector<8x256xf32>
    %35 = vector.extract_strided_slice %2 {offsets = [0, 144], sizes = [8, 256], strides = [1, 1]} : vector<8x512xf32> to vector<8x256xf32>
    %36 = vector.extract_strided_slice %27 {offsets = [0, 145], sizes = [8, 256], strides = [1, 1]} : vector<8x512xf32> to vector<8x256xf32>
    %37 = tpu.concatenate %28, %29, %30, %31, %32, %33, %34, %35, %36 in 0 : vector<8x256xf32>, vector<8x256xf32>, vector<8x256xf32>, vector<8x256xf32>, vector<8x256xf32>, vector<8x256xf32>, vector<8x256xf32>, vector<8x256xf32>, vector<8x256xf32> -> vector<72x256xf32>
    %c0_7 = arith.constant 0 : index
    %c0_8 = arith.constant 0 : index
    %38 = vector.load %arg1[%c0_7, %c0_8] : memref<16x72xf32, #tpu.memory_space<vmem>>, vector<16x72xf32>
    %cst_9 = arith.constant dense<0.000000e+00> : vector<16x256xf32>
    %39 = tpu.matmul %38, %37, %cst_9 {dimension_numbers = #tpu.dot_dimension_numbers<[1], [0], [0], [1], [0, 0, 1, 1], [], []>} : vector<16x72xf32>, vector<72x256xf32>, vector<16x256xf32> -> vector<16x256xf32>
    %c0_10 = arith.constant 0 : index
    %c0_11 = arith.constant 0 : index
    %40 = vector.load %arg2[%c0_10, %c0_11] : memref<16x1xf32, #tpu.memory_space<vmem>>, vector<16x1xf32>
    %41 = vector.broadcast %40 : vector<16x1xf32> to vector<16x256xf32>
    %42 = arith.addf %39, %41 : vector<16x256xf32>
    %cst_12 = arith.constant 0.000000e+00 : f32
    %43 = vector.broadcast %cst_12 : f32 to vector<16x256xf32>
    %44 = arith.maximumf %42, %43 : vector<16x256xf32>
    %45 = vector.extract_strided_slice %44 {offsets = [0, 0], sizes = [2, 256], strides = [1, 1]} : vector<16x256xf32> to vector<2x256xf32>
    %46 = vector.extract_strided_slice %44 {offsets = [2, 0], sizes = [2, 256], strides = [1, 1]} : vector<16x256xf32> to vector<2x256xf32>
    %47 = vector.extract_strided_slice %44 {offsets = [4, 0], sizes = [2, 256], strides = [1, 1]} : vector<16x256xf32> to vector<2x256xf32>
    %48 = vector.extract_strided_slice %44 {offsets = [6, 0], sizes = [2, 256], strides = [1, 1]} : vector<16x256xf32> to vector<2x256xf32>
    %49 = vector.extract_strided_slice %44 {offsets = [8, 0], sizes = [2, 256], strides = [1, 1]} : vector<16x256xf32> to vector<2x256xf32>
    %50 = vector.extract_strided_slice %44 {offsets = [10, 0], sizes = [2, 256], strides = [1, 1]} : vector<16x256xf32> to vector<2x256xf32>
    %51 = vector.extract_strided_slice %44 {offsets = [12, 0], sizes = [2, 256], strides = [1, 1]} : vector<16x256xf32> to vector<2x256xf32>
    %52 = vector.extract_strided_slice %44 {offsets = [14, 0], sizes = [2, 256], strides = [1, 1]} : vector<16x256xf32> to vector<2x256xf32>
    %53 = tpu.concatenate %45, %46, %47, %48, %49, %50, %51, %52 in 1 : vector<2x256xf32>, vector<2x256xf32>, vector<2x256xf32>, vector<2x256xf32>, vector<2x256xf32>, vector<2x256xf32>, vector<2x256xf32>, vector<2x256xf32> -> vector<2x2048xf32>
    %54 = arith.truncf %53 : vector<2x2048xf32> to vector<2x2048xbf16>
    %c0_13 = arith.constant 0 : index
    %c0_14 = arith.constant 0 : index
    %55 = vector.load %arg3[%c0_13, %c0_14] : memref<2048x256xbf16, #tpu.memory_space<vmem>>, vector<2048x256xbf16>
    %cst_15 = arith.constant dense<0.000000e+00> : vector<2x256xf32>
    %56 = tpu.matmul %54, %55, %cst_15 {dimension_numbers = #tpu.dot_dimension_numbers<[1], [0], [0], [1], [0, 0, 1, 1], [], []>} : vector<2x2048xbf16>, vector<2048x256xbf16>, vector<2x256xf32> -> vector<2x256xf32>
    %c0_16 = arith.constant 0 : index
    %c0_17 = arith.constant 0 : index
    %57 = vector.load %arg4[%c0_16, %c0_17] : memref<1x256xf32, #tpu.memory_space<vmem>>, vector<1x256xf32>
    %58 = vector.broadcast %57 : vector<1x256xf32> to vector<2x256xf32>
    %59 = arith.addf %56, %58 : vector<2x256xf32>
    %60 = arith.truncf %59 : vector<2x256xf32> to vector<2x256xbf16>
    %c0_18 = arith.constant 0 : index
    %c0_19 = arith.constant 0 : index
    %61 = vector.load %arg5[%c0_18, %c0_19] : memref<256x256xbf16, #tpu.memory_space<vmem>>, vector<256x256xbf16>
    %cst_20 = arith.constant dense<0.000000e+00> : vector<2x256xf32>
    %62 = tpu.matmul %60, %61, %cst_20 {dimension_numbers = #tpu.dot_dimension_numbers<[1], [0], [0], [1], [0, 0, 1, 1], [], []>} : vector<2x256xbf16>, vector<256x256xbf16>, vector<2x256xf32> -> vector<2x256xf32>
    %c0_21 = arith.constant 0 : index
    %c0_22 = arith.constant 0 : index
    %63 = vector.load %arg6[%c0_21, %c0_22] : memref<1x256xf32, #tpu.memory_space<vmem>>, vector<1x256xf32>
    %64 = vector.broadcast %63 : vector<1x256xf32> to vector<2x256xf32>
    %65 = arith.addf %62, %64 : vector<2x256xf32>
    %cst_23 = arith.constant 0.000000e+00 : f32
    %66 = vector.broadcast %cst_23 : f32 to vector<2x256xf32>
    %67 = arith.maximumf %65, %66 : vector<2x256xf32>
    %68 = arith.truncf %67 : vector<2x256xf32> to vector<2x256xbf16>
    %c0_24 = arith.constant 0 : index
    %c0_25 = arith.constant 0 : index
    %69 = vector.load %arg7[%c0_24, %c0_25] : memref<256x128xbf16, #tpu.memory_space<vmem>>, vector<256x128xbf16>
    %cst_26 = arith.constant dense<0.000000e+00> : vector<2x128xf32>
    %70 = tpu.matmul %68, %69, %cst_26 {dimension_numbers = #tpu.dot_dimension_numbers<[1], [0], [0], [1], [0, 0, 1, 1], [], []>} : vector<2x256xbf16>, vector<256x128xbf16>, vector<2x128xf32> -> vector<2x128xf32>
    %c0_27 = arith.constant 0 : index
    %c0_28 = arith.constant 0 : index
    %71 = vector.load %arg8[%c0_27, %c0_28] : memref<1x128xf32, #tpu.memory_space<vmem>>, vector<1x128xf32>
    %72 = vector.broadcast %71 : vector<1x128xf32> to vector<2x128xf32>
    %73 = arith.addf %70, %72 : vector<2x128xf32>
    %74 = vector.extract_strided_slice %73 {offsets = [0, 0], sizes = [2, 64], strides = [1, 1]} : vector<2x128xf32> to vector<2x64xf32>
    %75 = arith.truncf %74 : vector<2x64xf32> to vector<2x64xbf16>
    %c0_29 = arith.constant 0 : index
    %c0_30 = arith.constant 0 : index
    %76 = vector.load %arg9[%c0_29, %c0_30] : memref<64x128xbf16, #tpu.memory_space<vmem>>, vector<64x128xbf16>
    %cst_31 = arith.constant dense<0.000000e+00> : vector<2x128xf32>
    %77 = tpu.matmul %75, %76, %cst_31 {dimension_numbers = #tpu.dot_dimension_numbers<[1], [0], [0], [1], [0, 0, 1, 1], [], []>} : vector<2x64xbf16>, vector<64x128xbf16>, vector<2x128xf32> -> vector<2x128xf32>
    %c0_32 = arith.constant 0 : index
    %c0_33 = arith.constant 0 : index
    %78 = vector.load %arg10[%c0_32, %c0_33] : memref<1x128xf32, #tpu.memory_space<vmem>>, vector<1x128xf32>
    %79 = vector.broadcast %78 : vector<1x128xf32> to vector<2x128xf32>
    %80 = arith.addf %77, %79 : vector<2x128xf32>
    %cst_34 = arith.constant 0.000000e+00 : f32
    %81 = vector.broadcast %cst_34 : f32 to vector<2x128xf32>
    %82 = arith.maximumf %80, %81 : vector<2x128xf32>
    %83 = arith.truncf %82 : vector<2x128xf32> to vector<2x128xbf16>
    %c0_35 = arith.constant 0 : index
    %c0_36 = arith.constant 0 : index
    %84 = vector.load %arg11[%c0_35, %c0_36] : memref<128x256xbf16, #tpu.memory_space<vmem>>, vector<128x256xbf16>
    %cst_37 = arith.constant dense<0.000000e+00> : vector<2x256xf32>
    %85 = tpu.matmul %83, %84, %cst_37 {dimension_numbers = #tpu.dot_dimension_numbers<[1], [0], [0], [1], [0, 0, 1, 1], [], []>} : vector<2x128xbf16>, vector<128x256xbf16>, vector<2x256xf32> -> vector<2x256xf32>
    %c0_38 = arith.constant 0 : index
    %c0_39 = arith.constant 0 : index
    %86 = vector.load %arg12[%c0_38, %c0_39] : memref<1x256xf32, #tpu.memory_space<vmem>>, vector<1x256xf32>
    %87 = vector.broadcast %86 : vector<1x256xf32> to vector<2x256xf32>
    %88 = arith.addf %85, %87 : vector<2x256xf32>
    %89 = arith.truncf %88 : vector<2x256xf32> to vector<2x256xbf16>
    %c0_40 = arith.constant 0 : index
    %c0_41 = arith.constant 0 : index
    %90 = vector.load %arg13[%c0_40, %c0_41] : memref<256x256xbf16, #tpu.memory_space<vmem>>, vector<256x256xbf16>
    %cst_42 = arith.constant dense<0.000000e+00> : vector<2x256xf32>
    %91 = tpu.matmul %89, %90, %cst_42 {dimension_numbers = #tpu.dot_dimension_numbers<[1], [0], [0], [1], [0, 0, 1, 1], [], []>} : vector<2x256xbf16>, vector<256x256xbf16>, vector<2x256xf32> -> vector<2x256xf32>
    %c0_43 = arith.constant 0 : index
    %c0_44 = arith.constant 0 : index
    %92 = vector.load %arg14[%c0_43, %c0_44] : memref<1x256xf32, #tpu.memory_space<vmem>>, vector<1x256xf32>
    %93 = vector.broadcast %92 : vector<1x256xf32> to vector<2x256xf32>
    %94 = arith.addf %91, %93 : vector<2x256xf32>
    %cst_45 = arith.constant 0.000000e+00 : f32
    %95 = vector.broadcast %cst_45 : f32 to vector<2x256xf32>
    %96 = arith.maximumf %94, %95 : vector<2x256xf32>
    %97 = arith.truncf %96 : vector<2x256xf32> to vector<2x256xbf16>
    %c0_46 = arith.constant 0 : index
    %c0_47 = arith.constant 0 : index
    %98 = vector.load %arg15[%c0_46, %c0_47] : memref<256x128xbf16, #tpu.memory_space<vmem>>, vector<256x128xbf16>
    %cst_48 = arith.constant dense<0.000000e+00> : vector<2x128xf32>
    %99 = tpu.matmul %97, %98, %cst_48 {dimension_numbers = #tpu.dot_dimension_numbers<[1], [0], [0], [1], [0, 0, 1, 1], [], []>} : vector<2x256xbf16>, vector<256x128xbf16>, vector<2x128xf32> -> vector<2x128xf32>
    %c0_49 = arith.constant 0 : index
    %c0_50 = arith.constant 0 : index
    %100 = vector.load %arg16[%c0_49, %c0_50] : memref<1x128xf32, #tpu.memory_space<vmem>>, vector<1x128xf32>
    %101 = vector.broadcast %100 : vector<1x128xf32> to vector<2x128xf32>
    %102 = arith.addf %99, %101 : vector<2x128xf32>
    %103 = tpu.concatenate %59, %88, %73, %102 in 1 : vector<2x256xf32>, vector<2x256xf32>, vector<2x128xf32>, vector<2x128xf32> -> vector<2x768xf32>
    %c0_51 = arith.constant 0 : index
    %c0_52 = arith.constant 0 : index
    %104 = vector.load %arg17[%c0_51, %c0_52] : memref<2x768xf32, #tpu.memory_space<vmem>>, vector<2x768xf32>
    tpu.vector_store %arg17[%c0_51, %c0_52], %103 {strides = array<i32>} : memref<2x768xf32, #tpu.memory_space<vmem>>, vector<2x768xf32>,
    return
  }
}

</mosaic_0001>

<llo_original>
// kernel: cnn_ae_forward.1
$region0: #{cnn_ae_forward.1}
  #allocation0 [shape = 'u32[]', space=smem, size = 0x4, offset = 0x4, fixed_abs, tag = 'smem constant byte address 0x4 - core index']
  #allocation1 [shape = 'u32[144,128]{1,0:T(1,128)}', space=vmem, size = 0x12000, scoped, tag = 'internal scratch']
  %s0 = inlined_call_operand.vmem [shape: f32[8,256], index: 0, kind: input, shape index: {}]
  %s1 = inlined_call_operand.vmem [shape: f32[16,72], index: 1, kind: input, shape index: {}]
  %s2 = inlined_call_operand.vmem [shape: f32[16,1], index: 2, kind: input, shape index: {}]
  %s3 = inlined_call_operand.hbm [shape: bf16[2048,256], index: 3, kind: input, shape index: {}]
  %s4 = inlined_call_operand.hbm [shape: f32[1,256], index: 4, kind: input, shape index: {}]
  %s5 = inlined_call_operand.hbm [shape: bf16[256,256], index: 5, kind: input, shape index: {}]
  %s6 = inlined_call_operand.hbm [shape: f32[1,256], index: 6, kind: input, shape index: {}]
  %s7 = inlined_call_operand.vmem [shape: bf16[256,128], index: 7, kind: input, shape index: {}]
  %s8 = inlined_call_operand.vmem [shape: f32[1,128], index: 8, kind: input, shape index: {}]
  %s9 = inlined_call_operand.vmem [shape: bf16[64,128], index: 9, kind: input, shape index: {}]
  %s10 = inlined_call_operand.hbm [shape: f32[1,128], index: 10, kind: input, shape index: {}]
  %s11 = inlined_call_operand.hbm [shape: bf16[128,256], index: 11, kind: input, shape index: {}]
  %s12 = inlined_call_operand.hbm [shape: f32[1,256], index: 12, kind: input, shape index: {}]
  %s13 = inlined_call_operand.hbm [shape: bf16[256,256], index: 13, kind: input, shape index: {}]
  %s14 = inlined_call_operand.hbm [shape: f32[1,256], index: 14, kind: input, shape index: {}]
  %s15 = inlined_call_operand.hbm [shape: bf16[256,128], index: 15, kind: input, shape index: {}]
  %s16 = inlined_call_operand.hbm [shape: f32[1,128], index: 16, kind: input, shape index: {}]
  %s17 = inlined_call_operand.vmem [shape: f32[2,768], index: 17, kind: output, shape index: {}]
  %s18 = sld [smem:[#allocation0]]
  $region122: #{cnn_ae_forward.1} parent=0
    _
  %s20 = ssub.s32 1, %s18
  %s21 = scalar_select 0, %s20, %s18
  $region1: #{cnn_ae_forward.1} parent=0
    #allocation2 [shape = 'u8[1048576]{0}', space=vmem, size = 0x100000, scoped, tag = 'input window, operand 3, single buffered']
    #allocation3 [shape = 's32[1]{0}', space=sflag, size = 0x4, scoped, tag = 'scoped memory for cnn_ae_forward.1']
    #allocation4 [shape = 'u8[1024]{0}', space=vmem, size = 0x400, scoped, tag = 'input window, operand 4, single buffered']
    #allocation5 [shape = 's32[1]{0}', space=sflag, size = 0x4, scoped, tag = 'scoped memory for cnn_ae_forward.1']
    #allocation6 [shape = 'u8[131072]{0}', space=vmem, size = 0x20000, scoped, tag = 'input window, operand 5, single buffered']
    #allocation7 [shape = 'u8[1024]{0}', space=vmem, size = 0x400, scoped, tag = 'input window, operand 6, single buffered']
    #allocation8 [shape = 's32[1]{0}', space=sflag, size = 0x4, scoped, tag = 'scoped memory for cnn_ae_forward.1']
    #allocation9 [shape = 'u8[512]{0}', space=vmem, size = 0x400, scoped, tag = 'input window, operand 10, single buffered']
    #allocation10 [shape = 'u8[65536]{0}', space=vmem, size = 0x10000, scoped, tag = 'input window, operand 11, single buffered']
    #allocation11 [shape = 's32[1]{0}', space=sflag, size = 0x4, scoped, tag = 'scoped memory for cnn_ae_forward.1']
    #allocation12 [shape = 'u8[1024]{0}', space=vmem, size = 0x400, scoped, tag = 'input window, operand 12, single buffered']
    #allocation13 [shape = 'u8[131072]{0}', space=vmem, size = 0x20000, scoped, tag = 'input window, operand 13, single buffered']
    #allocation14 [shape = 's32[1]{0}', space=sflag, size = 0x4, scoped, tag = 'scoped memory for cnn_ae_forward.1']
    #allocation15 [shape = 'u8[1024]{0}', space=vmem, size = 0x400, scoped, tag = 'input window, operand 14, single buffered']
    #allocation16 [shape = 'u8[65536]{0}', space=vmem, size = 0x10000, scoped, tag = 'input window, operand 15, single buffered']
    #allocation17 [shape = 's32[1]{0}', space=sflag, size = 0x4, scoped, tag = 'scoped memory for cnn_ae_forward.1']
    #allocation18 [shape = 'u8[512]{0}', space=vmem, size = 0x400, scoped, tag = 'input window, operand 16, single buffered']
    %22 = vsyncpa [#allocation3], 0
    %23 = vsyncpa [#allocation5], 0
    %24 = vsyncpa [#allocation8], 0
    %25 = vsyncpa [#allocation11], 0
    %26 = vsyncpa [#allocation14], 0
    %27 = vsyncpa [#allocation17], 0
    // Predicated region
    $region2: #{cnn_ae_forward.1} parent=1 // pred_check
      _
    $region3: #{cnn_ae_forward.1} parent=1 // pred_check_branch
      %29 = sbr.rel (0) target = $region5
    $region4: #{cnn_ae_forward.1} parent=1 // pred_region
      _
    $region5: #{cnn_ae_forward.1} parent=1 // pred_fallthru
      _
    // Predicated region
    $region6: #{cnn_ae_forward.1} parent=1 // pred_check
      _
    $region7: #{cnn_ae_forward.1} parent=1 // pred_check_branch
      %31 = sbr.rel (0) target = $region9
    $region8: #{cnn_ae_forward.1} parent=1 // pred_region
      _
    $region9: #{cnn_ae_forward.1} parent=1 // pred_fallthru
      _
    // Predicated region
    $region10: #{cnn_ae_forward.1} parent=1 // pred_check
      _
    $region11: #{cnn_ae_forward.1} parent=1 // pred_check_branch
      %33 = sbr.rel (0) target = $region13
    $region12: #{cnn_ae_forward.1} parent=1 // pred_region
      _
    $region13: #{cnn_ae_forward.1} parent=1 // pred_fallthru
      _
    // Predicated region
    $region14: #{cnn_ae_forward.1} parent=1 // pred_check
      _
    $region15: #{cnn_ae_forward.1} parent=1 // pred_check_branch
      %35 = sbr.rel (0) target = $region17
    $region16: #{cnn_ae_forward.1} parent=1 // pred_region
      %s37 = ssub.s32 32768, 32768
      %38 = vsyncadd [#allocation3], %s37
      %s39 = sshll.u32 [#allocation2], 4
      %s40 = int_to_ptr.vmem [resolvable:$true] %s39
      %45 = dma.hbm_to_vmem [thread:$0]  %s3, 32768, %s40, [#allocation3], 128, 128, 8
    $region17: #{cnn_ae_forward.1} parent=1 // pred_fallthru
      _
    // Predicated region
    $region18: #{cnn_ae_forward.1} parent=1 // pred_check
      _
    $region19: #{cnn_ae_forward.1} parent=1 // pred_check_branch
      %47 = sbr.rel (0) target = $region21
    $region20: #{cnn_ae_forward.1} parent=1 // pred_region
      %s49 = ssub.s32 32, 32
      %50 = vsyncadd [#allocation5], %s49
      %s52 = sshll.u32 [#allocation4], 4
      %s53 = int_to_ptr.vmem [resolvable:$true] %s52
      %55 = dma.hbm_to_vmem [thread:$0]  %s4, 32, %s53, [#allocation5]
    $region21: #{cnn_ae_forward.1} parent=1 // pred_fallthru
      _
    // Predicated region
    $region22: #{cnn_ae_forward.1} parent=1 // pred_check
      _
    $region23: #{cnn_ae_forward.1} parent=1 // pred_check_branch
      %57 = sbr.rel (0) target = $region25
    $region24: #{cnn_ae_forward.1} parent=1 // pred_region
      %s59 = ssub.s32 4096, 4096
      %60 = vsyncadd [#allocation5], %s59
      %s61 = sshll.u32 [#allocation6], 4
      %s62 = int_to_ptr.vmem [resolvable:$true] %s61
      %67 = dma.hbm_to_vmem [thread:$0]  %s5, 4096, %s62, [#allocation5], 128, 128, 8
    $region25: #{cnn_ae_forward.1} parent=1 // pred_fallthru
      _
    // Predicated region
    $region26: #{cnn_ae_forward.1} parent=1 // pred_check
      _
    $region27: #{cnn_ae_forward.1} parent=1 // pred_check_branch
      %69 = sbr.rel (0) target = $region29
    $region28: #{cnn_ae_forward.1} parent=1 // pred_region
      %s71 = ssub.s32 32, 32
      %72 = vsyncadd [#allocation8], %s71
      %s74 = sshll.u32 [#allocation7], 4
      %s75 = int_to_ptr.vmem [resolvable:$true] %s74
      %77 = dma.hbm_to_vmem [thread:$0]  %s6, 32, %s75, [#allocation8]
    $region29: #{cnn_ae_forward.1} parent=1 // pred_fallthru
      _
    // Predicated region
    $region30: #{cnn_ae_forward.1} parent=1 // pred_check
      _
    $region31: #{cnn_ae_forward.1} parent=1 // pred_check_branch
      %79 = sbr.rel (0) target = $region33
    $region32: #{cnn_ae_forward.1} parent=1 // pred_region
      _
    $region33: #{cnn_ae_forward.1} parent=1 // pred_fallthru
      _
    // Predicated region
    $region34: #{cnn_ae_forward.1} parent=1 // pred_check
      _
    $region35: #{cnn_ae_forward.1} parent=1 // pred_check_branch
      %81 = sbr.rel (0) target = $region37
    $region36: #{cnn_ae_forward.1} parent=1 // pred_region
      _
    $region37: #{cnn_ae_forward.1} parent=1 // pred_fallthru
      _
    // Predicated region
    $region38: #{cnn_ae_forward.1} parent=1 // pred_check
      _
    $region39: #{cnn_ae_forward.1} parent=1 // pred_check_branch
      %83 = sbr.rel (0) target = $region41
    $region40: #{cnn_ae_forward.1} parent=1 // pred_region
      _
    $region41: #{cnn_ae_forward.1} parent=1 // pred_fallthru
      _
    // Predicated region
    $region42: #{cnn_ae_forward.1} parent=1 // pred_check
      _
    $region43: #{cnn_ae_forward.1} parent=1 // pred_check_branch
      %85 = sbr.rel (0) target = $region45
    $region44: #{cnn_ae_forward.1} parent=1 // pred_region
      %s87 = ssub.s32 16, 16
      %88 = vsyncadd [#allocation8], %s87
      %s90 = sshll.u32 [#allocation9], 4
      %s91 = int_to_ptr.vmem [resolvable:$true] %s90
      %93 = dma.hbm_to_vmem [thread:$0]  %s10, 16, %s91, [#allocation8]
    $region45: #{cnn_ae_forward.1} parent=1 // pred_fallthru
      _
    // Predicated region
    $region46: #{cnn_ae_forward.1} parent=1 // pred_check
      _
    $region47: #{cnn_ae_forward.1} parent=1 // pred_check_branch
      %95 = sbr.rel (0) target = $region49
    $region48: #{cnn_ae_forward.1} parent=1 // pred_region
      %s97 = ssub.s32 2048, 2048
      %98 = vsyncadd [#allocation11], %s97
      %s99 = sshll.u32 [#allocation10], 4
      %s100 = int_to_ptr.vmem [resolvable:$true] %s99
      %105 = dma.hbm_to_vmem [thread:$0]  %s11, 2048, %s100, [#allocation11], 128, 128, 8
    $region49: #{cnn_ae_forward.1} parent=1 // pred_fallthru
      _
    // Predicated region
    $region50: #{cnn_ae_forward.1} parent=1 // pred_check
      _
    $region51: #{cnn_ae_forward.1} parent=1 // pred_check_branch
      %107 = sbr.rel (0) target = $region53
    $region52: #{cnn_ae_forward.1} parent=1 // pred_region
      %s109 = ssub.s32 32, 32
      %110 = vsyncadd [#allocation11], %s109
      %s112 = sshll.u32 [#allocation12], 4
      %s113 = int_to_ptr.vmem [resolvable:$true] %s112
      %115 = dma.hbm_to_vmem [thread:$0]  %s12, 32, %s113, [#allocation11]
    $region53: #{cnn_ae_forward.1} parent=1 // pred_fallthru
      _
    // Predicated region
    $region54: #{cnn_ae_forward.1} parent=1 // pred_check
      _
    $region55: #{cnn_ae_forward.1} parent=1 // pred_check_branch
      %117 = sbr.rel (0) target = $region57
    $region56: #{cnn_ae_forward.1} parent=1 // pred_region
      %s119 = ssub.s32 4096, 4096
      %120 = vsyncadd [#allocation14], %s119
      %s121 = sshll.u32 [#allocation13], 4
      %s122 = int_to_ptr.vmem [resolvable:$true] %s121
      %127 = dma.hbm_to_vmem [thread:$0]  %s13, 4096, %s122, [#allocation14], 128, 128, 8
    $region57: #{cnn_ae_forward.1} parent=1 // pred_fallthru
      _
    // Predicated region
    $region58: #{cnn_ae_forward.1} parent=1 // pred_check
      _
    $region59: #{cnn_ae_forward.1} parent=1 // pred_check_branch
      %129 = sbr.rel (0) target = $region61
    $region60: #{cnn_ae_forward.1} parent=1 // pred_region
      %s131 = ssub.s32 32, 32
      %132 = vsyncadd [#allocation14], %s131
      %s134 = sshll.u32 [#allocation15], 4
      %s135 = int_to_ptr.vmem [resolvable:$true] %s134
      %137 = dma.hbm_to_vmem [thread:$0]  %s14, 32, %s135, [#allocation14]
    $region61: #{cnn_ae_forward.1} parent=1 // pred_fallthru
      _
    // Predicated region
    $region62: #{cnn_ae_forward.1} parent=1 // pred_check
      _
    $region63: #{cnn_ae_forward.1} parent=1 // pred_check_branch
      %139 = sbr.rel (0) target = $region65
    $region64: #{cnn_ae_forward.1} parent=1 // pred_region
      %s141 = ssub.s32 2048, 2048
      %142 = vsyncadd [#allocation17], %s141
      %s143 = sshll.u32 [#allocation16], 4
      %s144 = int_to_ptr.vmem [resolvable:$true] %s143
      %149 = dma.hbm_to_vmem [thread:$0]  %s15, 2048, %s144, [#allocation17], 64, 64, 4
    $region65: #{cnn_ae_forward.1} parent=1 // pred_fallthru
      _
    // Predicated region
    $region66: #{cnn_ae_forward.1} parent=1 // pred_check
      _
    $region67: #{cnn_ae_forward.1} parent=1 // pred_check_branch
      %151 = sbr.rel (0) target = $region69
    $region68: #{cnn_ae_forward.1} parent=1 // pred_region
      %s153 = ssub.s32 16, 16
      %154 = vsyncadd [#allocation17], %s153
      %s156 = sshll.u32 [#allocation18], 4
      %s157 = int_to_ptr.vmem [resolvable:$true] %s156
      %159 = dma.hbm_to_vmem [thread:$0]  %s16, 16, %s157, [#allocation17]
    $region69: #{cnn_ae_forward.1} parent=1 // pred_fallthru
      _
    // Predicated region
    $region70: #{cnn_ae_forward.1} parent=1 // pred_check
      _
    $region71: #{cnn_ae_forward.1} parent=1 // pred_check_branch
      %161 = sbr.rel (0) target = $region73
    $region72: #{cnn_ae_forward.1} parent=1 // pred_region
      %162 = dma.done [#allocation3], 32768
    $region73: #{cnn_ae_forward.1} parent=1 // pred_fallthru
      _
    // Predicated region
    $region74: #{cnn_ae_forward.1} parent=1 // pred_check
      _
    $region75: #{cnn_ae_forward.1} parent=1 // pred_check_branch
      %164 = sbr.rel (0) target = $region77
    $region76: #{cnn_ae_forward.1} parent=1 // pred_region
      %165 = dma.done [#allocation5], 32
    $region77: #{cnn_ae_forward.1} parent=1 // pred_fallthru
      _
    // Predicated region
    $region78: #{cnn_ae_forward.1} parent=1 // pred_check
      _
    $region79: #{cnn_ae_forward.1} parent=1 // pred_check_branch
      %167 = sbr.rel (0) target = $region81
    $region80: #{cnn_ae_forward.1} parent=1 // pred_region
      %168 = dma.done [#allocation5], 4096
    $region81: #{cnn_ae_forward.1} parent=1 // pred_fallthru
      _
    // Predicated region
    $region82: #{cnn_ae_forward.1} parent=1 // pred_check
      _
    $region83: #{cnn_ae_forward.1} parent=1 // pred_check_branch
      %170 = sbr.rel (0) target = $region85
    $region84: #{cnn_ae_forward.1} parent=1 // pred_region
      %171 = dma.done [#allocation8], 32
    $region85: #{cnn_ae_forward.1} parent=1 // pred_fallthru
      _
    // Predicated region
    $region86: #{cnn_ae_forward.1} parent=1 // pred_check
      _
    $region87: #{cnn_ae_forward.1} parent=1 // pred_check_branch
      %173 = sbr.rel (0) target = $region89
    $region88: #{cnn_ae_forward.1} parent=1 // pred_region
      %174 = dma.done [#allocation8], 16
    $region89: #{cnn_ae_forward.1} parent=1 // pred_fallthru
      _
    // Predicated region
    $region90: #{cnn_ae_forward.1} parent=1 // pred_check
      _
    $region91: #{cnn_ae_forward.1} parent=1 // pred_check_branch
      %176 = sbr.rel (0) target = $region93
    $region92: #{cnn_ae_forward.1} parent=1 // pred_region
      %177 = dma.done [#allocation11], 2048
    $region93: #{cnn_ae_forward.1} parent=1 // pred_fallthru
      _
    // Predicated region
    $region94: #{cnn_ae_forward.1} parent=1 // pred_check
      _
    $region95: #{cnn_ae_forward.1} parent=1 // pred_check_branch
      %179 = sbr.rel (0) target = $region97
    $region96: #{cnn_ae_forward.1} parent=1 // pred_region
      %180 = dma.done [#allocation11], 32
    $region97: #{cnn_ae_forward.1} parent=1 // pred_fallthru
      _
    // Predicated region
    $region98: #{cnn_ae_forward.1} parent=1 // pred_check
      _
    $region99: #{cnn_ae_forward.1} parent=1 // pred_check_branch
      %182 = sbr.rel (0) target = $region101
    $region100: #{cnn_ae_forward.1} parent=1 // pred_region
      %183 = dma.done [#allocation14], 4096
    $region101: #{cnn_ae_forward.1} parent=1 // pred_fallthru
      _
    // Predicated region
    $region102: #{cnn_ae_forward.1} parent=1 // pred_check
      _
    $region103: #{cnn_ae_forward.1} parent=1 // pred_check_branch
      %185 = sbr.rel (0) target = $region105
    $region104: #{cnn_ae_forward.1} parent=1 // pred_region
      %186 = dma.done [#allocation14], 32
    $region105: #{cnn_ae_forward.1} parent=1 // pred_fallthru
      _
    // Predicated region
    $region106: #{cnn_ae_forward.1} parent=1 // pred_check
      _
    $region107: #{cnn_ae_forward.1} parent=1 // pred_check_branch
      %188 = sbr.rel (0) target = $region109
    $region108: #{cnn_ae_forward.1} parent=1 // pred_region
      %189 = dma.done [#allocation17], 2048
    $region109: #{cnn_ae_forward.1} parent=1 // pred_fallthru
      _
    // Predicated region
    $region110: #{cnn_ae_forward.1} parent=1 // pred_check
      _
    $region111: #{cnn_ae_forward.1} parent=1 // pred_check_branch
      %191 = sbr.rel (0) target = $region113
    $region112: #{cnn_ae_forward.1} parent=1 // pred_region
      %192 = dma.done [#allocation17], 16
    $region113: #{cnn_ae_forward.1} parent=1 // pred_fallthru
      _
    %v194 = vld [vmem:[%s0] sm:$0xff]
    %v195 = vld [vmem:[%s0 + $0x8] sm:$0xff]
    %v196 = vlaneseq
    %v197 = vand.u32 %v196, 127
    %v198 = vadd.s32 %v197, 128
    %v199 = vadd.s32 %v197, 256
    %vm200 = vcmp.lt.s32.totalorder %v198, 0
    %v201 = vsub.s32 0, %v198
    %v202 = vsel %vm200, %v201, %v198
    %v203 = vshrl.u32 %v202, 4
    %v204 = vand.u32 %v202, 15
    %v205 = vsub.s32 0, %v204
    %v206 = vsel %vm200, %v205, %v204
    %vm207 = vcmp.lt.s32.totalorder %v199, 0
    %v208 = vsub.s32 0, %v199
    %v209 = vsel %vm207, %v208, %v199
    %v210 = vshrl.u32 %v209, 4
    %v211 = vand.u32 %v209, 15
    %v212 = vsub.s32 0, %v211
    %v213 = vsel %vm207, %v212, %v211
    %vm214 = vcmp.ne.s32.totalorder %v206, 0
    %vm215 = vcmp.ne.s32.totalorder %v213, 0
    %vm216 = vcmp.lt.s32.totalorder %v206, 0
    %vm217 = vcmp.lt.s32.totalorder %v213, 0
    %vm218 = vmand %vm216, %vm214
    %vm219 = vmand %vm217, %vm215
    %v220 = vadd.s32 %v206, 16
    %v221 = vadd.s32 %v213, 16
    %v222 = vsel %vm218, %v220, %v206
    %v223 = vsel %vm219, %v221, %v213
    %vm224 = vcmp.eq.s32.totalorder %v222, 15
    %vm225 = vcmp.eq.s32.totalorder %v223, 15
    %v226 = vsel %vm224, 0.0, %v194
    %v227 = vsel %vm225, 0.0, %v195
    %vm228 = vcmp.eq.s32.totalorder %v222, 0
    %vm229 = vcmp.eq.s32.totalorder %v223, 0
    %v230 = vsel %vm228, 0.0, %v194
    %v231 = vsel %vm229, 0.0, %v195
    %235 = vrot.lane.b32.xlu0 0.0, 127
    %v236 = vpop.permute.xlu0 %235
    %237 = vrot.lane.b32.xlu0 %v194, 127
    %v238 = vpop.permute.xlu0 %237
    %239 = vrot.lane.b32.xlu0 %v195, 127
    %v240 = vpop.permute.xlu0 %239
    %vm241 = vcmask 1039360
    %v242 = vsel %vm241, %v236, %v238
    %v243 = vsel %vm241, %v238, %v240
    %246 = vrot.lane.b32.xlu0 0.0, 126
    %v247 = vpop.permute.xlu0 %246
    %248 = vrot.lane.b32.xlu0 %v230, 126
    %v249 = vpop.permute.xlu0 %248
    %250 = vrot.lane.b32.xlu0 %v231, 126
    %v251 = vpop.permute.xlu0 %250
    %vm252 = vcmask 1031168
    %v253 = vsel %vm252, %v247, %v249
    %v254 = vsel %vm252, %v249, %v251
    %257 = vrot.lane.b32.xlu0 0.0, 112
    %v258 = vpop.permute.xlu0 %257
    %259 = vrot.lane.b32.xlu0 %v226, 112
    %v260 = vpop.permute.xlu0 %259
    %261 = vrot.lane.b32.xlu0 %v227, 112
    %v262 = vpop.permute.xlu0 %261
    %vm263 = vcmask 916480
    %v264 = vsel %vm263, %v258, %v260
    %v265 = vsel %vm263, %v260, %v262
    %266 = vrot.lane.b32.xlu0 %v194, 111
    %v267 = vpop.permute.xlu0 %266
    %268 = vrot.lane.b32.xlu0 %v195, 111
    %v269 = vpop.permute.xlu0 %268
    %vm270 = vcmask 908288
    %v271 = vsel %vm270, %v267, %v269
    %272 = vrot.lane.b32.xlu0 %v230, 110
    %v273 = vpop.permute.xlu0 %272
    %274 = vrot.lane.b32.xlu0 %v231, 110
    %v275 = vpop.permute.xlu0 %274
    %276 = vrot.lane.b32.xlu0 0.0, 110
    %v277 = vpop.permute.xlu0 %276
    %vm278 = vcmask 900096
    %v279 = vsel %vm278, %v273, %v275
    %v280 = vsel %vm278, %v275, %v277
    %281 = vrot.lane.b32.xlu0 %v226, 96
    %v282 = vpop.permute.xlu0 %281
    %283 = vrot.lane.b32.xlu0 %v227, 96
    %v284 = vpop.permute.xlu0 %283
    %285 = vrot.lane.b32.xlu0 0.0, 96
    %v286 = vpop.permute.xlu0 %285
    %vm287 = vcmask 785408
    %v288 = vsel %vm287, %v282, %v284
    %v289 = vsel %vm287, %v284, %v286
    %290 = vrot.lane.b32.xlu0 %v194, 95
    %v291 = vpop.permute.xlu0 %290
    %292 = vrot.lane.b32.xlu0 %v195, 95
    %v293 = vpop.permute.xlu0 %292
    %294 = vrot.lane.b32.xlu0 0.0, 95
    %v295 = vpop.permute.xlu0 %294
    %vm296 = vcmask 777216
    %v297 = vsel %vm296, %v291, %v293
    %v298 = vsel %vm296, %v293, %v295
    %299 = vrot.lane.b32.xlu0 %v230, 94
    %v300 = vpop.permute.xlu0 %299
    %301 = vrot.lane.b32.xlu0 %v231, 94
    %v302 = vpop.permute.xlu0 %301
    %303 = vrot.lane.b32.xlu0 0.0, 94
    %v304 = vpop.permute.xlu0 %303
    %vm305 = vcmask 769024
    %v306 = vsel %vm305, %v300, %v302
    %v307 = vsel %vm305, %v302, %v304
    %v308 = vld [vmem:[%s1] sm:$0xff]
    %v309 = vld [vmem:[%s1 + $0x8] sm:$0xff]
    %v310 = vld [vmem:[%s2] sm:$0xff]
    %v311 = vld [vmem:[%s2 + $0x8] sm:$0xff]
    %313 = vset.pattern.permute.xlu0 0
    %314 = vperm.xlu0 %313, %v310
    %v315 = vpop.permute.xlu0 %314
    %318 = vset.pattern.permute.xlu0 0
    %319 = vperm.xlu0 %318, %v311
    %v320 = vpop.permute.xlu0 %319
    %322 = vrot.lane.b32.xlu0 0.0, 17
    %v323 = vpop.permute.xlu0 %322
    %324 = vrot.lane.b32.xlu0 %v226, 17
    %v325 = vpop.permute.xlu0 %324
    %326 = vrot.lane.b32.xlu0 %v227, 17
    %v327 = vpop.permute.xlu0 %326
    %328 = vrot.lane.b32.xlu0 %v242, 17
    %v329 = vpop.permute.xlu0 %328
    %330 = vrot.lane.b32.xlu0 %v243, 17
    %v331 = vpop.permute.xlu0 %330
    %332 = vrot.lane.b32.xlu0 %v240, 17
    %v333 = vpop.permute.xlu0 %332
    %334 = vrot.lane.b32.xlu0 %v253, 17
    %v335 = vpop.permute.xlu0 %334
    %336 = vrot.lane.b32.xlu0 %v254, 17
    %v337 = vpop.permute.xlu0 %336
    %338 = vrot.lane.b32.xlu0 %v251, 17
    %v339 = vpop.permute.xlu0 %338
    %340 = vrot.lane.b32.xlu0 %v264, 17
    %v341 = vpop.permute.xlu0 %340
    %342 = vrot.lane.b32.xlu0 %v265, 17
    %v343 = vpop.permute.xlu0 %342
    %344 = vrot.lane.b32.xlu0 %v262, 17
    %v345 = vpop.permute.xlu0 %344
    %346 = vrot.lane.b32.xlu0 %v267, 17
    %v347 = vpop.permute.xlu0 %346
    %348 = vrot.lane.b32.xlu0 %v271, 17
    %v349 = vpop.permute.xlu0 %348
    %350 = vrot.lane.b32.xlu0 %v269, 17
    %v351 = vpop.permute.xlu0 %350
    %352 = vrot.lane.b32.xlu0 %v273, 17
    %v353 = vpop.permute.xlu0 %352
    %354 = vrot.lane.b32.xlu0 %v279, 17
    %v355 = vpop.permute.xlu0 %354
    %356 = vrot.lane.b32.xlu0 %v280, 17
    %v357 = vpop.permute.xlu0 %356
    %358 = vrot.lane.b32.xlu0 %v282, 17
    %v359 = vpop.permute.xlu0 %358
    %360 = vrot.lane.b32.xlu0 %v288, 17
    %v361 = vpop.permute.xlu0 %360
    %362 = vrot.lane.b32.xlu0 %v289, 17
    %v363 = vpop.permute.xlu0 %362
    %364 = vrot.lane.b32.xlu0 %v291, 17
    %v365 = vpop.permute.xlu0 %364
    %366 = vrot.lane.b32.xlu0 %v297, 17
    %v367 = vpop.permute.xlu0 %366
    %368 = vrot.lane.b32.xlu0 %v298, 17
    %v369 = vpop.permute.xlu0 %368
    %370 = vrot.lane.b32.xlu0 %v300, 17
    %v371 = vpop.permute.xlu0 %370
    %372 = vrot.lane.b32.xlu0 %v306, 17
    %v373 = vpop.permute.xlu0 %372
    %374 = vrot.lane.b32.xlu0 %v307, 17
    %v375 = vpop.permute.xlu0 %374
    %vm376 = vcmask 138240
    %v377 = vsel %vm376, %v323, %v325
    %v378 = vsel %vm376, %v325, %v327
    %v379 = vsel %vm376, %v329, %v331
    %v380 = vsel %vm376, %v331, %v333
    %v381 = vsel %vm376, %v335, %v337
    %v382 = vsel %vm376, %v337, %v339
    %v383 = vsel %vm376, %v341, %v343
    %v384 = vsel %vm376, %v343, %v345
    %v385 = vsel %vm376, %v347, %v349
    %v386 = vsel %vm376, %v349, %v351
    %v387 = vsel %vm376, %v353, %v355
    %v388 = vsel %vm376, %v355, %v357
    %v389 = vsel %vm376, %v359, %v361
    %v390 = vsel %vm376, %v361, %v363
    %v391 = vsel %vm376, %v365, %v367
    %v392 = vsel %vm376, %v367, %v369
    %v393 = vsel %vm376, %v371, %v373
    %v394 = vsel %vm376, %v373, %v375
    %vm413 = vcmask 588800
    %v415 = vsel %vm413, %v308, 0
    %v418 = vsel %vm413, %v309, 0
    %420 = vmatprep.subr.mxu0 0.0
    %421 = vmatpush1.msra.mxu0 0.0
    %422 = vmatprep.subr.mxu0 0.0
    %423 = vmatpush1.msra.mxu0 0.0
    %424 = vmatprep.subr.mxu0 0.0
    %425 = vmatpush1.msra.mxu0 0.0
    %426 = vmatprep.subr.mxu0 0.0
    %427 = vmatpush1.msra.mxu0 0.0
    %428 = vmatprep.subr.mxu0 0.0
    %429 = vmatpush1.msra.mxu0 0.0
    %430 = vmatprep.subr.mxu0 0.0
    %431 = vmatpush1.msra.mxu0 0.0
    %432 = vmatprep.subr.mxu0 0.0
    %433 = vmatpush1.msra.mxu0 0.0
    %434 = vmatprep.subr.mxu0 %v394
    %435 = vmatpush1.msra.mxu0 %v393
    %436 = vmatprep.subr.mxu0 %v392
    %437 = vmatpush1.msra.mxu0 %v391
    %438 = vmatprep.subr.mxu0 %v390
    %439 = vmatpush1.msra.mxu0 %v389
    %440 = vmatprep.subr.mxu0 %v388
    %441 = vmatpush1.msra.mxu0 %v387
    %442 = vmatprep.subr.mxu0 %v386
    %443 = vmatpush1.msra.mxu0 %v385
    %444 = vmatprep.subr.mxu0 %v384
    %445 = vmatpush1.msra.mxu0 %v383
    %446 = vmatprep.subr.mxu0 %v382
    %447 = vmatpush1.msra.mxu0 %v381
    %448 = vmatprep.subr.mxu0 %v380
    %449 = vmatpush1.msra.mxu0 %v379
    %450 = vmatprep.subr.mxu0 %v378
    %451 = vmatpush1.msra.mxu0 %v377
    %452 = vmatprep.subr.mxu0 0.0
    %453 = vmatpush2.msra.mxu0 0.0
    %454 = vmatprep.subr.mxu0 0.0
    %455 = vmatpush2.msra.mxu0 0.0
    %456 = vmatprep.subr.mxu0 0.0
    %457 = vmatpush2.msra.mxu0 0.0
    %458 = vmatprep.subr.mxu0 0.0
    %459 = vmatpush2.msra.mxu0 0.0
    %460 = vmatprep.subr.mxu0 0.0
    %461 = vmatpush2.msra.mxu0 0.0
    %462 = vmatprep.subr.mxu0 0.0
    %463 = vmatpush2.msra.mxu0 0.0
    %464 = vmatprep.subr.mxu0 0.0
    %465 = vmatpush2.msra.mxu0 0.0
    %466 = vmatprep.subr.mxu0 0.0
    %467 = vmatpush2.msra.mxu0 0.0
    %468 = vmatprep.subr.mxu0 0.0
    %469 = vmatpush2.msra.mxu0 0.0
    %470 = vmatprep.subr.mxu0 0.0
    %471 = vmatpush2.msra.mxu0 0.0
    %472 = vmatprep.subr.mxu0 0.0
    %473 = vmatpush2.msra.mxu0 0.0
    %474 = vmatprep.subr.mxu0 0.0
    %475 = vmatpush2.msra.mxu0 0.0
    %476 = vmatprep.subr.mxu0 0.0
    %477 = vmatpush2.msra.mxu0 0.0
    %478 = vmatprep.subr.mxu0 0.0
    %479 = vmatpush2.msra.mxu0 0.0
    %480 = vmatprep.subr.mxu0 0.0
    %481 = vmatpush2.msra.mxu0 0.0
    %482 = vmatprep.subr.mxu0 0.0
    %483 = vmatpush2.msra.mxu0 0.0
    %484 = vmatprep.mubr.f32.mxu0 0.0
    %485 = vmatmul.mubr.f32.gmra.mxu0 %v415
    %v486 = vpop.f32.mrf.mxu0
    %v487 = vadd.f32 %v315, %v486
    %v488 = vpop.f32.mrf.mxu0
    %v489 = vadd.f32 %v315, %v488
    %490 = vmatprep.mubr.f32.mxu0 0.0
    %491 = vmatmul.mubr.f32.gmra.mxu0 %v418
    %v492 = vpop.f32.mrf.mxu0
    %v493 = vadd.f32 %v320, %v492
    %v494 = vpop.f32.mrf.mxu0
    %v495 = vadd.f32 %v320, %v494
    %496 = vdwg.mxu0
    %v497 = vmax.f32 %v487, 0.0
    %v498 = vmax.f32 %v489, 0.0
    %v499 = vmax.f32 %v493, 0.0
    %v500 = vmax.f32 %v495, 0.0
    %v503 = vrot.slane %v497, 2
    %v504 = vrot.slane %v498, 2
    %v507 = vrot.slane %v497, 4
    %v508 = vrot.slane %v498, 4
    %v511 = vrot.slane %v497, 6
    %v512 = vrot.slane %v498, 6
    %v517 = vrot.slane %v499, 2
    %v518 = vrot.slane %v500, 2
    %v521 = vrot.slane %v499, 4
    %v522 = vrot.slane %v500, 4
    %v525 = vrot.slane %v499, 6
    %v526 = vrot.slane %v500, 6
    %v529 = vpack.c.bf16 %v497, %v497
    %v530 = vpack.c.bf16 %v498, %v498
    %v531 = vpack.c.bf16 %v503, %v503
    %v532 = vpack.c.bf16 %v504, %v504
    %v533 = vpack.c.bf16 %v507, %v507
    %v534 = vpack.c.bf16 %v508, %v508
    %v535 = vpack.c.bf16 %v511, %v511
    %v536 = vpack.c.bf16 %v512, %v512
    %v537 = vpack.c.bf16 %v499, %v499
    %v538 = vpack.c.bf16 %v500, %v500
    %v539 = vpack.c.bf16 %v517, %v517
    %v540 = vpack.c.bf16 %v518, %v518
    %v541 = vpack.c.bf16 %v521, %v521
    %v542 = vpack.c.bf16 %v522, %v522
    %v543 = vpack.c.bf16 %v525, %v525
    %v544 = vpack.c.bf16 %v526, %v526
    %v545 = vld [vmem:[#allocation2] sm:$0xff]
    %v546 = vld [vmem:[#allocation2 + $0x8] sm:$0xff]
    %v547 = vld [vmem:[#allocation2 + $0x10] sm:$0xff]
    %v548 = vld [vmem:[#allocation2 + $0x18] sm:$0xff]
    %v549 = vld [vmem:[#allocation2 + $0x20] sm:$0xff]
    %v550 = vld [vmem:[#allocation2 + $0x28] sm:$0xff]
    %v551 = vld [vmem:[#allocation2 + $0x30] sm:$0xff]
    %v552 = vld [vmem:[#allocation2 + $0x38] sm:$0xff]
    %v553 = vld [vmem:[#allocation2 + $0x40] sm:$0xff]
    %v554 = vld [vmem:[#allocation2 + $0x48] sm:$0xff]
    %v555 = vld [vmem:[#allocation2 + $0x50] sm:$0xff]
    %v556 = vld [vmem:[#allocation2 + $0x58] sm:$0xff]
    %v557 = vld [vmem:[#allocation2 + $0x60] sm:$0xff]
    %v558 = vld [vmem:[#allocation2 + $0x68] sm:$0xff]
    %v559 = vld [vmem:[#allocation2 + $0x70] sm:$0xff]
    %v560 = vld [vmem:[#allocation2 + $0x78] sm:$0xff]
    %v561 = vld [vmem:[#allocation2 + $0x80] sm:$0xff]
    %v562 = vld [vmem:[#allocation2 + $0x88] sm:$0xff]
    %v563 = vld [vmem:[#allocation2 + $0x90] sm:$0xff]
    %v564 = vld [vmem:[#allocation2 + $0x98] sm:$0xff]
    %v565 = vld [vmem:[#allocation2 + $0xa0] sm:$0xff]
    %v566 = vld [vmem:[#allocation2 + $0xa8] sm:$0xff]
    %v567 = vld [vmem:[#allocation2 + $0xb0] sm:$0xff]
    %v568 = vld [vmem:[#allocation2 + $0xb8] sm:$0xff]
    %v569 = vld [vmem:[#allocation2 + $0xc0] sm:$0xff]
    %v570 = vld [vmem:[#allocation2 + $0xc8] sm:$0xff]
    %v571 = vld [vmem:[#allocation2 + $0xd0] sm:$0xff]
    %v572 = vld [vmem:[#allocation2 + $0xd8] sm:$0xff]
    %v573 = vld [vmem:[#allocation2 + $0xe0] sm:$0xff]
    %v574 = vld [vmem:[#allocation2 + $0xe8] sm:$0xff]
    %v575 = vld [vmem:[#allocation2 + $0xf0] sm:$0xff]
    %v576 = vld [vmem:[#allocation2 + $0xf8] sm:$0xff]
    %v577 = vld [vmem:[#allocation2 + $0x100] sm:$0xff]
    %v578 = vld [vmem:[#allocation2 + $0x108] sm:$0xff]
    %v579 = vld [vmem:[#allocation2 + $0x110] sm:$0xff]
    %v580 = vld [vmem:[#allocation2 + $0x118] sm:$0xff]
    %v581 = vld [vmem:[#allocation2 + $0x120] sm:$0xff]
    %v582 = vld [vmem:[#allocation2 + $0x128] sm:$0xff]
    %v583 = vld [vmem:[#allocation2 + $0x130] sm:$0xff]
    %v584 = vld [vmem:[#allocation2 + $0x138] sm:$0xff]
    %v585 = vld [vmem:[#allocation2 + $0x140] sm:$0xff]
    %v586 = vld [vmem:[#allocation2 + $0x148] sm:$0xff]
    %v587 = vld [vmem:[#allocation2 + $0x150] sm:$0xff]
    %v588 = vld [vmem:[#allocation2 + $0x158] sm:$0xff]
    %v589 = vld [vmem:[#allocation2 + $0x160] sm:$0xff]
    %v590 = vld [vmem:[#allocation2 + $0x168] sm:$0xff]
    %v591 = vld [vmem:[#allocation2 + $0x170] sm:$0xff]
    %v592 = vld [vmem:[#allocation2 + $0x178] sm:$0xff]
    %v593 = vld [vmem:[#allocation2 + $0x180] sm:$0xff]
    %v594 = vld [vmem:[#allocation2 + $0x188] sm:$0xff]
    %v595 = vld [vmem:[#allocation2 + $0x190] sm:$0xff]
    %v596 = vld [vmem:[#allocation2 + $0x198] sm:$0xff]
    %v597 = vld [vmem:[#allocation2 + $0x1a0] sm:$0xff]
    %v598 = vld [vmem:[#allocation2 + $0x1a8] sm:$0xff]
    %v599 = vld [vmem:[#allocation2 + $0x1b0] sm:$0xff]
    %v600 = vld [vmem:[#allocation2 + $0x1b8] sm:$0xff]
    %v601 = vld [vmem:[#allocation2 + $0x1c0] sm:$0xff]
    %v602 = vld [vmem:[#allocation2 + $0x1c8] sm:$0xff]
    %v603 = vld [vmem:[#allocation2 + $0x1d0] sm:$0xff]
    %v604 = vld [vmem:[#allocation2 + $0x1d8] sm:$0xff]
    %v605 = vld [vmem:[#allocation2 + $0x1e0] sm:$0xff]
    %v606 = vld [vmem:[#allocation2 + $0x1e8] sm:$0xff]
    %v607 = vld [vmem:[#allocation2 + $0x1f0] sm:$0xff]
    %v608 = vld [vmem:[#allocation2 + $0x1f8] sm:$0xff]
    %v609 = vld [vmem:[#allocation2 + $0x200] sm:$0xff]
    %v610 = vld [vmem:[#allocation2 + $0x208] sm:$0xff]
    %v611 = vld [vmem:[#allocation2 + $0x210] sm:$0xff]
    %v612 = vld [vmem:[#allocation2 + $0x218] sm:$0xff]
    %v613 = vld [vmem:[#allocation2 + $0x220] sm:$0xff]
    %v614 = vld [vmem:[#allocation2 + $0x228] sm:$0xff]
    %v615 = vld [vmem:[#allocation2 + $0x230] sm:$0xff]
    %v616 = vld [vmem:[#allocation2 + $0x238] sm:$0xff]
    %v617 = vld [vmem:[#allocation2 + $0x240] sm:$0xff]
    %v618 = vld [vmem:[#allocation2 + $0x248] sm:$0xff]
    %v619 = vld [vmem:[#allocation2 + $0x250] sm:$0xff]
    %v620 = vld [vmem:[#allocation2 + $0x258] sm:$0xff]
    %v621 = vld [vmem:[#allocation2 + $0x260] sm:$0xff]
    %v622 = vld [vmem:[#allocation2 + $0x268] sm:$0xff]
    %v623 = vld [vmem:[#allocation2 + $0x270] sm:$0xff]
    %v624 = vld [vmem:[#allocation2 + $0x278] sm:$0xff]
    %v625 = vld [vmem:[#allocation2 + $0x280] sm:$0xff]
    %v626 = vld [vmem:[#allocation2 + $0x288] sm:$0xff]
    %v627 = vld [vmem:[#allocation2 + $0x290] sm:$0xff]
    %v628 = vld [vmem:[#allocation2 + $0x298] sm:$0xff]
    %v629 = vld [vmem:[#allocation2 + $0x2a0] sm:$0xff]
    %v630 = vld [vmem:[#allocation2 + $0x2a8] sm:$0xff]
    %v631 = vld [vmem:[#allocation2 + $0x2b0] sm:$0xff]
    %v632 = vld [vmem:[#allocation2 + $0x2b8] sm:$0xff]
    %v633 = vld [vmem:[#allocation2 + $0x2c0] sm:$0xff]
    %v634 = vld [vmem:[#allocation2 + $0x2c8] sm:$0xff]
    %v635 = vld [vmem:[#allocation2 + $0x2d0] sm:$0xff]
    %v636 = vld [vmem:[#allocation2 + $0x2d8] sm:$0xff]
    %v637 = vld [vmem:[#allocation2 + $0x2e0] sm:$0xff]
    %v638 = vld [vmem:[#allocation2 + $0x2e8] sm:$0xff]
    %v639 = vld [vmem:[#allocation2 + $0x2f0] sm:$0xff]
    %v640 = vld [vmem:[#allocation2 + $0x2f8] sm:$0xff]
    %v641 = vld [vmem:[#allocation2 + $0x300] sm:$0xff]
    %v642 = vld [vmem:[#allocation2 + $0x308] sm:$0xff]
    %v643 = vld [vmem:[#allocation2 + $0x310] sm:$0xff]
    %v644 = vld [vmem:[#allocation2 + $0x318] sm:$0xff]
    %v645 = vld [vmem:[#allocation2 + $0x320] sm:$0xff]
    %v646 = vld [vmem:[#allocation2 + $0x328] sm:$0xff]
    %v647 = vld [vmem:[#allocation2 + $0x330] sm:$0xff]
    %v648 = vld [vmem:[#allocation2 + $0x338] sm:$0xff]
    %v649 = vld [vmem:[#allocation2 + $0x340] sm:$0xff]
    %v650 = vld [vmem:[#allocation2 + $0x348] sm:$0xff]
    %v651 = vld [vmem:[#allocation2 + $0x350] sm:$0xff]
    %v652 = vld [vmem:[#allocation2 + $0x358] sm:$0xff]
    %v653 = vld [vmem:[#allocation2 + $0x360] sm:$0xff]
    %v654 = vld [vmem:[#allocation2 + $0x368] sm:$0xff]
    %v655 = vld [vmem:[#allocation2 + $0x370] sm:$0xff]
    %v656 = vld [vmem:[#allocation2 + $0x378] sm:$0xff]
    %v657 = vld [vmem:[#allocation2 + $0x380] sm:$0xff]
    %v658 = vld [vmem:[#allocation2 + $0x388] sm:$0xff]
    %v659 = vld [vmem:[#allocation2 + $0x390] sm:$0xff]
    %v660 = vld [vmem:[#allocation2 + $0x398] sm:$0xff]
    %v661 = vld [vmem:[#allocation2 + $0x3a0] sm:$0xff]
    %v662 = vld [vmem:[#allocation2 + $0x3a8] sm:$0xff]
    %v663 = vld [vmem:[#allocation2 + $0x3b0] sm:$0xff]
    %v664 = vld [vmem:[#allocation2 + $0x3b8] sm:$0xff]
    %v665 = vld [vmem:[#allocation2 + $0x3c0] sm:$0xff]
    %v666 = vld [vmem:[#allocation2 + $0x3c8] sm:$0xff]
    %v667 = vld [vmem:[#allocation2 + $0x3d0] sm:$0xff]
    %v668 = vld [vmem:[#allocation2 + $0x3d8] sm:$0xff]
    %v669 = vld [vmem:[#allocation2 + $0x3e0] sm:$0xff]
    %v670 = vld [vmem:[#allocation2 + $0x3e8] sm:$0xff]
    %v671 = vld [vmem:[#allocation2 + $0x3f0] sm:$0xff]
    %v672 = vld [vmem:[#allocation2 + $0x3f8] sm:$0xff]
    %v673 = vld [vmem:[#allocation2 + $0x400] sm:$0xff]
    %v674 = vld [vmem:[#allocation2 + $0x408] sm:$0xff]
    %v675 = vld [vmem:[#allocation2 + $0x410] sm:$0xff]
    %v676 = vld [vmem:[#allocation2 + $0x418] sm:$0xff]
    %v677 = vld [vmem:[#allocation2 + $0x420] sm:$0xff]
    %v678 = vld [vmem:[#allocation2 + $0x428] sm:$0xff]
    %v679 = vld [vmem:[#allocation2 + $0x430] sm:$0xff]
    %v680 = vld [vmem:[#allocation2 + $0x438] sm:$0xff]
    %v681 = vld [vmem:[#allocation2 + $0x440] sm:$0xff]
    %v682 = vld [vmem:[#allocation2 + $0x448] sm:$0xff]
    %v683 = vld [vmem:[#allocation2 + $0x450] sm:$0xff]
    %v684 = vld [vmem:[#allocation2 + $0x458] sm:$0xff]
    %v685 = vld [vmem:[#allocation2 + $0x460] sm:$0xff]
    %v686 = vld [vmem:[#allocation2 + $0x468] sm:$0xff]
    %v687 = vld [vmem:[#allocation2 + $0x470] sm:$0xff]
    %v688 = vld [vmem:[#allocation2 + $0x478] sm:$0xff]
    %v689 = vld [vmem:[#allocation2 + $0x480] sm:$0xff]
    %v690 = vld [vmem:[#allocation2 + $0x488] sm:$0xff]
    %v691 = vld [vmem:[#allocation2 + $0x490] sm:$0xff]
    %v692 = vld [vmem:[#allocation2 + $0x498] sm:$0xff]
    %v693 = vld [vmem:[#allocation2 + $0x4a0] sm:$0xff]
    %v694 = vld [vmem:[#allocation2 + $0x4a8] sm:$0xff]
    %v695 = vld [vmem:[#allocation2 + $0x4b0] sm:$0xff]
    %v696 = vld [vmem:[#allocation2 + $0x4b8] sm:$0xff]
    %v697 = vld [vmem:[#allocation2 + $0x4c0] sm:$0xff]
    %v698 = vld [vmem:[#allocation2 + $0x4c8] sm:$0xff]
    %v699 = vld [vmem:[#allocation2 + $0x4d0] sm:$0xff]
    %v700 = vld [vmem:[#allocation2 + $0x4d8] sm:$0xff]
    %v701 = vld [vmem:[#allocation2 + $0x4e0] sm:$0xff]
    %v702 = vld [vmem:[#allocation2 + $0x4e8] sm:$0xff]
    %v703 = vld [vmem:[#allocation2 + $0x4f0] sm:$0xff]
    %v704 = vld [vmem:[#allocation2 + $0x4f8] sm:$0xff]
    %v705 = vld [vmem:[#allocation2 + $0x500] sm:$0xff]
    %v706 = vld [vmem:[#allocation2 + $0x508] sm:$0xff]
    %v707 = vld [vmem:[#allocation2 + $0x510] sm:$0xff]
    %v708 = vld [vmem:[#allocation2 + $0x518] sm:$0xff]
    %v709 = vld [vmem:[#allocation2 + $0x520] sm:$0xff]
    %v710 = vld [vmem:[#allocation2 + $0x528] sm:$0xff]
    %v711 = vld [vmem:[#allocation2 + $0x530] sm:$0xff]
    %v712 = vld [vmem:[#allocation2 + $0x538] sm:$0xff]
    %v713 = vld [vmem:[#allocation2 + $0x540] sm:$0xff]
    %v714 = vld [vmem:[#allocation2 + $0x548] sm:$0xff]
    %v715 = vld [vmem:[#allocation2 + $0x550] sm:$0xff]
    %v716 = vld [vmem:[#allocation2 + $0x558] sm:$0xff]
    %v717 = vld [vmem:[#allocation2 + $0x560] sm:$0xff]
    %v718 = vld [vmem:[#allocation2 + $0x568] sm:$0xff]
    %v719 = vld [vmem:[#allocation2 + $0x570] sm:$0xff]
    %v720 = vld [vmem:[#allocation2 + $0x578] sm:$0xff]
    %v721 = vld [vmem:[#allocation2 + $0x580] sm:$0xff]
    %v722 = vld [vmem:[#allocation2 + $0x588] sm:$0xff]
    %v723 = vld [vmem:[#allocation2 + $0x590] sm:$0xff]
    %v724 = vld [vmem:[#allocation2 + $0x598] sm:$0xff]
    %v725 = vld [vmem:[#allocation2 + $0x5a0] sm:$0xff]
    %v726 = vld [vmem:[#allocation2 + $0x5a8] sm:$0xff]
    %v727 = vld [vmem:[#allocation2 + $0x5b0] sm:$0xff]
    %v728 = vld [vmem:[#allocation2 + $0x5b8] sm:$0xff]
    %v729 = vld [vmem:[#allocation2 + $0x5c0] sm:$0xff]
    %v730 = vld [vmem:[#allocation2 + $0x5c8] sm:$0xff]
    %v731 = vld [vmem:[#allocation2 + $0x5d0] sm:$0xff]
    %v732 = vld [vmem:[#allocation2 + $0x5d8] sm:$0xff]
    %v733 = vld [vmem:[#allocation2 + $0x5e0] sm:$0xff]
    %v734 = vld [vmem:[#allocation2 + $0x5e8] sm:$0xff]
    %v735 = vld [vmem:[#allocation2 + $0x5f0] sm:$0xff]
    %v736 = vld [vmem:[#allocation2 + $0x5f8] sm:$0xff]
    %v737 = vld [vmem:[#allocation2 + $0x600] sm:$0xff]
    %v738 = vld [vmem:[#allocation2 + $0x608] sm:$0xff]
    %v739 = vld [vmem:[#allocation2 + $0x610] sm:$0xff]
    %v740 = vld [vmem:[#allocation2 + $0x618] sm:$0xff]
    %v741 = vld [vmem:[#allocation2 + $0x620] sm:$0xff]
    %v742 = vld [vmem:[#allocation2 + $0x628] sm:$0xff]
    %v743 = vld [vmem:[#allocation2 + $0x630] sm:$0xff]
    %v744 = vld [vmem:[#allocation2 + $0x638] sm:$0xff]
    %v745 = vld [vmem:[#allocation2 + $0x640] sm:$0xff]
    %v746 = vld [vmem:[#allocation2 + $0x648] sm:$0xff]
    %v747 = vld [vmem:[#allocation2 + $0x650] sm:$0xff]
    %v748 = vld [vmem:[#allocation2 + $0x658] sm:$0xff]
    %v749 = vld [vmem:[#allocation2 + $0x660] sm:$0xff]
    %v750 = vld [vmem:[#allocation2 + $0x668] sm:$0xff]
    %v751 = vld [vmem:[#allocation2 + $0x670] sm:$0xff]
    %v752 = vld [vmem:[#allocation2 + $0x678] sm:$0xff]
    %v753 = vld [vmem:[#allocation2 + $0x680] sm:$0xff]
    %v754 = vld [vmem:[#allocation2 + $0x688] sm:$0xff]
    %v755 = vld [vmem:[#allocation2 + $0x690] sm:$0xff]
    %v756 = vld [vmem:[#allocation2 + $0x698] sm:$0xff]
    %v757 = vld [vmem:[#allocation2 + $0x6a0] sm:$0xff]
    %v758 = vld [vmem:[#allocation2 + $0x6a8] sm:$0xff]
    %v759 = vld [vmem:[#allocation2 + $0x6b0] sm:$0xff]
    %v760 = vld [vmem:[#allocation2 + $0x6b8] sm:$0xff]
    %v761 = vld [vmem:[#allocation2 + $0x6c0] sm:$0xff]
    %v762 = vld [vmem:[#allocation2 + $0x6c8] sm:$0xff]
    %v763 = vld [vmem:[#allocation2 + $0x6d0] sm:$0xff]
    %v764 = vld [vmem:[#allocation2 + $0x6d8] sm:$0xff]
    %v765 = vld [vmem:[#allocation2 + $0x6e0] sm:$0xff]
    %v766 = vld [vmem:[#allocation2 + $0x6e8] sm:$0xff]
    %v767 = vld [vmem:[#allocation2 + $0x6f0] sm:$0xff]
    %v768 = vld [vmem:[#allocation2 + $0x6f8] sm:$0xff]
    %v769 = vld [vmem:[#allocation2 + $0x700] sm:$0xff]
    %v770 = vld [vmem:[#allocation2 + $0x708] sm:$0xff]
    %v771 = vld [vmem:[#allocation2 + $0x710] sm:$0xff]
    %v772 = vld [vmem:[#allocation2 + $0x718] sm:$0xff]
    %v773 = vld [vmem:[#allocation2 + $0x720] sm:$0xff]
    %v774 = vld [vmem:[#allocation2 + $0x728] sm:$0xff]
    %v775 = vld [vmem:[#allocation2 + $0x730] sm:$0xff]
    %v776 = vld [vmem:[#allocation2 + $0x738] sm:$0xff]
    %v777 = vld [vmem:[#allocation2 + $0x740] sm:$0xff]
    %v778 = vld [vmem:[#allocation2 + $0x748] sm:$0xff]
    %v779 = vld [vmem:[#allocation2 + $0x750] sm:$0xff]
    %v780 = vld [vmem:[#allocation2 + $0x758] sm:$0xff]
    %v781 = vld [vmem:[#allocation2 + $0x760] sm:$0xff]
    %v782 = vld [vmem:[#allocation2 + $0x768] sm:$0xff]
    %v783 = vld [vmem:[#allocation2 + $0x770] sm:$0xff]
    %v784 = vld [vmem:[#allocation2 + $0x778] sm:$0xff]
    %v785 = vld [vmem:[#allocation2 + $0x780] sm:$0xff]
    %v786 = vld [vmem:[#allocation2 + $0x788] sm:$0xff]
    %v787 = vld [vmem:[#allocation2 + $0x790] sm:$0xff]
    %v788 = vld [vmem:[#allocation2 + $0x798] sm:$0xff]
    %v789 = vld [vmem:[#allocation2 + $0x7a0] sm:$0xff]
    %v790 = vld [vmem:[#allocation2 + $0x7a8] sm:$0xff]
    %v791 = vld [vmem:[#allocation2 + $0x7b0] sm:$0xff]
    %v792 = vld [vmem:[#allocation2 + $0x7b8] sm:$0xff]
    %v793 = vld [vmem:[#allocation2 + $0x7c0] sm:$0xff]
    %v794 = vld [vmem:[#allocation2 + $0x7c8] sm:$0xff]
    %v795 = vld [vmem:[#allocation2 + $0x7d0] sm:$0xff]
    %v796 = vld [vmem:[#allocation2 + $0x7d8] sm:$0xff]
    %v797 = vld [vmem:[#allocation2 + $0x7e0] sm:$0xff]
    %v798 = vld [vmem:[#allocation2 + $0x7e8] sm:$0xff]
    %v799 = vld [vmem:[#allocation2 + $0x7f0] sm:$0xff]
    %v800 = vld [vmem:[#allocation2 + $0x7f8] sm:$0xff]
    %v801 = vld [vmem:[#allocation4] sm:$0x3]
    %v803 = vlaneseq
    %v804 = vshrl.u32 %v803, 7
    %v805 = vsub.s32 0, %v804
    %v806 = vrot.slane %v801, %v805
    %v807 = vlaneseq
    %v808 = vshrl.u32 %v807, 7
    %v809 = vsub.s32 1, %v808
    %v810 = vrot.slane %v801, %v809
    %v1069 = vunpack.c.l.b16 %v545
    %v1070 = vunpack.c.h.b16 %v545
    %v1071 = vunpack.c.l.b16 %v546
    %v1072 = vunpack.c.h.b16 %v546
    %v1073 = vunpack.c.l.b16 %v547
    %v1074 = vunpack.c.h.b16 %v547
    %v1075 = vunpack.c.l.b16 %v548
    %v1076 = vunpack.c.h.b16 %v548
    %v1077 = vunpack.c.l.b16 %v549
    %v1078 = vunpack.c.h.b16 %v549
    %v1079 = vunpack.c.l.b16 %v550
    %v1080 = vunpack.c.h.b16 %v550
    %v1081 = vunpack.c.l.b16 %v551
    %v1082 = vunpack.c.h.b16 %v551
    %v1083 = vunpack.c.l.b16 %v552
    %v1084 = vunpack.c.h.b16 %v552
    %v1085 = vunpack.c.l.b16 %v553
    %v1086 = vunpack.c.h.b16 %v553
    %v1087 = vunpack.c.l.b16 %v554
    %v1088 = vunpack.c.h.b16 %v554
    %v1089 = vunpack.c.l.b16 %v555
    %v1090 = vunpack.c.h.b16 %v555
    %v1091 = vunpack.c.l.b16 %v556
    %v1092 = vunpack.c.h.b16 %v556
    %v1093 = vunpack.c.l.b16 %v557
    %v1094 = vunpack.c.h.b16 %v557
    %v1095 = vunpack.c.l.b16 %v558
    %v1096 = vunpack.c.h.b16 %v558
    %v1097 = vunpack.c.l.b16 %v559
    %v1098 = vunpack.c.h.b16 %v559
    %v1099 = vunpack.c.l.b16 %v560
    %v1100 = vunpack.c.h.b16 %v560
    %v1101 = vunpack.c.l.b16 %v561
    %v1102 = vunpack.c.h.b16 %v561
    %v1103 = vunpack.c.l.b16 %v562
    %v1104 = vunpack.c.h.b16 %v562
    %v1105 = vunpack.c.l.b16 %v563
    %v1106 = vunpack.c.h.b16 %v563
    %v1107 = vunpack.c.l.b16 %v564
    %v1108 = vunpack.c.h.b16 %v564
    %v1109 = vunpack.c.l.b16 %v565
    %v1110 = vunpack.c.h.b16 %v565
    %v1111 = vunpack.c.l.b16 %v566
    %v1112 = vunpack.c.h.b16 %v566
    %v1113 = vunpack.c.l.b16 %v567
    %v1114 = vunpack.c.h.b16 %v567
    %v1115 = vunpack.c.l.b16 %v568
    %v1116 = vunpack.c.h.b16 %v568
    %v1117 = vunpack.c.l.b16 %v569
    %v1118 = vunpack.c.h.b16 %v569
    %v1119 = vunpack.c.l.b16 %v570
    %v1120 = vunpack.c.h.b16 %v570
    %v1121 = vunpack.c.l.b16 %v571
    %v1122 = vunpack.c.h.b16 %v571
    %v1123 = vunpack.c.l.b16 %v572
    %v1124 = vunpack.c.h.b16 %v572
    %v1125 = vunpack.c.l.b16 %v573
    %v1126 = vunpack.c.h.b16 %v573
    %v1127 = vunpack.c.l.b16 %v574
    %v1128 = vunpack.c.h.b16 %v574
    %v1129 = vunpack.c.l.b16 %v575
    %v1130 = vunpack.c.h.b16 %v575
    %v1131 = vunpack.c.l.b16 %v576
    %v1132 = vunpack.c.h.b16 %v576
    %v1133 = vunpack.c.l.b16 %v577
    %v1134 = vunpack.c.h.b16 %v577
    %v1135 = vunpack.c.l.b16 %v578
    %v1136 = vunpack.c.h.b16 %v578
    %v1137 = vunpack.c.l.b16 %v579
    %v1138 = vunpack.c.h.b16 %v579
    %v1139 = vunpack.c.l.b16 %v580
    %v1140 = vunpack.c.h.b16 %v580
    %v1141 = vunpack.c.l.b16 %v581
    %v1142 = vunpack.c.h.b16 %v581
    %v1143 = vunpack.c.l.b16 %v582
    %v1144 = vunpack.c.h.b16 %v582
    %v1145 = vunpack.c.l.b16 %v583
    %v1146 = vunpack.c.h.b16 %v583
    %v1147 = vunpack.c.l.b16 %v584
    %v1148 = vunpack.c.h.b16 %v584
    %v1149 = vunpack.c.l.b16 %v585
    %v1150 = vunpack.c.h.b16 %v585
    %v1151 = vunpack.c.l.b16 %v586
    %v1152 = vunpack.c.h.b16 %v586
    %v1153 = vunpack.c.l.b16 %v587
    %v1154 = vunpack.c.h.b16 %v587
    %v1155 = vunpack.c.l.b16 %v588
    %v1156 = vunpack.c.h.b16 %v588
    %v1157 = vunpack.c.l.b16 %v589
    %v1158 = vunpack.c.h.b16 %v589
    %v1159 = vunpack.c.l.b16 %v590
    %v1160 = vunpack.c.h.b16 %v590
    %v1161 = vunpack.c.l.b16 %v591
    %v1162 = vunpack.c.h.b16 %v591
    %v1163 = vunpack.c.l.b16 %v592
    %v1164 = vunpack.c.h.b16 %v592
    %v1165 = vunpack.c.l.b16 %v593
    %v1166 = vunpack.c.h.b16 %v593
    %v1167 = vunpack.c.l.b16 %v594
    %v1168 = vunpack.c.h.b16 %v594
    %v1169 = vunpack.c.l.b16 %v595
    %v1170 = vunpack.c.h.b16 %v595
    %v1171 = vunpack.c.l.b16 %v596
    %v1172 = vunpack.c.h.b16 %v596
    %v1173 = vunpack.c.l.b16 %v597
    %v1174 = vunpack.c.h.b16 %v597
    %v1175 = vunpack.c.l.b16 %v598
    %v1176 = vunpack.c.h.b16 %v598
    %v1177 = vunpack.c.l.b16 %v599
    %v1178 = vunpack.c.h.b16 %v599
    %v1179 = vunpack.c.l.b16 %v600
    %v1180 = vunpack.c.h.b16 %v600
    %v1181 = vunpack.c.l.b16 %v601
    %v1182 = vunpack.c.h.b16 %v601
    %v1183 = vunpack.c.l.b16 %v602
    %v1184 = vunpack.c.h.b16 %v602
    %v1185 = vunpack.c.l.b16 %v603
    %v1186 = vunpack.c.h.b16 %v603
    %v1187 = vunpack.c.l.b16 %v604
    %v1188 = vunpack.c.h.b16 %v604
    %v1189 = vunpack.c.l.b16 %v605
    %v1190 = vunpack.c.h.b16 %v605
    %v1191 = vunpack.c.l.b16 %v606
    %v1192 = vunpack.c.h.b16 %v606
    %v1193 = vunpack.c.l.b16 %v607
    %v1194 = vunpack.c.h.b16 %v607
    %v1195 = vunpack.c.l.b16 %v608
    %v1196 = vunpack.c.h.b16 %v608
    %v1197 = vunpack.c.l.b16 %v609
    %v1198 = vunpack.c.h.b16 %v609
    %v1199 = vunpack.c.l.b16 %v610
    %v1200 = vunpack.c.h.b16 %v610
    %v1201 = vunpack.c.l.b16 %v611
    %v1202 = vunpack.c.h.b16 %v611
    %v1203 = vunpack.c.l.b16 %v612
    %v1204 = vunpack.c.h.b16 %v612
    %v1205 = vunpack.c.l.b16 %v613
    %v1206 = vunpack.c.h.b16 %v613
    %v1207 = vunpack.c.l.b16 %v614
    %v1208 = vunpack.c.h.b16 %v614
    %v1209 = vunpack.c.l.b16 %v615
    %v1210 = vunpack.c.h.b16 %v615
    %v1211 = vunpack.c.l.b16 %v616
    %v1212 = vunpack.c.h.b16 %v616
    %v1213 = vunpack.c.l.b16 %v617
    %v1214 = vunpack.c.h.b16 %v617
    %v1215 = vunpack.c.l.b16 %v618
    %v1216 = vunpack.c.h.b16 %v618
    %v1217 = vunpack.c.l.b16 %v619
    %v1218 = vunpack.c.h.b16 %v619
    %v1219 = vunpack.c.l.b16 %v620
    %v1220 = vunpack.c.h.b16 %v620
    %v1221 = vunpack.c.l.b16 %v621
    %v1222 = vunpack.c.h.b16 %v621
    %v1223 = vunpack.c.l.b16 %v622
    %v1224 = vunpack.c.h.b16 %v622
    %v1225 = vunpack.c.l.b16 %v623
    %v1226 = vunpack.c.h.b16 %v623
    %v1227 = vunpack.c.l.b16 %v624
    %v1228 = vunpack.c.h.b16 %v624
    %v1229 = vunpack.c.l.b16 %v625
    %v1230 = vunpack.c.h.b16 %v625
    %v1231 = vunpack.c.l.b16 %v626
    %v1232 = vunpack.c.h.b16 %v626
    %v1233 = vunpack.c.l.b16 %v627
    %v1234 = vunpack.c.h.b16 %v627
    %v1235 = vunpack.c.l.b16 %v628
    %v1236 = vunpack.c.h.b16 %v628
    %v1237 = vunpack.c.l.b16 %v629
    %v1238 = vunpack.c.h.b16 %v629
    %v1239 = vunpack.c.l.b16 %v630
    %v1240 = vunpack.c.h.b16 %v630
    %v1241 = vunpack.c.l.b16 %v631
    %v1242 = vunpack.c.h.b16 %v631
    %v1243 = vunpack.c.l.b16 %v632
    %v1244 = vunpack.c.h.b16 %v632
    %v1245 = vunpack.c.l.b16 %v633
    %v1246 = vunpack.c.h.b16 %v633
    %v1247 = vunpack.c.l.b16 %v634
    %v1248 = vunpack.c.h.b16 %v634
    %v1249 = vunpack.c.l.b16 %v635
    %v1250 = vunpack.c.h.b16 %v635
    %v1251 = vunpack.c.l.b16 %v636
    %v1252 = vunpack.c.h.b16 %v636
    %v1253 = vunpack.c.l.b16 %v637
    %v1254 = vunpack.c.h.b16 %v637
    %v1255 = vunpack.c.l.b16 %v638
    %v1256 = vunpack.c.h.b16 %v638
    %v1257 = vunpack.c.l.b16 %v639
    %v1258 = vunpack.c.h.b16 %v639
    %v1259 = vunpack.c.l.b16 %v640
    %v1260 = vunpack.c.h.b16 %v640
    %v1261 = vunpack.c.l.b16 %v641
    %v1262 = vunpack.c.h.b16 %v641
    %v1263 = vunpack.c.l.b16 %v642
    %v1264 = vunpack.c.h.b16 %v642
    %v1265 = vunpack.c.l.b16 %v643
    %v1266 = vunpack.c.h.b16 %v643
    %v1267 = vunpack.c.l.b16 %v644
    %v1268 = vunpack.c.h.b16 %v644
    %v1269 = vunpack.c.l.b16 %v645
    %v1270 = vunpack.c.h.b16 %v645
    %v1271 = vunpack.c.l.b16 %v646
    %v1272 = vunpack.c.h.b16 %v646
    %v1273 = vunpack.c.l.b16 %v647
    %v1274 = vunpack.c.h.b16 %v647
    %v1275 = vunpack.c.l.b16 %v648
    %v1276 = vunpack.c.h.b16 %v648
    %v1277 = vunpack.c.l.b16 %v649
    %v1278 = vunpack.c.h.b16 %v649
    %v1279 = vunpack.c.l.b16 %v650
    %v1280 = vunpack.c.h.b16 %v650
    %v1281 = vunpack.c.l.b16 %v651
    %v1282 = vunpack.c.h.b16 %v651
    %v1283 = vunpack.c.l.b16 %v652
    %v1284 = vunpack.c.h.b16 %v652
    %v1285 = vunpack.c.l.b16 %v653
    %v1286 = vunpack.c.h.b16 %v653
    %v1287 = vunpack.c.l.b16 %v654
    %v1288 = vunpack.c.h.b16 %v654
    %v1289 = vunpack.c.l.b16 %v655
    %v1290 = vunpack.c.h.b16 %v655
    %v1291 = vunpack.c.l.b16 %v656
    %v1292 = vunpack.c.h.b16 %v656
    %v1293 = vunpack.c.l.b16 %v657
    %v1294 = vunpack.c.h.b16 %v657
    %v1295 = vunpack.c.l.b16 %v658
    %v1296 = vunpack.c.h.b16 %v658
    %v1297 = vunpack.c.l.b16 %v659
    %v1298 = vunpack.c.h.b16 %v659
    %v1299 = vunpack.c.l.b16 %v660
    %v1300 = vunpack.c.h.b16 %v660
    %v1301 = vunpack.c.l.b16 %v661
    %v1302 = vunpack.c.h.b16 %v661
    %v1303 = vunpack.c.l.b16 %v662
    %v1304 = vunpack.c.h.b16 %v662
    %v1305 = vunpack.c.l.b16 %v663
    %v1306 = vunpack.c.h.b16 %v663
    %v1307 = vunpack.c.l.b16 %v664
    %v1308 = vunpack.c.h.b16 %v664
    %v1309 = vunpack.c.l.b16 %v665
    %v1310 = vunpack.c.h.b16 %v665
    %v1311 = vunpack.c.l.b16 %v666
    %v1312 = vunpack.c.h.b16 %v666
    %v1313 = vunpack.c.l.b16 %v667
    %v1314 = vunpack.c.h.b16 %v667
    %v1315 = vunpack.c.l.b16 %v668
    %v1316 = vunpack.c.h.b16 %v668
    %v1317 = vunpack.c.l.b16 %v669
    %v1318 = vunpack.c.h.b16 %v669
    %v1319 = vunpack.c.l.b16 %v670
    %v1320 = vunpack.c.h.b16 %v670
    %v1321 = vunpack.c.l.b16 %v671
    %v1322 = vunpack.c.h.b16 %v671
    %v1323 = vunpack.c.l.b16 %v672
    %v1324 = vunpack.c.h.b16 %v672
    %v1325 = vunpack.c.l.b16 %v673
    %v1326 = vunpack.c.h.b16 %v673
    %v1327 = vunpack.c.l.b16 %v674
    %v1328 = vunpack.c.h.b16 %v674
    %v1329 = vunpack.c.l.b16 %v675
    %v1330 = vunpack.c.h.b16 %v675
    %v1331 = vunpack.c.l.b16 %v676
    %v1332 = vunpack.c.h.b16 %v676
    %v1333 = vunpack.c.l.b16 %v677
    %v1334 = vunpack.c.h.b16 %v677
    %v1335 = vunpack.c.l.b16 %v678
    %v1336 = vunpack.c.h.b16 %v678
    %v1337 = vunpack.c.l.b16 %v679
    %v1338 = vunpack.c.h.b16 %v679
    %v1339 = vunpack.c.l.b16 %v680
    %v1340 = vunpack.c.h.b16 %v680
    %v1341 = vunpack.c.l.b16 %v681
    %v1342 = vunpack.c.h.b16 %v681
    %v1343 = vunpack.c.l.b16 %v682
    %v1344 = vunpack.c.h.b16 %v682
    %v1345 = vunpack.c.l.b16 %v683
    %v1346 = vunpack.c.h.b16 %v683
    %v1347 = vunpack.c.l.b16 %v684
    %v1348 = vunpack.c.h.b16 %v684
    %v1349 = vunpack.c.l.b16 %v685
    %v1350 = vunpack.c.h.b16 %v685
    %v1351 = vunpack.c.l.b16 %v686
    %v1352 = vunpack.c.h.b16 %v686
    %v1353 = vunpack.c.l.b16 %v687
    %v1354 = vunpack.c.h.b16 %v687
    %v1355 = vunpack.c.l.b16 %v688
    %v1356 = vunpack.c.h.b16 %v688
    %v1357 = vunpack.c.l.b16 %v689
    %v1358 = vunpack.c.h.b16 %v689
    %v1359 = vunpack.c.l.b16 %v690
    %v1360 = vunpack.c.h.b16 %v690
    %v1361 = vunpack.c.l.b16 %v691
    %v1362 = vunpack.c.h.b16 %v691
    %v1363 = vunpack.c.l.b16 %v692
    %v1364 = vunpack.c.h.b16 %v692
    %v1365 = vunpack.c.l.b16 %v693
    %v1366 = vunpack.c.h.b16 %v693
    %v1367 = vunpack.c.l.b16 %v694
    %v1368 = vunpack.c.h.b16 %v694
    %v1369 = vunpack.c.l.b16 %v695
    %v1370 = vunpack.c.h.b16 %v695
    %v1371 = vunpack.c.l.b16 %v696
    %v1372 = vunpack.c.h.b16 %v696
    %v1373 = vunpack.c.l.b16 %v697
    %v1374 = vunpack.c.h.b16 %v697
    %v1375 = vunpack.c.l.b16 %v698
    %v1376 = vunpack.c.h.b16 %v698
    %v1377 = vunpack.c.l.b16 %v699
    %v1378 = vunpack.c.h.b16 %v699
    %v1379 = vunpack.c.l.b16 %v700
    %v1380 = vunpack.c.h.b16 %v700
    %v1381 = vunpack.c.l.b16 %v701
    %v1382 = vunpack.c.h.b16 %v701
    %v1383 = vunpack.c.l.b16 %v702
    %v1384 = vunpack.c.h.b16 %v702
    %v1385 = vunpack.c.l.b16 %v703
    %v1386 = vunpack.c.h.b16 %v703
    %v1387 = vunpack.c.l.b16 %v704
    %v1388 = vunpack.c.h.b16 %v704
    %v1389 = vunpack.c.l.b16 %v705
    %v1390 = vunpack.c.h.b16 %v705
    %v1391 = vunpack.c.l.b16 %v706
    %v1392 = vunpack.c.h.b16 %v706
    %v1393 = vunpack.c.l.b16 %v707
    %v1394 = vunpack.c.h.b16 %v707
    %v1395 = vunpack.c.l.b16 %v708
    %v1396 = vunpack.c.h.b16 %v708
    %v1397 = vunpack.c.l.b16 %v709
    %v1398 = vunpack.c.h.b16 %v709
    %v1399 = vunpack.c.l.b16 %v710
    %v1400 = vunpack.c.h.b16 %v710
    %v1401 = vunpack.c.l.b16 %v711
    %v1402 = vunpack.c.h.b16 %v711
    %v1403 = vunpack.c.l.b16 %v712
    %v1404 = vunpack.c.h.b16 %v712
    %v1405 = vunpack.c.l.b16 %v713
    %v1406 = vunpack.c.h.b16 %v713
    %v1407 = vunpack.c.l.b16 %v714
    %v1408 = vunpack.c.h.b16 %v714
    %v1409 = vunpack.c.l.b16 %v715
    %v1410 = vunpack.c.h.b16 %v715
    %v1411 = vunpack.c.l.b16 %v716
    %v1412 = vunpack.c.h.b16 %v716
    %v1413 = vunpack.c.l.b16 %v717
    %v1414 = vunpack.c.h.b16 %v717
    %v1415 = vunpack.c.l.b16 %v718
    %v1416 = vunpack.c.h.b16 %v718
    %v1417 = vunpack.c.l.b16 %v719
    %v1418 = vunpack.c.h.b16 %v719
    %v1419 = vunpack.c.l.b16 %v720
    %v1420 = vunpack.c.h.b16 %v720
    %v1421 = vunpack.c.l.b16 %v721
    %v1422 = vunpack.c.h.b16 %v721
    %v1423 = vunpack.c.l.b16 %v722
    %v1424 = vunpack.c.h.b16 %v722
    %v1425 = vunpack.c.l.b16 %v723
    %v1426 = vunpack.c.h.b16 %v723
    %v1427 = vunpack.c.l.b16 %v724
    %v1428 = vunpack.c.h.b16 %v724
    %v1429 = vunpack.c.l.b16 %v725
    %v1430 = vunpack.c.h.b16 %v725
    %v1431 = vunpack.c.l.b16 %v726
    %v1432 = vunpack.c.h.b16 %v726
    %v1433 = vunpack.c.l.b16 %v727
    %v1434 = vunpack.c.h.b16 %v727
    %v1435 = vunpack.c.l.b16 %v728
    %v1436 = vunpack.c.h.b16 %v728
    %v1437 = vunpack.c.l.b16 %v729
    %v1438 = vunpack.c.h.b16 %v729
    %v1439 = vunpack.c.l.b16 %v730
    %v1440 = vunpack.c.h.b16 %v730
    %v1441 = vunpack.c.l.b16 %v731
    %v1442 = vunpack.c.h.b16 %v731
    %v1443 = vunpack.c.l.b16 %v732
    %v1444 = vunpack.c.h.b16 %v732
    %v1445 = vunpack.c.l.b16 %v733
    %v1446 = vunpack.c.h.b16 %v733
    %v1447 = vunpack.c.l.b16 %v734
    %v1448 = vunpack.c.h.b16 %v734
    %v1449 = vunpack.c.l.b16 %v735
    %v1450 = vunpack.c.h.b16 %v735
    %v1451 = vunpack.c.l.b16 %v736
    %v1452 = vunpack.c.h.b16 %v736
    %v1453 = vunpack.c.l.b16 %v737
    %v1454 = vunpack.c.h.b16 %v737
    %v1455 = vunpack.c.l.b16 %v738
    %v1456 = vunpack.c.h.b16 %v738
    %v1457 = vunpack.c.l.b16 %v739
    %v1458 = vunpack.c.h.b16 %v739
    %v1459 = vunpack.c.l.b16 %v740
    %v1460 = vunpack.c.h.b16 %v740
    %v1461 = vunpack.c.l.b16 %v741
    %v1462 = vunpack.c.h.b16 %v741
    %v1463 = vunpack.c.l.b16 %v742
    %v1464 = vunpack.c.h.b16 %v742
    %v1465 = vunpack.c.l.b16 %v743
    %v1466 = vunpack.c.h.b16 %v743
    %v1467 = vunpack.c.l.b16 %v744
    %v1468 = vunpack.c.h.b16 %v744
    %v1469 = vunpack.c.l.b16 %v745
    %v1470 = vunpack.c.h.b16 %v745
    %v1471 = vunpack.c.l.b16 %v746
    %v1472 = vunpack.c.h.b16 %v746
    %v1473 = vunpack.c.l.b16 %v747
    %v1474 = vunpack.c.h.b16 %v747
    %v1475 = vunpack.c.l.b16 %v748
    %v1476 = vunpack.c.h.b16 %v748
    %v1477 = vunpack.c.l.b16 %v749
    %v1478 = vunpack.c.h.b16 %v749
    %v1479 = vunpack.c.l.b16 %v750
    %v1480 = vunpack.c.h.b16 %v750
    %v1481 = vunpack.c.l.b16 %v751
    %v1482 = vunpack.c.h.b16 %v751
    %v1483 = vunpack.c.l.b16 %v752
    %v1484 = vunpack.c.h.b16 %v752
    %v1485 = vunpack.c.l.b16 %v753
    %v1486 = vunpack.c.h.b16 %v753
    %v1487 = vunpack.c.l.b16 %v754
    %v1488 = vunpack.c.h.b16 %v754
    %v1489 = vunpack.c.l.b16 %v755
    %v1490 = vunpack.c.h.b16 %v755
    %v1491 = vunpack.c.l.b16 %v756
    %v1492 = vunpack.c.h.b16 %v756
    %v1493 = vunpack.c.l.b16 %v757
    %v1494 = vunpack.c.h.b16 %v757
    %v1495 = vunpack.c.l.b16 %v758
    %v1496 = vunpack.c.h.b16 %v758
    %v1497 = vunpack.c.l.b16 %v759
    %v1498 = vunpack.c.h.b16 %v759
    %v1499 = vunpack.c.l.b16 %v760
    %v1500 = vunpack.c.h.b16 %v760
    %v1501 = vunpack.c.l.b16 %v761
    %v1502 = vunpack.c.h.b16 %v761
    %v1503 = vunpack.c.l.b16 %v762
    %v1504 = vunpack.c.h.b16 %v762
    %v1505 = vunpack.c.l.b16 %v763
    %v1506 = vunpack.c.h.b16 %v763
    %v1507 = vunpack.c.l.b16 %v764
    %v1508 = vunpack.c.h.b16 %v764
    %v1509 = vunpack.c.l.b16 %v765
    %v1510 = vunpack.c.h.b16 %v765
    %v1511 = vunpack.c.l.b16 %v766
    %v1512 = vunpack.c.h.b16 %v766
    %v1513 = vunpack.c.l.b16 %v767
    %v1514 = vunpack.c.h.b16 %v767
    %v1515 = vunpack.c.l.b16 %v768
    %v1516 = vunpack.c.h.b16 %v768
    %v1517 = vunpack.c.l.b16 %v769
    %v1518 = vunpack.c.h.b16 %v769
    %v1519 = vunpack.c.l.b16 %v770
    %v1520 = vunpack.c.h.b16 %v770
    %v1521 = vunpack.c.l.b16 %v771
    %v1522 = vunpack.c.h.b16 %v771
    %v1523 = vunpack.c.l.b16 %v772
    %v1524 = vunpack.c.h.b16 %v772
    %v1525 = vunpack.c.l.b16 %v773
    %v1526 = vunpack.c.h.b16 %v773
    %v1527 = vunpack.c.l.b16 %v774
    %v1528 = vunpack.c.h.b16 %v774
    %v1529 = vunpack.c.l.b16 %v775
    %v1530 = vunpack.c.h.b16 %v775
    %v1531 = vunpack.c.l.b16 %v776
    %v1532 = vunpack.c.h.b16 %v776
    %v1533 = vunpack.c.l.b16 %v777
    %v1534 = vunpack.c.h.b16 %v777
    %v1535 = vunpack.c.l.b16 %v778
    %v1536 = vunpack.c.h.b16 %v778
    %v1537 = vunpack.c.l.b16 %v779
    %v1538 = vunpack.c.h.b16 %v779
    %v1539 = vunpack.c.l.b16 %v780
    %v1540 = vunpack.c.h.b16 %v780
    %v1541 = vunpack.c.l.b16 %v781
    %v1542 = vunpack.c.h.b16 %v781
    %v1543 = vunpack.c.l.b16 %v782
    %v1544 = vunpack.c.h.b16 %v782
    %v1545 = vunpack.c.l.b16 %v783
    %v1546 = vunpack.c.h.b16 %v783
    %v1547 = vunpack.c.l.b16 %v784
    %v1548 = vunpack.c.h.b16 %v784
    %v1549 = vunpack.c.l.b16 %v785
    %v1550 = vunpack.c.h.b16 %v785
    %v1551 = vunpack.c.l.b16 %v786
    %v1552 = vunpack.c.h.b16 %v786
    %v1553 = vunpack.c.l.b16 %v787
    %v1554 = vunpack.c.h.b16 %v787
    %v1555 = vunpack.c.l.b16 %v788
    %v1556 = vunpack.c.h.b16 %v788
    %v1557 = vunpack.c.l.b16 %v789
    %v1558 = vunpack.c.h.b16 %v789
    %v1559 = vunpack.c.l.b16 %v790
    %v1560 = vunpack.c.h.b16 %v790
    %v1561 = vunpack.c.l.b16 %v791
    %v1562 = vunpack.c.h.b16 %v791
    %v1563 = vunpack.c.l.b16 %v792
    %v1564 = vunpack.c.h.b16 %v792
    %v1565 = vunpack.c.l.b16 %v793
    %v1566 = vunpack.c.h.b16 %v793
    %v1567 = vunpack.c.l.b16 %v794
    %v1568 = vunpack.c.h.b16 %v794
    %v1569 = vunpack.c.l.b16 %v795
    %v1570 = vunpack.c.h.b16 %v795
    %v1571 = vunpack.c.l.b16 %v796
    %v1572 = vunpack.c.h.b16 %v796
    %v1573 = vunpack.c.l.b16 %v797
    %v1574 = vunpack.c.h.b16 %v797
    %v1575 = vunpack.c.l.b16 %v798
    %v1576 = vunpack.c.h.b16 %v798
    %v1577 = vunpack.c.l.b16 %v799
    %v1578 = vunpack.c.h.b16 %v799
    %v1579 = vunpack.c.l.b16 %v800
    %v1580 = vunpack.c.h.b16 %v800
    %v1581 = vpack.c.b16 %v1071, %v1069
    %v1582 = vpack.c.b16 %v1072, %v1070
    %v1583 = vpack.c.b16 %v1075, %v1073
    %v1584 = vpack.c.b16 %v1076, %v1074
    %v1585 = vpack.c.b16 %v1079, %v1077
    %v1586 = vpack.c.b16 %v1080, %v1078
    %v1587 = vpack.c.b16 %v1083, %v1081
    %v1588 = vpack.c.b16 %v1084, %v1082
    %v1589 = vpack.c.b16 %v1087, %v1085
    %v1590 = vpack.c.b16 %v1088, %v1086
    %v1591 = vpack.c.b16 %v1091, %v1089
    %v1592 = vpack.c.b16 %v1092, %v1090
    %v1593 = vpack.c.b16 %v1095, %v1093
    %v1594 = vpack.c.b16 %v1096, %v1094
    %v1595 = vpack.c.b16 %v1099, %v1097
    %v1596 = vpack.c.b16 %v1100, %v1098
    %v1597 = vpack.c.b16 %v1103, %v1101
    %v1598 = vpack.c.b16 %v1104, %v1102
    %v1599 = vpack.c.b16 %v1107, %v1105
    %v1600 = vpack.c.b16 %v1108, %v1106
    %v1601 = vpack.c.b16 %v1111, %v1109
    %v1602 = vpack.c.b16 %v1112, %v1110
    %v1603 = vpack.c.b16 %v1115, %v1113
    %v1604 = vpack.c.b16 %v1116, %v1114
    %v1605 = vpack.c.b16 %v1119, %v1117
    %v1606 = vpack.c.b16 %v1120, %v1118
    %v1607 = vpack.c.b16 %v1123, %v1121
    %v1608 = vpack.c.b16 %v1124, %v1122
    %v1609 = vpack.c.b16 %v1127, %v1125
    %v1610 = vpack.c.b16 %v1128, %v1126
    %v1611 = vpack.c.b16 %v1131, %v1129
    %v1612 = vpack.c.b16 %v1132, %v1130
    %v1613 = vpack.c.b16 %v1135, %v1133
    %v1614 = vpack.c.b16 %v1136, %v1134
    %v1615 = vpack.c.b16 %v1139, %v1137
    %v1616 = vpack.c.b16 %v1140, %v1138
    %v1617 = vpack.c.b16 %v1143, %v1141
    %v1618 = vpack.c.b16 %v1144, %v1142
    %v1619 = vpack.c.b16 %v1147, %v1145
    %v1620 = vpack.c.b16 %v1148, %v1146
    %v1621 = vpack.c.b16 %v1151, %v1149
    %v1622 = vpack.c.b16 %v1152, %v1150
    %v1623 = vpack.c.b16 %v1155, %v1153
    %v1624 = vpack.c.b16 %v1156, %v1154
    %v1625 = vpack.c.b16 %v1159, %v1157
    %v1626 = vpack.c.b16 %v1160, %v1158
    %v1627 = vpack.c.b16 %v1163, %v1161
    %v1628 = vpack.c.b16 %v1164, %v1162
    %v1629 = vpack.c.b16 %v1167, %v1165
    %v1630 = vpack.c.b16 %v1168, %v1166
    %v1631 = vpack.c.b16 %v1171, %v1169
    %v1632 = vpack.c.b16 %v1172, %v1170
    %v1633 = vpack.c.b16 %v1175, %v1173
    %v1634 = vpack.c.b16 %v1176, %v1174
    %v1635 = vpack.c.b16 %v1179, %v1177
    %v1636 = vpack.c.b16 %v1180, %v1178
    %v1637 = vpack.c.b16 %v1183, %v1181
    %v1638 = vpack.c.b16 %v1184, %v1182
    %v1639 = vpack.c.b16 %v1187, %v1185
    %v1640 = vpack.c.b16 %v1188, %v1186
    %v1641 = vpack.c.b16 %v1191, %v1189
    %v1642 = vpack.c.b16 %v1192, %v1190
    %v1643 = vpack.c.b16 %v1195, %v1193
    %v1644 = vpack.c.b16 %v1196, %v1194
    %v1645 = vpack.c.b16 %v1199, %v1197
    %v1646 = vpack.c.b16 %v1200, %v1198
    %v1647 = vpack.c.b16 %v1203, %v1201
    %v1648 = vpack.c.b16 %v1204, %v1202
    %v1649 = vpack.c.b16 %v1207, %v1205
    %v1650 = vpack.c.b16 %v1208, %v1206
    %v1651 = vpack.c.b16 %v1211, %v1209
    %v1652 = vpack.c.b16 %v1212, %v1210
    %v1653 = vpack.c.b16 %v1215, %v1213
    %v1654 = vpack.c.b16 %v1216, %v1214
    %v1655 = vpack.c.b16 %v1219, %v1217
    %v1656 = vpack.c.b16 %v1220, %v1218
    %v1657 = vpack.c.b16 %v1223, %v1221
    %v1658 = vpack.c.b16 %v1224, %v1222
    %v1659 = vpack.c.b16 %v1227, %v1225
    %v1660 = vpack.c.b16 %v1228, %v1226
    %v1661 = vpack.c.b16 %v1231, %v1229
    %v1662 = vpack.c.b16 %v1232, %v1230
    %v1663 = vpack.c.b16 %v1235, %v1233
    %v1664 = vpack.c.b16 %v1236, %v1234
    %v1665 = vpack.c.b16 %v1239, %v1237
    %v1666 = vpack.c.b16 %v1240, %v1238
    %v1667 = vpack.c.b16 %v1243, %v1241
    %v1668 = vpack.c.b16 %v1244, %v1242
    %v1669 = vpack.c.b16 %v1247, %v1245
    %v1670 = vpack.c.b16 %v1248, %v1246
    %v1671 = vpack.c.b16 %v1251, %v1249
    %v1672 = vpack.c.b16 %v1252, %v1250
    %v1673 = vpack.c.b16 %v1255, %v1253
    %v1674 = vpack.c.b16 %v1256, %v1254
    %v1675 = vpack.c.b16 %v1259, %v1257
    %v1676 = vpack.c.b16 %v1260, %v1258
    %v1677 = vpack.c.b16 %v1263, %v1261
    %v1678 = vpack.c.b16 %v1264, %v1262
    %v1679 = vpack.c.b16 %v1267, %v1265
    %v1680 = vpack.c.b16 %v1268, %v1266
    %v1681 = vpack.c.b16 %v1271, %v1269
    %v1682 = vpack.c.b16 %v1272, %v1270
    %v1683 = vpack.c.b16 %v1275, %v1273
    %v1684 = vpack.c.b16 %v1276, %v1274
    %v1685 = vpack.c.b16 %v1279, %v1277
    %v1686 = vpack.c.b16 %v1280, %v1278
    %v1687 = vpack.c.b16 %v1283, %v1281
    %v1688 = vpack.c.b16 %v1284, %v1282
    %v1689 = vpack.c.b16 %v1287, %v1285
    %v1690 = vpack.c.b16 %v1288, %v1286
    %v1691 = vpack.c.b16 %v1291, %v1289
    %v1692 = vpack.c.b16 %v1292, %v1290
    %v1693 = vpack.c.b16 %v1295, %v1293
    %v1694 = vpack.c.b16 %v1296, %v1294
    %v1695 = vpack.c.b16 %v1299, %v1297
    %v1696 = vpack.c.b16 %v1300, %v1298
    %v1697 = vpack.c.b16 %v1303, %v1301
    %v1698 = vpack.c.b16 %v1304, %v1302
    %v1699 = vpack.c.b16 %v1307, %v1305
    %v1700 = vpack.c.b16 %v1308, %v1306
    %v1701 = vpack.c.b16 %v1311, %v1309
    %v1702 = vpack.c.b16 %v1312, %v1310
    %v1703 = vpack.c.b16 %v1315, %v1313
    %v1704 = vpack.c.b16 %v1316, %v1314
    %v1705 = vpack.c.b16 %v1319, %v1317
    %v1706 = vpack.c.b16 %v1320, %v1318
    %v1707 = vpack.c.b16 %v1323, %v1321
    %v1708 = vpack.c.b16 %v1324, %v1322
    %v1709 = vpack.c.b16 %v1327, %v1325
    %v1710 = vpack.c.b16 %v1328, %v1326
    %v1711 = vpack.c.b16 %v1331, %v1329
    %v1712 = vpack.c.b16 %v1332, %v1330
    %v1713 = vpack.c.b16 %v1335, %v1333
    %v1714 = vpack.c.b16 %v1336, %v1334
    %v1715 = vpack.c.b16 %v1339, %v1337
    %v1716 = vpack.c.b16 %v1340, %v1338
    %v1717 = vpack.c.b16 %v1343, %v1341
    %v1718 = vpack.c.b16 %v1344, %v1342
    %v1719 = vpack.c.b16 %v1347, %v1345
    %v1720 = vpack.c.b16 %v1348, %v1346
    %v1721 = vpack.c.b16 %v1351, %v1349
    %v1722 = vpack.c.b16 %v1352, %v1350
    %v1723 = vpack.c.b16 %v1355, %v1353
    %v1724 = vpack.c.b16 %v1356, %v1354
    %v1725 = vpack.c.b16 %v1359, %v1357
    %v1726 = vpack.c.b16 %v1360, %v1358
    %v1727 = vpack.c.b16 %v1363, %v1361
    %v1728 = vpack.c.b16 %v1364, %v1362
    %v1729 = vpack.c.b16 %v1367, %v1365
    %v1730 = vpack.c.b16 %v1368, %v1366
    %v1731 = vpack.c.b16 %v1371, %v1369
    %v1732 = vpack.c.b16 %v1372, %v1370
    %v1733 = vpack.c.b16 %v1375, %v1373
    %v1734 = vpack.c.b16 %v1376, %v1374
    %v1735 = vpack.c.b16 %v1379, %v1377
    %v1736 = vpack.c.b16 %v1380, %v1378
    %v1737 = vpack.c.b16 %v1383, %v1381
    %v1738 = vpack.c.b16 %v1384, %v1382
    %v1739 = vpack.c.b16 %v1387, %v1385
    %v1740 = vpack.c.b16 %v1388, %v1386
    %v1741 = vpack.c.b16 %v1391, %v1389
    %v1742 = vpack.c.b16 %v1392, %v1390
    %v1743 = vpack.c.b16 %v1395, %v1393
    %v1744 = vpack.c.b16 %v1396, %v1394
    %v1745 = vpack.c.b16 %v1399, %v1397
    %v1746 = vpack.c.b16 %v1400, %v1398
    %v1747 = vpack.c.b16 %v1403, %v1401
    %v1748 = vpack.c.b16 %v1404, %v1402
    %v1749 = vpack.c.b16 %v1407, %v1405
    %v1750 = vpack.c.b16 %v1408, %v1406
    %v1751 = vpack.c.b16 %v1411, %v1409
    %v1752 = vpack.c.b16 %v1412, %v1410
    %v1753 = vpack.c.b16 %v1415, %v1413
    %v1754 = vpack.c.b16 %v1416, %v1414
    %v1755 = vpack.c.b16 %v1419, %v1417
    %v1756 = vpack.c.b16 %v1420, %v1418
    %v1757 = vpack.c.b16 %v1423, %v1421
    %v1758 = vpack.c.b16 %v1424, %v1422
    %v1759 = vpack.c.b16 %v1427, %v1425
    %v1760 = vpack.c.b16 %v1428, %v1426
    %v1761 = vpack.c.b16 %v1431, %v1429
    %v1762 = vpack.c.b16 %v1432, %v1430
    %v1763 = vpack.c.b16 %v1435, %v1433
    %v1764 = vpack.c.b16 %v1436, %v1434
    %v1765 = vpack.c.b16 %v1439, %v1437
    %v1766 = vpack.c.b16 %v1440, %v1438
    %v1767 = vpack.c.b16 %v1443, %v1441
    %v1768 = vpack.c.b16 %v1444, %v1442
    %v1769 = vpack.c.b16 %v1447, %v1445
    %v1770 = vpack.c.b16 %v1448, %v1446
    %v1771 = vpack.c.b16 %v1451, %v1449
    %v1772 = vpack.c.b16 %v1452, %v1450
    %v1773 = vpack.c.b16 %v1455, %v1453
    %v1774 = vpack.c.b16 %v1456, %v1454
    %v1775 = vpack.c.b16 %v1459, %v1457
    %v1776 = vpack.c.b16 %v1460, %v1458
    %v1777 = vpack.c.b16 %v1463, %v1461
    %v1778 = vpack.c.b16 %v1464, %v1462
    %v1779 = vpack.c.b16 %v1467, %v1465
    %v1780 = vpack.c.b16 %v1468, %v1466
    %v1781 = vpack.c.b16 %v1471, %v1469
    %v1782 = vpack.c.b16 %v1472, %v1470
    %v1783 = vpack.c.b16 %v1475, %v1473
    %v1784 = vpack.c.b16 %v1476, %v1474
    %v1785 = vpack.c.b16 %v1479, %v1477
    %v1786 = vpack.c.b16 %v1480, %v1478
    %v1787 = vpack.c.b16 %v1483, %v1481
    %v1788 = vpack.c.b16 %v1484, %v1482
    %v1789 = vpack.c.b16 %v1487, %v1485
    %v1790 = vpack.c.b16 %v1488, %v1486
    %v1791 = vpack.c.b16 %v1491, %v1489
    %v1792 = vpack.c.b16 %v1492, %v1490
    %v1793 = vpack.c.b16 %v1495, %v1493
    %v1794 = vpack.c.b16 %v1496, %v1494
    %v1795 = vpack.c.b16 %v1499, %v1497
    %v1796 = vpack.c.b16 %v1500, %v1498
    %v1797 = vpack.c.b16 %v1503, %v1501
    %v1798 = vpack.c.b16 %v1504, %v1502
    %v1799 = vpack.c.b16 %v1507, %v1505
    %v1800 = vpack.c.b16 %v1508, %v1506
    %v1801 = vpack.c.b16 %v1511, %v1509
    %v1802 = vpack.c.b16 %v1512, %v1510
    %v1803 = vpack.c.b16 %v1515, %v1513
    %v1804 = vpack.c.b16 %v1516, %v1514
    %v1805 = vpack.c.b16 %v1519, %v1517
    %v1806 = vpack.c.b16 %v1520, %v1518
    %v1807 = vpack.c.b16 %v1523, %v1521
    %v1808 = vpack.c.b16 %v1524, %v1522
    %v1809 = vpack.c.b16 %v1527, %v1525
    %v1810 = vpack.c.b16 %v1528, %v1526
    %v1811 = vpack.c.b16 %v1531, %v1529
    %v1812 = vpack.c.b16 %v1532, %v1530
    %v1813 = vpack.c.b16 %v1535, %v1533
    %v1814 = vpack.c.b16 %v1536, %v1534
    %v1815 = vpack.c.b16 %v1539, %v1537
    %v1816 = vpack.c.b16 %v1540, %v1538
    %v1817 = vpack.c.b16 %v1543, %v1541
    %v1818 = vpack.c.b16 %v1544, %v1542
    %v1819 = vpack.c.b16 %v1547, %v1545
    %v1820 = vpack.c.b16 %v1548, %v1546
    %v1821 = vpack.c.b16 %v1551, %v1549
    %v1822 = vpack.c.b16 %v1552, %v1550
    %v1823 = vpack.c.b16 %v1555, %v1553
    %v1824 = vpack.c.b16 %v1556, %v1554
    %v1825 = vpack.c.b16 %v1559, %v1557
    %v1826 = vpack.c.b16 %v1560, %v1558
    %v1827 = vpack.c.b16 %v1563, %v1561
    %v1828 = vpack.c.b16 %v1564, %v1562
    %v1829 = vpack.c.b16 %v1567, %v1565
    %v1830 = vpack.c.b16 %v1568, %v1566
    %v1831 = vpack.c.b16 %v1571, %v1569
    %v1832 = vpack.c.b16 %v1572, %v1570
    %v1833 = vpack.c.b16 %v1575, %v1573
    %v1834 = vpack.c.b16 %v1576, %v1574
    %v1835 = vpack.c.b16 %v1579, %v1577
    %v1836 = vpack.c.b16 %v1580, %v1578
    %2093 = vmatprep.subr.bf16.mxu0 %v1596
    %2094 = vmatpush1.bf16.msra.mxu0 %v1595
    %2095 = vmatprep.subr.bf16.mxu0 %v1594
    %2096 = vmatpush1.bf16.msra.mxu0 %v1593
    %2097 = vmatprep.subr.bf16.mxu0 %v1592
    %2098 = vmatpush1.bf16.msra.mxu0 %v1591
    %2099 = vmatprep.subr.bf16.mxu0 %v1590
    %2100 = vmatpush1.bf16.msra.mxu0 %v1589
    %2101 = vmatprep.subr.bf16.mxu0 %v1588
    %2102 = vmatpush1.bf16.msra.mxu0 %v1587
    %2103 = vmatprep.subr.bf16.mxu0 %v1586
    %2104 = vmatpush1.bf16.msra.mxu0 %v1585
    %2105 = vmatprep.subr.bf16.mxu0 %v1584
    %2106 = vmatpush1.bf16.msra.mxu0 %v1583
    %2107 = vmatprep.subr.bf16.mxu0 %v1582
    %2108 = vmatpush1.bf16.msra.mxu0 %v1581
    %2109 = vmatprep.subr.bf16.mxu0 %v1612
    %2110 = vmatpush2.bf16.msra.mxu0 %v1611
    %2111 = vmatprep.subr.bf16.mxu0 %v1610
    %2112 = vmatpush2.bf16.msra.mxu0 %v1609
    %2113 = vmatprep.subr.bf16.mxu0 %v1608
    %2114 = vmatpush2.bf16.msra.mxu0 %v1607
    %2115 = vmatprep.subr.bf16.mxu0 %v1606
    %2116 = vmatpush2.bf16.msra.mxu0 %v1605
    %2117 = vmatprep.subr.bf16.mxu0 %v1604
    %2118 = vmatpush2.bf16.msra.mxu0 %v1603
    %2119 = vmatprep.subr.bf16.mxu0 %v1602
    %2120 = vmatpush2.bf16.msra.mxu0 %v1601
    %2121 = vmatprep.subr.bf16.mxu0 %v1600
    %2122 = vmatpush2.bf16.msra.mxu0 %v1599
    %2123 = vmatprep.subr.bf16.mxu0 %v1598
    %2124 = vmatpush2.bf16.msra.mxu0 %v1597
    %2125 = vmatprep.mubr.bf16.mxu0 %v530
    %2126 = vmatmul.mubr.bf16.gmra.mxu0 %v529
    %v2127 = vpop.f32.mrf.mxu0
    %v2128 = vadd.f32 %v806, %v2127
    %v2129 = vpop.f32.mrf.mxu0
    %v2130 = vadd.f32 %v810, %v2129
    %v2131 = vpop.f32.mrf.mxu0
    %v2132 = vpop.f32.mrf.mxu0
    %2133 = vdwg.mxu0
    %2134 = vmatprep.subr.bf16.mxu0 %v1628
    %2135 = vmatpush1.bf16.msra.mxu0 %v1627
    %2136 = vmatprep.subr.bf16.mxu0 %v1626
    %2137 = vmatpush1.bf16.msra.mxu0 %v1625
    %2138 = vmatprep.subr.bf16.mxu0 %v1624
    %2139 = vmatpush1.bf16.msra.mxu0 %v1623
    %2140 = vmatprep.subr.bf16.mxu0 %v1622
    %2141 = vmatpush1.bf16.msra.mxu0 %v1621
    %2142 = vmatprep.subr.bf16.mxu0 %v1620
    %2143 = vmatpush1.bf16.msra.mxu0 %v1619
    %2144 = vmatprep.subr.bf16.mxu0 %v1618
    %2145 = vmatpush1.bf16.msra.mxu0 %v1617
    %2146 = vmatprep.subr.bf16.mxu0 %v1616
    %2147 = vmatpush1.bf16.msra.mxu0 %v1615
    %2148 = vmatprep.subr.bf16.mxu0 %v1614
    %2149 = vmatpush1.bf16.msra.mxu0 %v1613
    %2150 = vmatprep.subr.bf16.mxu0 %v1644
    %2151 = vmatpush2.bf16.msra.mxu0 %v1643
    %2152 = vmatprep.subr.bf16.mxu0 %v1642
    %2153 = vmatpush2.bf16.msra.mxu0 %v1641
    %2154 = vmatprep.subr.bf16.mxu0 %v1640
    %2155 = vmatpush2.bf16.msra.mxu0 %v1639
    %2156 = vmatprep.subr.bf16.mxu0 %v1638
    %2157 = vmatpush2.bf16.msra.mxu0 %v1637
    %2158 = vmatprep.subr.bf16.mxu0 %v1636
    %2159 = vmatpush2.bf16.msra.mxu0 %v1635
    %2160 = vmatprep.subr.bf16.mxu0 %v1634
    %2161 = vmatpush2.bf16.msra.mxu0 %v1633
    %2162 = vmatprep.subr.bf16.mxu0 %v1632
    %2163 = vmatpush2.bf16.msra.mxu0 %v1631
    %2164 = vmatprep.subr.bf16.mxu0 %v1630
    %2165 = vmatpush2.bf16.msra.mxu0 %v1629
    %2166 = vmatprep.mubr.bf16.mxu0 %v532
    %2167 = vmatmul.mubr.bf16.gmra.mxu0 %v531
    %v2168 = vpop.f32.mrf.mxu0
    %v2169 = vadd.f32 %v2128, %v2168
    %v2170 = vpop.f32.mrf.mxu0
    %v2171 = vadd.f32 %v2130, %v2170
    %v2172 = vpop.f32.mrf.mxu0
    %v2173 = vpop.f32.mrf.mxu0
    %2174 = vdwg.mxu0
    %2175 = vmatprep.subr.bf16.mxu0 %v1660
    %2176 = vmatpush1.bf16.msra.mxu0 %v1659
    %2177 = vmatprep.subr.bf16.mxu0 %v1658
    %2178 = vmatpush1.bf16.msra.mxu0 %v1657
    %2179 = vmatprep.subr.bf16.mxu0 %v1656
    %2180 = vmatpush1.bf16.msra.mxu0 %v1655
    %2181 = vmatprep.subr.bf16.mxu0 %v1654
    %2182 = vmatpush1.bf16.msra.mxu0 %v1653
    %2183 = vmatprep.subr.bf16.mxu0 %v1652
    %2184 = vmatpush1.bf16.msra.mxu0 %v1651
    %2185 = vmatprep.subr.bf16.mxu0 %v1650
    %2186 = vmatpush1.bf16.msra.mxu0 %v1649
    %2187 = vmatprep.subr.bf16.mxu0 %v1648
    %2188 = vmatpush1.bf16.msra.mxu0 %v1647
    %2189 = vmatprep.subr.bf16.mxu0 %v1646
    %2190 = vmatpush1.bf16.msra.mxu0 %v1645
    %2191 = vmatprep.subr.bf16.mxu0 %v1676
    %2192 = vmatpush2.bf16.msra.mxu0 %v1675
    %2193 = vmatprep.subr.bf16.mxu0 %v1674
    %2194 = vmatpush2.bf16.msra.mxu0 %v1673
    %2195 = vmatprep.subr.bf16.mxu0 %v1672
    %2196 = vmatpush2.bf16.msra.mxu0 %v1671
    %2197 = vmatprep.subr.bf16.mxu0 %v1670
    %2198 = vmatpush2.bf16.msra.mxu0 %v1669
    %2199 = vmatprep.subr.bf16.mxu0 %v1668
    %2200 = vmatpush2.bf16.msra.mxu0 %v1667
    %2201 = vmatprep.subr.bf16.mxu0 %v1666
    %2202 = vmatpush2.bf16.msra.mxu0 %v1665
    %2203 = vmatprep.subr.bf16.mxu0 %v1664
    %2204 = vmatpush2.bf16.msra.mxu0 %v1663
    %2205 = vmatprep.subr.bf16.mxu0 %v1662
    %2206 = vmatpush2.bf16.msra.mxu0 %v1661
    %2207 = vmatprep.mubr.bf16.mxu0 %v534
    %2208 = vmatmul.mubr.bf16.gmra.mxu0 %v533
    %v2209 = vpop.f32.mrf.mxu0
    %v2210 = vadd.f32 %v2169, %v2209
    %v2211 = vpop.f32.mrf.mxu0
    %v2212 = vadd.f32 %v2171, %v2211
    %v2213 = vpop.f32.mrf.mxu0
    %v2214 = vpop.f32.mrf.mxu0
    %2215 = vdwg.mxu0
    %2216 = vmatprep.subr.bf16.mxu0 %v1692
    %2217 = vmatpush1.bf16.msra.mxu0 %v1691
    %2218 = vmatprep.subr.bf16.mxu0 %v1690
    %2219 = vmatpush1.bf16.msra.mxu0 %v1689
    %2220 = vmatprep.subr.bf16.mxu0 %v1688
    %2221 = vmatpush1.bf16.msra.mxu0 %v1687
    %2222 = vmatprep.subr.bf16.mxu0 %v1686
    %2223 = vmatpush1.bf16.msra.mxu0 %v1685
    %2224 = vmatprep.subr.bf16.mxu0 %v1684
    %2225 = vmatpush1.bf16.msra.mxu0 %v1683
    %2226 = vmatprep.subr.bf16.mxu0 %v1682
    %2227 = vmatpush1.bf16.msra.mxu0 %v1681
    %2228 = vmatprep.subr.bf16.mxu0 %v1680
    %2229 = vmatpush1.bf16.msra.mxu0 %v1679
    %2230 = vmatprep.subr.bf16.mxu0 %v1678
    %2231 = vmatpush1.bf16.msra.mxu0 %v1677
    %2232 = vmatprep.subr.bf16.mxu0 %v1708
    %2233 = vmatpush2.bf16.msra.mxu0 %v1707
    %2234 = vmatprep.subr.bf16.mxu0 %v1706
    %2235 = vmatpush2.bf16.msra.mxu0 %v1705
    %2236 = vmatprep.subr.bf16.mxu0 %v1704
    %2237 = vmatpush2.bf16.msra.mxu0 %v1703
    %2238 = vmatprep.subr.bf16.mxu0 %v1702
    %2239 = vmatpush2.bf16.msra.mxu0 %v1701
    %2240 = vmatprep.subr.bf16.mxu0 %v1700
    %2241 = vmatpush2.bf16.msra.mxu0 %v1699
    %2242 = vmatprep.subr.bf16.mxu0 %v1698
    %2243 = vmatpush2.bf16.msra.mxu0 %v1697
    %2244 = vmatprep.subr.bf16.mxu0 %v1696
    %2245 = vmatpush2.bf16.msra.mxu0 %v1695
    %2246 = vmatprep.subr.bf16.mxu0 %v1694
    %2247 = vmatpush2.bf16.msra.mxu0 %v1693
    %2248 = vmatprep.mubr.bf16.mxu0 %v536
    %2249 = vmatmul.mubr.bf16.gmra.mxu0 %v535
    %v2250 = vpop.f32.mrf.mxu0
    %v2251 = vadd.f32 %v2210, %v2250
    %v2252 = vpop.f32.mrf.mxu0
    %v2253 = vadd.f32 %v2212, %v2252
    %v2254 = vpop.f32.mrf.mxu0
    %v2255 = vpop.f32.mrf.mxu0
    %2256 = vdwg.mxu0
    %2257 = vmatprep.subr.bf16.mxu0 %v1724
    %2258 = vmatpush1.bf16.msra.mxu0 %v1723
    %2259 = vmatprep.subr.bf16.mxu0 %v1722
    %2260 = vmatpush1.bf16.msra.mxu0 %v1721
    %2261 = vmatprep.subr.bf16.mxu0 %v1720
    %2262 = vmatpush1.bf16.msra.mxu0 %v1719
    %2263 = vmatprep.subr.bf16.mxu0 %v1718
    %2264 = vmatpush1.bf16.msra.mxu0 %v1717
    %2265 = vmatprep.subr.bf16.mxu0 %v1716
    %2266 = vmatpush1.bf16.msra.mxu0 %v1715
    %2267 = vmatprep.subr.bf16.mxu0 %v1714
    %2268 = vmatpush1.bf16.msra.mxu0 %v1713
    %2269 = vmatprep.subr.bf16.mxu0 %v1712
    %2270 = vmatpush1.bf16.msra.mxu0 %v1711
    %2271 = vmatprep.subr.bf16.mxu0 %v1710
    %2272 = vmatpush1.bf16.msra.mxu0 %v1709
    %2273 = vmatprep.subr.bf16.mxu0 %v1740
    %2274 = vmatpush2.bf16.msra.mxu0 %v1739
    %2275 = vmatprep.subr.bf16.mxu0 %v1738
    %2276 = vmatpush2.bf16.msra.mxu0 %v1737
    %2277 = vmatprep.subr.bf16.mxu0 %v1736
    %2278 = vmatpush2.bf16.msra.mxu0 %v1735
    %2279 = vmatprep.subr.bf16.mxu0 %v1734
    %2280 = vmatpush2.bf16.msra.mxu0 %v1733
    %2281 = vmatprep.subr.bf16.mxu0 %v1732
    %2282 = vmatpush2.bf16.msra.mxu0 %v1731
    %2283 = vmatprep.subr.bf16.mxu0 %v1730
    %2284 = vmatpush2.bf16.msra.mxu0 %v1729
    %2285 = vmatprep.subr.bf16.mxu0 %v1728
    %2286 = vmatpush2.bf16.msra.mxu0 %v1727
    %2287 = vmatprep.subr.bf16.mxu0 %v1726
    %2288 = vmatpush2.bf16.msra.mxu0 %v1725
    %2289 = vmatprep.mubr.bf16.mxu0 %v538
    %2290 = vmatmul.mubr.bf16.gmra.mxu0 %v537
    %v2291 = vpop.f32.mrf.mxu0
    %v2292 = vadd.f32 %v2251, %v2291
    %v2293 = vpop.f32.mrf.mxu0
    %v2294 = vadd.f32 %v2253, %v2293
    %v2295 = vpop.f32.mrf.mxu0
    %v2296 = vpop.f32.mrf.mxu0
    %2297 = vdwg.mxu0
    %2298 = vmatprep.subr.bf16.mxu0 %v1756
    %2299 = vmatpush1.bf16.msra.mxu0 %v1755
    %2300 = vmatprep.subr.bf16.mxu0 %v1754
    %2301 = vmatpush1.bf16.msra.mxu0 %v1753
    %2302 = vmatprep.subr.bf16.mxu0 %v1752
    %2303 = vmatpush1.bf16.msra.mxu0 %v1751
    %2304 = vmatprep.subr.bf16.mxu0 %v1750
    %2305 = vmatpush1.bf16.msra.mxu0 %v1749
    %2306 = vmatprep.subr.bf16.mxu0 %v1748
    %2307 = vmatpush1.bf16.msra.mxu0 %v1747
    %2308 = vmatprep.subr.bf16.mxu0 %v1746
    %2309 = vmatpush1.bf16.msra.mxu0 %v1745
    %2310 = vmatprep.subr.bf16.mxu0 %v1744
    %2311 = vmatpush1.bf16.msra.mxu0 %v1743
    %2312 = vmatprep.subr.bf16.mxu0 %v1742
    %2313 = vmatpush1.bf16.msra.mxu0 %v1741
    %2314 = vmatprep.subr.bf16.mxu0 %v1772
    %2315 = vmatpush2.bf16.msra.mxu0 %v1771
    %2316 = vmatprep.subr.bf16.mxu0 %v1770
    %2317 = vmatpush2.bf16.msra.mxu0 %v1769
    %2318 = vmatprep.subr.bf16.mxu0 %v1768
    %2319 = vmatpush2.bf16.msra.mxu0 %v1767
    %2320 = vmatprep.subr.bf16.mxu0 %v1766
    %2321 = vmatpush2.bf16.msra.mxu0 %v1765
    %2322 = vmatprep.subr.bf16.mxu0 %v1764
    %2323 = vmatpush2.bf16.msra.mxu0 %v1763
    %2324 = vmatprep.subr.bf16.mxu0 %v1762
    %2325 = vmatpush2.bf16.msra.mxu0 %v1761
    %2326 = vmatprep.subr.bf16.mxu0 %v1760
    %2327 = vmatpush2.bf16.msra.mxu0 %v1759
    %2328 = vmatprep.subr.bf16.mxu0 %v1758
    %2329 = vmatpush2.bf16.msra.mxu0 %v1757
    %2330 = vmatprep.mubr.bf16.mxu0 %v540
    %2331 = vmatmul.mubr.bf16.gmra.mxu0 %v539
    %v2332 = vpop.f32.mrf.mxu0
    %v2333 = vadd.f32 %v2292, %v2332
    %v2334 = vpop.f32.mrf.mxu0
    %v2335 = vadd.f32 %v2294, %v2334
    %v2336 = vpop.f32.mrf.mxu0
    %v2337 = vpop.f32.mrf.mxu0
    %2338 = vdwg.mxu0
    %2339 = vmatprep.subr.bf16.mxu0 %v1788
    %2340 = vmatpush1.bf16.msra.mxu0 %v1787
    %2341 = vmatprep.subr.bf16.mxu0 %v1786
    %2342 = vmatpush1.bf16.msra.mxu0 %v1785
    %2343 = vmatprep.subr.bf16.mxu0 %v1784
    %2344 = vmatpush1.bf16.msra.mxu0 %v1783
    %2345 = vmatprep.subr.bf16.mxu0 %v1782
    %2346 = vmatpush1.bf16.msra.mxu0 %v1781
    %2347 = vmatprep.subr.bf16.mxu0 %v1780
    %2348 = vmatpush1.bf16.msra.mxu0 %v1779
    %2349 = vmatprep.subr.bf16.mxu0 %v1778
    %2350 = vmatpush1.bf16.msra.mxu0 %v1777
    %2351 = vmatprep.subr.bf16.mxu0 %v1776
    %2352 = vmatpush1.bf16.msra.mxu0 %v1775
    %2353 = vmatprep.subr.bf16.mxu0 %v1774
    %2354 = vmatpush1.bf16.msra.mxu0 %v1773
    %2355 = vmatprep.subr.bf16.mxu0 %v1804
    %2356 = vmatpush2.bf16.msra.mxu0 %v1803
    %2357 = vmatprep.subr.bf16.mxu0 %v1802
    %2358 = vmatpush2.bf16.msra.mxu0 %v1801
    %2359 = vmatprep.subr.bf16.mxu0 %v1800
    %2360 = vmatpush2.bf16.msra.mxu0 %v1799
    %2361 = vmatprep.subr.bf16.mxu0 %v1798
    %2362 = vmatpush2.bf16.msra.mxu0 %v1797
    %2363 = vmatprep.subr.bf16.mxu0 %v1796
    %2364 = vmatpush2.bf16.msra.mxu0 %v1795
    %2365 = vmatprep.subr.bf16.mxu0 %v1794
    %2366 = vmatpush2.bf16.msra.mxu0 %v1793
    %2367 = vmatprep.subr.bf16.mxu0 %v1792
    %2368 = vmatpush2.bf16.msra.mxu0 %v1791
    %2369 = vmatprep.subr.bf16.mxu0 %v1790
    %2370 = vmatpush2.bf16.msra.mxu0 %v1789
    %2371 = vmatprep.mubr.bf16.mxu0 %v542
    %2372 = vmatmul.mubr.bf16.gmra.mxu0 %v541
    %v2373 = vpop.f32.mrf.mxu0
    %v2374 = vadd.f32 %v2333, %v2373
    %v2375 = vpop.f32.mrf.mxu0
    %v2376 = vadd.f32 %v2335, %v2375
    %v2377 = vpop.f32.mrf.mxu0
    %v2378 = vpop.f32.mrf.mxu0
    %2379 = vdwg.mxu0
    %2380 = vmatprep.subr.bf16.mxu0 %v1820
    %2381 = vmatpush1.bf16.msra.mxu0 %v1819
    %2382 = vmatprep.subr.bf16.mxu0 %v1818
    %2383 = vmatpush1.bf16.msra.mxu0 %v1817
    %2384 = vmatprep.subr.bf16.mxu0 %v1816
    %2385 = vmatpush1.bf16.msra.mxu0 %v1815
    %2386 = vmatprep.subr.bf16.mxu0 %v1814
    %2387 = vmatpush1.bf16.msra.mxu0 %v1813
    %2388 = vmatprep.subr.bf16.mxu0 %v1812
    %2389 = vmatpush1.bf16.msra.mxu0 %v1811
    %2390 = vmatprep.subr.bf16.mxu0 %v1810
    %2391 = vmatpush1.bf16.msra.mxu0 %v1809
    %2392 = vmatprep.subr.bf16.mxu0 %v1808
    %2393 = vmatpush1.bf16.msra.mxu0 %v1807
    %2394 = vmatprep.subr.bf16.mxu0 %v1806
    %2395 = vmatpush1.bf16.msra.mxu0 %v1805
    %2396 = vmatprep.subr.bf16.mxu0 %v1836
    %2397 = vmatpush2.bf16.msra.mxu0 %v1835
    %2398 = vmatprep.subr.bf16.mxu0 %v1834
    %2399 = vmatpush2.bf16.msra.mxu0 %v1833
    %2400 = vmatprep.subr.bf16.mxu0 %v1832
    %2401 = vmatpush2.bf16.msra.mxu0 %v1831
    %2402 = vmatprep.subr.bf16.mxu0 %v1830
    %2403 = vmatpush2.bf16.msra.mxu0 %v1829
    %2404 = vmatprep.subr.bf16.mxu0 %v1828
    %2405 = vmatpush2.bf16.msra.mxu0 %v1827
    %2406 = vmatprep.subr.bf16.mxu0 %v1826
    %2407 = vmatpush2.bf16.msra.mxu0 %v1825
    %2408 = vmatprep.subr.bf16.mxu0 %v1824
    %2409 = vmatpush2.bf16.msra.mxu0 %v1823
    %2410 = vmatprep.subr.bf16.mxu0 %v1822
    %2411 = vmatpush2.bf16.msra.mxu0 %v1821
    %2412 = vmatprep.mubr.bf16.mxu0 %v544
    %2413 = vmatmul.mubr.bf16.gmra.mxu0 %v543
    %v2414 = vpop.f32.mrf.mxu0
    %v2415 = vadd.f32 %v2374, %v2414
    %v2416 = vpop.f32.mrf.mxu0
    %v2417 = vadd.f32 %v2376, %v2416
    %v2418 = vpop.f32.mrf.mxu0
    %v2419 = vpop.f32.mrf.mxu0
    %2420 = vdwg.mxu0
    %v2421 = vpack.c.bf16 %v2415, %v2415
    %v2422 = vpack.c.bf16 %v2417, %v2417
    %v2423 = vld [vmem:[#allocation6] sm:$0xff]
    %v2424 = vld [vmem:[#allocation6 + $0x8] sm:$0xff]
    %v2425 = vld [vmem:[#allocation6 + $0x10] sm:$0xff]
    %v2426 = vld [vmem:[#allocation6 + $0x18] sm:$0xff]
    %v2427 = vld [vmem:[#allocation6 + $0x20] sm:$0xff]
    %v2428 = vld [vmem:[#allocation6 + $0x28] sm:$0xff]
    %v2429 = vld [vmem:[#allocation6 + $0x30] sm:$0xff]
    %v2430 = vld [vmem:[#allocation6 + $0x38] sm:$0xff]
    %v2431 = vld [vmem:[#allocation6 + $0x40] sm:$0xff]
    %v2432 = vld [vmem:[#allocation6 + $0x48] sm:$0xff]
    %v2433 = vld [vmem:[#allocation6 + $0x50] sm:$0xff]
    %v2434 = vld [vmem:[#allocation6 + $0x58] sm:$0xff]
    %v2435 = vld [vmem:[#allocation6 + $0x60] sm:$0xff]
    %v2436 = vld [vmem:[#allocation6 + $0x68] sm:$0xff]
    %v2437 = vld [vmem:[#allocation6 + $0x70] sm:$0xff]
    %v2438 = vld [vmem:[#allocation6 + $0x78] sm:$0xff]
    %v2439 = vld [vmem:[#allocation6 + $0x80] sm:$0xff]
    %v2440 = vld [vmem:[#allocation6 + $0x88] sm:$0xff]
    %v2441 = vld [vmem:[#allocation6 + $0x90] sm:$0xff]
    %v2442 = vld [vmem:[#allocation6 + $0x98] sm:$0xff]
    %v2443 = vld [vmem:[#allocation6 + $0xa0] sm:$0xff]
    %v2444 = vld [vmem:[#allocation6 + $0xa8] sm:$0xff]
    %v2445 = vld [vmem:[#allocation6 + $0xb0] sm:$0xff]
    %v2446 = vld [vmem:[#allocation6 + $0xb8] sm:$0xff]
    %v2447 = vld [vmem:[#allocation6 + $0xc0] sm:$0xff]
    %v2448 = vld [vmem:[#allocation6 + $0xc8] sm:$0xff]
    %v2449 = vld [vmem:[#allocation6 + $0xd0] sm:$0xff]
    %v2450 = vld [vmem:[#allocation6 + $0xd8] sm:$0xff]
    %v2451 = vld [vmem:[#allocation6 + $0xe0] sm:$0xff]
    %v2452 = vld [vmem:[#allocation6 + $0xe8] sm:$0xff]
    %v2453 = vld [vmem:[#allocation6 + $0xf0] sm:$0xff]
    %v2454 = vld [vmem:[#allocation6 + $0xf8] sm:$0xff]
    %v2455 = vld [vmem:[#allocation7] sm:$0x3]
    %v2457 = vlaneseq
    %v2458 = vshrl.u32 %v2457, 7
    %v2459 = vsub.s32 0, %v2458
    %v2460 = vrot.slane %v2455, %v2459
    %v2461 = vlaneseq
    %v2462 = vshrl.u32 %v2461, 7
    %v2463 = vsub.s32 1, %v2462
    %v2464 = vrot.slane %v2455, %v2463
    %v2499 = vunpack.c.l.b16 %v2423
    %v2500 = vunpack.c.h.b16 %v2423
    %v2501 = vunpack.c.l.b16 %v2424
    %v2502 = vunpack.c.h.b16 %v2424
    %v2503 = vunpack.c.l.b16 %v2425
    %v2504 = vunpack.c.h.b16 %v2425
    %v2505 = vunpack.c.l.b16 %v2426
    %v2506 = vunpack.c.h.b16 %v2426
    %v2507 = vunpack.c.l.b16 %v2427
    %v2508 = vunpack.c.h.b16 %v2427
    %v2509 = vunpack.c.l.b16 %v2428
    %v2510 = vunpack.c.h.b16 %v2428
    %v2511 = vunpack.c.l.b16 %v2429
    %v2512 = vunpack.c.h.b16 %v2429
    %v2513 = vunpack.c.l.b16 %v2430
    %v2514 = vunpack.c.h.b16 %v2430
    %v2515 = vunpack.c.l.b16 %v2431
    %v2516 = vunpack.c.h.b16 %v2431
    %v2517 = vunpack.c.l.b16 %v2432
    %v2518 = vunpack.c.h.b16 %v2432
    %v2519 = vunpack.c.l.b16 %v2433
    %v2520 = vunpack.c.h.b16 %v2433
    %v2521 = vunpack.c.l.b16 %v2434
    %v2522 = vunpack.c.h.b16 %v2434
    %v2523 = vunpack.c.l.b16 %v2435
    %v2524 = vunpack.c.h.b16 %v2435
    %v2525 = vunpack.c.l.b16 %v2436
    %v2526 = vunpack.c.h.b16 %v2436
    %v2527 = vunpack.c.l.b16 %v2437
    %v2528 = vunpack.c.h.b16 %v2437
    %v2529 = vunpack.c.l.b16 %v2438
    %v2530 = vunpack.c.h.b16 %v2438
    %v2531 = vunpack.c.l.b16 %v2439
    %v2532 = vunpack.c.h.b16 %v2439
    %v2533 = vunpack.c.l.b16 %v2440
    %v2534 = vunpack.c.h.b16 %v2440
    %v2535 = vunpack.c.l.b16 %v2441
    %v2536 = vunpack.c.h.b16 %v2441
    %v2537 = vunpack.c.l.b16 %v2442
    %v2538 = vunpack.c.h.b16 %v2442
    %v2539 = vunpack.c.l.b16 %v2443
    %v2540 = vunpack.c.h.b16 %v2443
    %v2541 = vunpack.c.l.b16 %v2444
    %v2542 = vunpack.c.h.b16 %v2444
    %v2543 = vunpack.c.l.b16 %v2445
    %v2544 = vunpack.c.h.b16 %v2445
    %v2545 = vunpack.c.l.b16 %v2446
    %v2546 = vunpack.c.h.b16 %v2446
    %v2547 = vunpack.c.l.b16 %v2447
    %v2548 = vunpack.c.h.b16 %v2447
    %v2549 = vunpack.c.l.b16 %v2448
    %v2550 = vunpack.c.h.b16 %v2448
    %v2551 = vunpack.c.l.b16 %v2449
    %v2552 = vunpack.c.h.b16 %v2449
    %v2553 = vunpack.c.l.b16 %v2450
    %v2554 = vunpack.c.h.b16 %v2450
    %v2555 = vunpack.c.l.b16 %v2451
    %v2556 = vunpack.c.h.b16 %v2451
    %v2557 = vunpack.c.l.b16 %v2452
    %v2558 = vunpack.c.h.b16 %v2452
    %v2559 = vunpack.c.l.b16 %v2453
    %v2560 = vunpack.c.h.b16 %v2453
    %v2561 = vunpack.c.l.b16 %v2454
    %v2562 = vunpack.c.h.b16 %v2454
    %v2563 = vpack.c.b16 %v2501, %v2499
    %v2564 = vpack.c.b16 %v2502, %v2500
    %v2565 = vpack.c.b16 %v2505, %v2503
    %v2566 = vpack.c.b16 %v2506, %v2504
    %v2567 = vpack.c.b16 %v2509, %v2507
    %v2568 = vpack.c.b16 %v2510, %v2508
    %v2569 = vpack.c.b16 %v2513, %v2511
    %v2570 = vpack.c.b16 %v2514, %v2512
    %v2571 = vpack.c.b16 %v2517, %v2515
    %v2572 = vpack.c.b16 %v2518, %v2516
    %v2573 = vpack.c.b16 %v2521, %v2519
    %v2574 = vpack.c.b16 %v2522, %v2520
    %v2575 = vpack.c.b16 %v2525, %v2523
    %v2576 = vpack.c.b16 %v2526, %v2524
    %v2577 = vpack.c.b16 %v2529, %v2527
    %v2578 = vpack.c.b16 %v2530, %v2528
    %v2579 = vpack.c.b16 %v2533, %v2531
    %v2580 = vpack.c.b16 %v2534, %v2532
    %v2581 = vpack.c.b16 %v2537, %v2535
    %v2582 = vpack.c.b16 %v2538, %v2536
    %v2583 = vpack.c.b16 %v2541, %v2539
    %v2584 = vpack.c.b16 %v2542, %v2540
    %v2585 = vpack.c.b16 %v2545, %v2543
    %v2586 = vpack.c.b16 %v2546, %v2544
    %v2587 = vpack.c.b16 %v2549, %v2547
    %v2588 = vpack.c.b16 %v2550, %v2548
    %v2589 = vpack.c.b16 %v2553, %v2551
    %v2590 = vpack.c.b16 %v2554, %v2552
    %v2591 = vpack.c.b16 %v2557, %v2555
    %v2592 = vpack.c.b16 %v2558, %v2556
    %v2593 = vpack.c.b16 %v2561, %v2559
    %v2594 = vpack.c.b16 %v2562, %v2560
    %2627 = vmatprep.subr.bf16.mxu0 %v2578
    %2628 = vmatpush1.bf16.msra.mxu0 %v2577
    %2629 = vmatprep.subr.bf16.mxu0 %v2576
    %2630 = vmatpush1.bf16.msra.mxu0 %v2575
    %2631 = vmatprep.subr.bf16.mxu0 %v2574
    %2632 = vmatpush1.bf16.msra.mxu0 %v2573
    %2633 = vmatprep.subr.bf16.mxu0 %v2572
    %2634 = vmatpush1.bf16.msra.mxu0 %v2571
    %2635 = vmatprep.subr.bf16.mxu0 %v2570
    %2636 = vmatpush1.bf16.msra.mxu0 %v2569
    %2637 = vmatprep.subr.bf16.mxu0 %v2568
    %2638 = vmatpush1.bf16.msra.mxu0 %v2567
    %2639 = vmatprep.subr.bf16.mxu0 %v2566
    %2640 = vmatpush1.bf16.msra.mxu0 %v2565
    %2641 = vmatprep.subr.bf16.mxu0 %v2564
    %2642 = vmatpush1.bf16.msra.mxu0 %v2563
    %2643 = vmatprep.subr.bf16.mxu0 %v2594
    %2644 = vmatpush2.bf16.msra.mxu0 %v2593
    %2645 = vmatprep.subr.bf16.mxu0 %v2592
    %2646 = vmatpush2.bf16.msra.mxu0 %v2591
    %2647 = vmatprep.subr.bf16.mxu0 %v2590
    %2648 = vmatpush2.bf16.msra.mxu0 %v2589
    %2649 = vmatprep.subr.bf16.mxu0 %v2588
    %2650 = vmatpush2.bf16.msra.mxu0 %v2587
    %2651 = vmatprep.subr.bf16.mxu0 %v2586
    %2652 = vmatpush2.bf16.msra.mxu0 %v2585
    %2653 = vmatprep.subr.bf16.mxu0 %v2584
    %2654 = vmatpush2.bf16.msra.mxu0 %v2583
    %2655 = vmatprep.subr.bf16.mxu0 %v2582
    %2656 = vmatpush2.bf16.msra.mxu0 %v2581
    %2657 = vmatprep.subr.bf16.mxu0 %v2580
    %2658 = vmatpush2.bf16.msra.mxu0 %v2579
    %2659 = vmatprep.mubr.bf16.mxu0 %v2422
    %2660 = vmatmul.mubr.bf16.gmra.mxu0 %v2421
    %v2661 = vpop.f32.mrf.mxu0
    %v2662 = vadd.f32 %v2460, %v2661
    %v2663 = vpop.f32.mrf.mxu0
    %v2664 = vadd.f32 %v2464, %v2663
    %v2665 = vpop.f32.mrf.mxu0
    %v2666 = vpop.f32.mrf.mxu0
    %2667 = vdwg.mxu0
    %v2668 = vmax.f32 %v2662, 0.0
    %v2669 = vmax.f32 %v2664, 0.0
    %v2670 = vpack.c.bf16 %v2668, %v2668
    %v2671 = vpack.c.bf16 %v2669, %v2669
    %v2672 = vld [vmem:[%s7] sm:$0xf]
    %v2673 = vld [vmem:[%s7 + $0x4] sm:$0xf]
    %v2674 = vld [vmem:[%s7 + $0x8] sm:$0xf]
    %v2675 = vld [vmem:[%s7 + $0xc] sm:$0xf]
    %v2676 = vld [vmem:[%s7 + $0x10] sm:$0xf]
    %v2677 = vld [vmem:[%s7 + $0x14] sm:$0xf]
    %v2678 = vld [vmem:[%s7 + $0x18] sm:$0xf]
    %v2679 = vld [vmem:[%s7 + $0x1c] sm:$0xf]
    %v2680 = vld [vmem:[%s7 + $0x20] sm:$0xf]
    %v2681 = vld [vmem:[%s7 + $0x24] sm:$0xf]
    %v2682 = vld [vmem:[%s7 + $0x28] sm:$0xf]
    %v2683 = vld [vmem:[%s7 + $0x2c] sm:$0xf]
    %v2684 = vld [vmem:[%s7 + $0x30] sm:$0xf]
    %v2685 = vld [vmem:[%s7 + $0x34] sm:$0xf]
    %v2686 = vld [vmem:[%s7 + $0x38] sm:$0xf]
    %v2687 = vld [vmem:[%s7 + $0x3c] sm:$0xf]
    %v2688 = vld [vmem:[%s7 + $0x40] sm:$0xf]
    %v2689 = vld [vmem:[%s7 + $0x44] sm:$0xf]
    %v2690 = vld [vmem:[%s7 + $0x48] sm:$0xf]
    %v2691 = vld [vmem:[%s7 + $0x4c] sm:$0xf]
    %v2692 = vld [vmem:[%s7 + $0x50] sm:$0xf]
    %v2693 = vld [vmem:[%s7 + $0x54] sm:$0xf]
    %v2694 = vld [vmem:[%s7 + $0x58] sm:$0xf]
    %v2695 = vld [vmem:[%s7 + $0x5c] sm:$0xf]
    %v2696 = vld [vmem:[%s7 + $0x60] sm:$0xf]
    %v2697 = vld [vmem:[%s7 + $0x64] sm:$0xf]
    %v2698 = vld [vmem:[%s7 + $0x68] sm:$0xf]
    %v2699 = vld [vmem:[%s7 + $0x6c] sm:$0xf]
    %v2700 = vld [vmem:[%s7 + $0x70] sm:$0xf]
    %v2701 = vld [vmem:[%s7 + $0x74] sm:$0xf]
    %v2702 = vld [vmem:[%s7 + $0x78] sm:$0xf]
    %v2703 = vld [vmem:[%s7 + $0x7c] sm:$0xf]
    %v2704 = vld [vmem:[%s8] sm:$0x1]
    %v2706 = vlaneseq
    %v2707 = vshrl.u32 %v2706, 7
    %v2708 = vsub.s32 0, %v2707
    %v2709 = vrot.slane %v2704, %v2708
    %v2743 = vunpack.c.l.b16 %v2672
    %v2744 = vunpack.c.l.b16 %v2673
    %v2745 = vunpack.c.l.b16 %v2674
    %v2746 = vunpack.c.l.b16 %v2675
    %v2747 = vunpack.c.l.b16 %v2676
    %v2748 = vunpack.c.l.b16 %v2677
    %v2749 = vunpack.c.l.b16 %v2678
    %v2750 = vunpack.c.l.b16 %v2679
    %v2751 = vunpack.c.l.b16 %v2680
    %v2752 = vunpack.c.l.b16 %v2681
    %v2753 = vunpack.c.l.b16 %v2682
    %v2754 = vunpack.c.l.b16 %v2683
    %v2755 = vunpack.c.l.b16 %v2684
    %v2756 = vunpack.c.l.b16 %v2685
    %v2757 = vunpack.c.l.b16 %v2686
    %v2758 = vunpack.c.l.b16 %v2687
    %v2759 = vunpack.c.l.b16 %v2688
    %v2760 = vunpack.c.l.b16 %v2689
    %v2761 = vunpack.c.l.b16 %v2690
    %v2762 = vunpack.c.l.b16 %v2691
    %v2763 = vunpack.c.l.b16 %v2692
    %v2764 = vunpack.c.l.b16 %v2693
    %v2765 = vunpack.c.l.b16 %v2694
    %v2766 = vunpack.c.l.b16 %v2695
    %v2767 = vunpack.c.l.b16 %v2696
    %v2768 = vunpack.c.l.b16 %v2697
    %v2769 = vunpack.c.l.b16 %v2698
    %v2770 = vunpack.c.l.b16 %v2699
    %v2771 = vunpack.c.l.b16 %v2700
    %v2772 = vunpack.c.l.b16 %v2701
    %v2773 = vunpack.c.l.b16 %v2702
    %v2774 = vunpack.c.l.b16 %v2703
    %v2775 = vpack.c.b16 %v2744, %v2743
    %v2776 = vpack.c.b16 %v2746, %v2745
    %v2777 = vpack.c.b16 %v2748, %v2747
    %v2778 = vpack.c.b16 %v2750, %v2749
    %v2779 = vpack.c.b16 %v2752, %v2751
    %v2780 = vpack.c.b16 %v2754, %v2753
    %v2781 = vpack.c.b16 %v2756, %v2755
    %v2782 = vpack.c.b16 %v2758, %v2757
    %v2783 = vpack.c.b16 %v2760, %v2759
    %v2784 = vpack.c.b16 %v2762, %v2761
    %v2785 = vpack.c.b16 %v2764, %v2763
    %v2786 = vpack.c.b16 %v2766, %v2765
    %v2787 = vpack.c.b16 %v2768, %v2767
    %v2788 = vpack.c.b16 %v2770, %v2769
    %v2789 = vpack.c.b16 %v2772, %v2771
    %v2790 = vpack.c.b16 %v2774, %v2773
    %2807 = vmatprep.subr.bf16.mxu0 0
    %2808 = vmatpush1.bf16.msra.mxu0 %v2782
    %2809 = vmatprep.subr.bf16.mxu0 0
    %2810 = vmatpush1.bf16.msra.mxu0 %v2781
    %2811 = vmatprep.subr.bf16.mxu0 0
    %2812 = vmatpush1.bf16.msra.mxu0 %v2780
    %2813 = vmatprep.subr.bf16.mxu0 0
    %2814 = vmatpush1.bf16.msra.mxu0 %v2779
    %2815 = vmatprep.subr.bf16.mxu0 0
    %2816 = vmatpush1.bf16.msra.mxu0 %v2778
    %2817 = vmatprep.subr.bf16.mxu0 0
    %2818 = vmatpush1.bf16.msra.mxu0 %v2777
    %2819 = vmatprep.subr.bf16.mxu0 0
    %2820 = vmatpush1.bf16.msra.mxu0 %v2776
    %2821 = vmatprep.subr.bf16.mxu0 0
    %2822 = vmatpush1.bf16.msra.mxu0 %v2775
    %2823 = vmatprep.subr.bf16.mxu0 0
    %2824 = vmatpush2.bf16.msra.mxu0 %v2790
    %2825 = vmatprep.subr.bf16.mxu0 0
    %2826 = vmatpush2.bf16.msra.mxu0 %v2789
    %2827 = vmatprep.subr.bf16.mxu0 0
    %2828 = vmatpush2.bf16.msra.mxu0 %v2788
    %2829 = vmatprep.subr.bf16.mxu0 0
    %2830 = vmatpush2.bf16.msra.mxu0 %v2787
    %2831 = vmatprep.subr.bf16.mxu0 0
    %2832 = vmatpush2.bf16.msra.mxu0 %v2786
    %2833 = vmatprep.subr.bf16.mxu0 0
    %2834 = vmatpush2.bf16.msra.mxu0 %v2785
    %2835 = vmatprep.subr.bf16.mxu0 0
    %2836 = vmatpush2.bf16.msra.mxu0 %v2784
    %2837 = vmatprep.subr.bf16.mxu0 0
    %2838 = vmatpush2.bf16.msra.mxu0 %v2783
    %2839 = vmatprep.mubr.bf16.mxu0 %v2671
    %2840 = vmatmul.mubr.bf16.gmra.mxu0 %v2670
    %v2841 = vpop.f32.mrf.mxu0
    %v2842 = vadd.f32 %v2709, %v2841
    %v2843 = vpop.f32.mrf.mxu0
    %v2844 = vpop.f32.mrf.mxu0
    %v2845 = vpop.f32.mrf.mxu0
    %2846 = vdwg.mxu0
    %v2847 = vpack.c.bf16 %v2842, %v2842
    %v2848 = vld [vmem:[%s9] sm:$0xf]
    %v2849 = vld [vmem:[%s9 + $0x4] sm:$0xf]
    %v2850 = vld [vmem:[%s9 + $0x8] sm:$0xf]
    %v2851 = vld [vmem:[%s9 + $0xc] sm:$0xf]
    %v2852 = vld [vmem:[%s9 + $0x10] sm:$0xf]
    %v2853 = vld [vmem:[%s9 + $0x14] sm:$0xf]
    %v2854 = vld [vmem:[%s9 + $0x18] sm:$0xf]
    %v2855 = vld [vmem:[%s9 + $0x1c] sm:$0xf]
    %v2856 = vld [vmem:[#allocation9] sm:$0x1]
    %v2858 = vlaneseq
    %v2859 = vshrl.u32 %v2858, 7
    %v2860 = vsub.s32 0, %v2859
    %v2861 = vrot.slane %v2856, %v2860
    %v2871 = vunpack.c.l.b16 %v2848
    %v2872 = vunpack.c.l.b16 %v2849
    %v2873 = vunpack.c.l.b16 %v2850
    %v2874 = vunpack.c.l.b16 %v2851
    %v2875 = vunpack.c.l.b16 %v2852
    %v2876 = vunpack.c.l.b16 %v2853
    %v2877 = vunpack.c.l.b16 %v2854
    %v2878 = vunpack.c.l.b16 %v2855
    %v2879 = vpack.c.b16 %v2872, %v2871
    %v2880 = vpack.c.b16 %v2874, %v2873
    %v2881 = vpack.c.b16 %v2876, %v2875
    %v2882 = vpack.c.b16 %v2878, %v2877
    %vm2887 = vcmask 523264
    %v2889 = vsel %vm2887, %v2847, 0
    %2891 = vmatprep.subr.bf16.mxu0 0
    %2892 = vmatpush1.bf16.msra.mxu0 0
    %2893 = vmatprep.subr.bf16.mxu0 0
    %2894 = vmatpush1.bf16.msra.mxu0 0
    %2895 = vmatprep.subr.bf16.mxu0 0
    %2896 = vmatpush1.bf16.msra.mxu0 0
    %2897 = vmatprep.subr.bf16.mxu0 0
    %2898 = vmatpush1.bf16.msra.mxu0 0
    %2899 = vmatprep.subr.bf16.mxu0 0
    %2900 = vmatpush1.bf16.msra.mxu0 %v2882
    %2901 = vmatprep.subr.bf16.mxu0 0
    %2902 = vmatpush1.bf16.msra.mxu0 %v2881
    %2903 = vmatprep.subr.bf16.mxu0 0
    %2904 = vmatpush1.bf16.msra.mxu0 %v2880
    %2905 = vmatprep.subr.bf16.mxu0 0
    %2906 = vmatpush1.bf16.msra.mxu0 %v2879
    %2907 = vmatprep.subr.bf16.mxu0 0
    %2908 = vmatpush2.bf16.msra.mxu0 0
    %2909 = vmatprep.subr.bf16.mxu0 0
    %2910 = vmatpush2.bf16.msra.mxu0 0
    %2911 = vmatprep.subr.bf16.mxu0 0
    %2912 = vmatpush2.bf16.msra.mxu0 0
    %2913 = vmatprep.subr.bf16.mxu0 0
    %2914 = vmatpush2.bf16.msra.mxu0 0
    %2915 = vmatprep.subr.bf16.mxu0 0
    %2916 = vmatpush2.bf16.msra.mxu0 0
    %2917 = vmatprep.subr.bf16.mxu0 0
    %2918 = vmatpush2.bf16.msra.mxu0 0
    %2919 = vmatprep.subr.bf16.mxu0 0
    %2920 = vmatpush2.bf16.msra.mxu0 0
    %2921 = vmatprep.subr.bf16.mxu0 0
    %2922 = vmatpush2.bf16.msra.mxu0 0
    %2923 = vmatprep.mubr.bf16.mxu0 0
    %2924 = vmatmul.mubr.bf16.gmra.mxu0 %v2889
    %v2925 = vpop.f32.mrf.mxu0
    %v2926 = vadd.f32 %v2861, %v2925
    %v2927 = vpop.f32.mrf.mxu0
    %v2928 = vpop.f32.mrf.mxu0
    %v2929 = vpop.f32.mrf.mxu0
    %2930 = vdwg.mxu0
    %v2931 = vmax.f32 %v2926, 0.0
    %v2932 = vpack.c.bf16 %v2931, %v2931
    %v2933 = vld [vmem:[#allocation10] sm:$0xff]
    %v2934 = vld [vmem:[#allocation10 + $0x8] sm:$0xff]
    %v2935 = vld [vmem:[#allocation10 + $0x10] sm:$0xff]
    %v2936 = vld [vmem:[#allocation10 + $0x18] sm:$0xff]
    %v2937 = vld [vmem:[#allocation10 + $0x20] sm:$0xff]
    %v2938 = vld [vmem:[#allocation10 + $0x28] sm:$0xff]
    %v2939 = vld [vmem:[#allocation10 + $0x30] sm:$0xff]
    %v2940 = vld [vmem:[#allocation10 + $0x38] sm:$0xff]
    %v2941 = vld [vmem:[#allocation10 + $0x40] sm:$0xff]
    %v2942 = vld [vmem:[#allocation10 + $0x48] sm:$0xff]
    %v2943 = vld [vmem:[#allocation10 + $0x50] sm:$0xff]
    %v2944 = vld [vmem:[#allocation10 + $0x58] sm:$0xff]
    %v2945 = vld [vmem:[#allocation10 + $0x60] sm:$0xff]
    %v2946 = vld [vmem:[#allocation10 + $0x68] sm:$0xff]
    %v2947 = vld [vmem:[#allocation10 + $0x70] sm:$0xff]
    %v2948 = vld [vmem:[#allocation10 + $0x78] sm:$0xff]
    %v2949 = vld [vmem:[#allocation12] sm:$0x3]
    %v2951 = vlaneseq
    %v2952 = vshrl.u32 %v2951, 7
    %v2953 = vsub.s32 0, %v2952
    %v2954 = vrot.slane %v2949, %v2953
    %v2955 = vlaneseq
    %v2956 = vshrl.u32 %v2955, 7
    %v2957 = vsub.s32 1, %v2956
    %v2958 = vrot.slane %v2949, %v2957
    %v2977 = vunpack.c.l.b16 %v2933
    %v2978 = vunpack.c.h.b16 %v2933
    %v2979 = vunpack.c.l.b16 %v2934
    %v2980 = vunpack.c.h.b16 %v2934
    %v2981 = vunpack.c.l.b16 %v2935
    %v2982 = vunpack.c.h.b16 %v2935
    %v2983 = vunpack.c.l.b16 %v2936
    %v2984 = vunpack.c.h.b16 %v2936
    %v2985 = vunpack.c.l.b16 %v2937
    %v2986 = vunpack.c.h.b16 %v2937
    %v2987 = vunpack.c.l.b16 %v2938
    %v2988 = vunpack.c.h.b16 %v2938
    %v2989 = vunpack.c.l.b16 %v2939
    %v2990 = vunpack.c.h.b16 %v2939
    %v2991 = vunpack.c.l.b16 %v2940
    %v2992 = vunpack.c.h.b16 %v2940
    %v2993 = vunpack.c.l.b16 %v2941
    %v2994 = vunpack.c.h.b16 %v2941
    %v2995 = vunpack.c.l.b16 %v2942
    %v2996 = vunpack.c.h.b16 %v2942
    %v2997 = vunpack.c.l.b16 %v2943
    %v2998 = vunpack.c.h.b16 %v2943
    %v2999 = vunpack.c.l.b16 %v2944
    %v3000 = vunpack.c.h.b16 %v2944
    %v3001 = vunpack.c.l.b16 %v2945
    %v3002 = vunpack.c.h.b16 %v2945
    %v3003 = vunpack.c.l.b16 %v2946
    %v3004 = vunpack.c.h.b16 %v2946
    %v3005 = vunpack.c.l.b16 %v2947
    %v3006 = vunpack.c.h.b16 %v2947
    %v3007 = vunpack.c.l.b16 %v2948
    %v3008 = vunpack.c.h.b16 %v2948
    %v3009 = vpack.c.b16 %v2979, %v2977
    %v3010 = vpack.c.b16 %v2980, %v2978
    %v3011 = vpack.c.b16 %v2983, %v2981
    %v3012 = vpack.c.b16 %v2984, %v2982
    %v3013 = vpack.c.b16 %v2987, %v2985
    %v3014 = vpack.c.b16 %v2988, %v2986
    %v3015 = vpack.c.b16 %v2991, %v2989
    %v3016 = vpack.c.b16 %v2992, %v2990
    %v3017 = vpack.c.b16 %v2995, %v2993
    %v3018 = vpack.c.b16 %v2996, %v2994
    %v3019 = vpack.c.b16 %v2999, %v2997
    %v3020 = vpack.c.b16 %v3000, %v2998
    %v3021 = vpack.c.b16 %v3003, %v3001
    %v3022 = vpack.c.b16 %v3004, %v3002
    %v3023 = vpack.c.b16 %v3007, %v3005
    %v3024 = vpack.c.b16 %v3008, %v3006
    %3041 = vmatprep.subr.bf16.mxu0 %v3024
    %3042 = vmatpush1.bf16.msra.mxu0 %v3023
    %3043 = vmatprep.subr.bf16.mxu0 %v3022
    %3044 = vmatpush1.bf16.msra.mxu0 %v3021
    %3045 = vmatprep.subr.bf16.mxu0 %v3020
    %3046 = vmatpush1.bf16.msra.mxu0 %v3019
    %3047 = vmatprep.subr.bf16.mxu0 %v3018
    %3048 = vmatpush1.bf16.msra.mxu0 %v3017
    %3049 = vmatprep.subr.bf16.mxu0 %v3016
    %3050 = vmatpush1.bf16.msra.mxu0 %v3015
    %3051 = vmatprep.subr.bf16.mxu0 %v3014
    %3052 = vmatpush1.bf16.msra.mxu0 %v3013
    %3053 = vmatprep.subr.bf16.mxu0 %v3012
    %3054 = vmatpush1.bf16.msra.mxu0 %v3011
    %3055 = vmatprep.subr.bf16.mxu0 %v3010
    %3056 = vmatpush1.bf16.msra.mxu0 %v3009
    %3057 = vmatprep.subr.bf16.mxu0 0
    %3058 = vmatpush2.bf16.msra.mxu0 0
    %3059 = vmatprep.subr.bf16.mxu0 0
    %3060 = vmatpush2.bf16.msra.mxu0 0
    %3061 = vmatprep.subr.bf16.mxu0 0
    %3062 = vmatpush2.bf16.msra.mxu0 0
    %3063 = vmatprep.subr.bf16.mxu0 0
    %3064 = vmatpush2.bf16.msra.mxu0 0
    %3065 = vmatprep.subr.bf16.mxu0 0
    %3066 = vmatpush2.bf16.msra.mxu0 0
    %3067 = vmatprep.subr.bf16.mxu0 0
    %3068 = vmatpush2.bf16.msra.mxu0 0
    %3069 = vmatprep.subr.bf16.mxu0 0
    %3070 = vmatpush2.bf16.msra.mxu0 0
    %3071 = vmatprep.subr.bf16.mxu0 0
    %3072 = vmatpush2.bf16.msra.mxu0 0
    %3073 = vmatprep.mubr.bf16.mxu0 0
    %3074 = vmatmul.mubr.bf16.gmra.mxu0 %v2932
    %v3075 = vpop.f32.mrf.mxu0
    %v3076 = vadd.f32 %v2954, %v3075
    %v3077 = vpop.f32.mrf.mxu0
    %v3078 = vadd.f32 %v2958, %v3077
    %v3079 = vpop.f32.mrf.mxu0
    %v3080 = vpop.f32.mrf.mxu0
    %3081 = vdwg.mxu0
    %v3082 = vpack.c.bf16 %v3076, %v3076
    %v3083 = vpack.c.bf16 %v3078, %v3078
    %v3084 = vld [vmem:[#allocation13] sm:$0xff]
    %v3085 = vld [vmem:[#allocation13 + $0x8] sm:$0xff]
    %v3086 = vld [vmem:[#allocation13 + $0x10] sm:$0xff]
    %v3087 = vld [vmem:[#allocation13 + $0x18] sm:$0xff]
    %v3088 = vld [vmem:[#allocation13 + $0x20] sm:$0xff]
    %v3089 = vld [vmem:[#allocation13 + $0x28] sm:$0xff]
    %v3090 = vld [vmem:[#allocation13 + $0x30] sm:$0xff]
    %v3091 = vld [vmem:[#allocation13 + $0x38] sm:$0xff]
    %v3092 = vld [vmem:[#allocation13 + $0x40] sm:$0xff]
    %v3093 = vld [vmem:[#allocation13 + $0x48] sm:$0xff]
    %v3094 = vld [vmem:[#allocation13 + $0x50] sm:$0xff]
    %v3095 = vld [vmem:[#allocation13 + $0x58] sm:$0xff]
    %v3096 = vld [vmem:[#allocation13 + $0x60] sm:$0xff]
    %v3097 = vld [vmem:[#allocation13 + $0x68] sm:$0xff]
    %v3098 = vld [vmem:[#allocation13 + $0x70] sm:$0xff]
    %v3099 = vld [vmem:[#allocation13 + $0x78] sm:$0xff]
    %v3100 = vld [vmem:[#allocation13 + $0x80] sm:$0xff]
    %v3101 = vld [vmem:[#allocation13 + $0x88] sm:$0xff]
    %v3102 = vld [vmem:[#allocation13 + $0x90] sm:$0xff]
    %v3103 = vld [vmem:[#allocation13 + $0x98] sm:$0xff]
    %v3104 = vld [vmem:[#allocation13 + $0xa0] sm:$0xff]
    %v3105 = vld [vmem:[#allocation13 + $0xa8] sm:$0xff]
    %v3106 = vld [vmem:[#allocation13 + $0xb0] sm:$0xff]
    %v3107 = vld [vmem:[#allocation13 + $0xb8] sm:$0xff]
    %v3108 = vld [vmem:[#allocation13 + $0xc0] sm:$0xff]
    %v3109 = vld [vmem:[#allocation13 + $0xc8] sm:$0xff]
    %v3110 = vld [vmem:[#allocation13 + $0xd0] sm:$0xff]
    %v3111 = vld [vmem:[#allocation13 + $0xd8] sm:$0xff]
    %v3112 = vld [vmem:[#allocation13 + $0xe0] sm:$0xff]
    %v3113 = vld [vmem:[#allocation13 + $0xe8] sm:$0xff]
    %v3114 = vld [vmem:[#allocation13 + $0xf0] sm:$0xff]
    %v3115 = vld [vmem:[#allocation13 + $0xf8] sm:$0xff]
    %v3116 = vld [vmem:[#allocation15] sm:$0x3]
    %v3118 = vlaneseq
    %v3119 = vshrl.u32 %v3118, 7
    %v3120 = vsub.s32 0, %v3119
    %v3121 = vrot.slane %v3116, %v3120
    %v3122 = vlaneseq
    %v3123 = vshrl.u32 %v3122, 7
    %v3124 = vsub.s32 1, %v3123
    %v3125 = vrot.slane %v3116, %v3124
    %v3160 = vunpack.c.l.b16 %v3084
    %v3161 = vunpack.c.h.b16 %v3084
    %v3162 = vunpack.c.l.b16 %v3085
    %v3163 = vunpack.c.h.b16 %v3085
    %v3164 = vunpack.c.l.b16 %v3086
    %v3165 = vunpack.c.h.b16 %v3086
    %v3166 = vunpack.c.l.b16 %v3087
    %v3167 = vunpack.c.h.b16 %v3087
    %v3168 = vunpack.c.l.b16 %v3088
    %v3169 = vunpack.c.h.b16 %v3088
    %v3170 = vunpack.c.l.b16 %v3089
    %v3171 = vunpack.c.h.b16 %v3089
    %v3172 = vunpack.c.l.b16 %v3090
    %v3173 = vunpack.c.h.b16 %v3090
    %v3174 = vunpack.c.l.b16 %v3091
    %v3175 = vunpack.c.h.b16 %v3091
    %v3176 = vunpack.c.l.b16 %v3092
    %v3177 = vunpack.c.h.b16 %v3092
    %v3178 = vunpack.c.l.b16 %v3093
    %v3179 = vunpack.c.h.b16 %v3093
    %v3180 = vunpack.c.l.b16 %v3094
    %v3181 = vunpack.c.h.b16 %v3094
    %v3182 = vunpack.c.l.b16 %v3095
    %v3183 = vunpack.c.h.b16 %v3095
    %v3184 = vunpack.c.l.b16 %v3096
    %v3185 = vunpack.c.h.b16 %v3096
    %v3186 = vunpack.c.l.b16 %v3097
    %v3187 = vunpack.c.h.b16 %v3097
    %v3188 = vunpack.c.l.b16 %v3098
    %v3189 = vunpack.c.h.b16 %v3098
    %v3190 = vunpack.c.l.b16 %v3099
    %v3191 = vunpack.c.h.b16 %v3099
    %v3192 = vunpack.c.l.b16 %v3100
    %v3193 = vunpack.c.h.b16 %v3100
    %v3194 = vunpack.c.l.b16 %v3101
    %v3195 = vunpack.c.h.b16 %v3101
    %v3196 = vunpack.c.l.b16 %v3102
    %v3197 = vunpack.c.h.b16 %v3102
    %v3198 = vunpack.c.l.b16 %v3103
    %v3199 = vunpack.c.h.b16 %v3103
    %v3200 = vunpack.c.l.b16 %v3104
    %v3201 = vunpack.c.h.b16 %v3104
    %v3202 = vunpack.c.l.b16 %v3105
    %v3203 = vunpack.c.h.b16 %v3105
    %v3204 = vunpack.c.l.b16 %v3106
    %v3205 = vunpack.c.h.b16 %v3106
    %v3206 = vunpack.c.l.b16 %v3107
    %v3207 = vunpack.c.h.b16 %v3107
    %v3208 = vunpack.c.l.b16 %v3108
    %v3209 = vunpack.c.h.b16 %v3108
    %v3210 = vunpack.c.l.b16 %v3109
    %v3211 = vunpack.c.h.b16 %v3109
    %v3212 = vunpack.c.l.b16 %v3110
    %v3213 = vunpack.c.h.b16 %v3110
    %v3214 = vunpack.c.l.b16 %v3111
    %v3215 = vunpack.c.h.b16 %v3111
    %v3216 = vunpack.c.l.b16 %v3112
    %v3217 = vunpack.c.h.b16 %v3112
    %v3218 = vunpack.c.l.b16 %v3113
    %v3219 = vunpack.c.h.b16 %v3113
    %v3220 = vunpack.c.l.b16 %v3114
    %v3221 = vunpack.c.h.b16 %v3114
    %v3222 = vunpack.c.l.b16 %v3115
    %v3223 = vunpack.c.h.b16 %v3115
    %v3224 = vpack.c.b16 %v3162, %v3160
    %v3225 = vpack.c.b16 %v3163, %v3161
    %v3226 = vpack.c.b16 %v3166, %v3164
    %v3227 = vpack.c.b16 %v3167, %v3165
    %v3228 = vpack.c.b16 %v3170, %v3168
    %v3229 = vpack.c.b16 %v3171, %v3169
    %v3230 = vpack.c.b16 %v3174, %v3172
    %v3231 = vpack.c.b16 %v3175, %v3173
    %v3232 = vpack.c.b16 %v3178, %v3176
    %v3233 = vpack.c.b16 %v3179, %v3177
    %v3234 = vpack.c.b16 %v3182, %v3180
    %v3235 = vpack.c.b16 %v3183, %v3181
    %v3236 = vpack.c.b16 %v3186, %v3184
    %v3237 = vpack.c.b16 %v3187, %v3185
    %v3238 = vpack.c.b16 %v3190, %v3188
    %v3239 = vpack.c.b16 %v3191, %v3189
    %v3240 = vpack.c.b16 %v3194, %v3192
    %v3241 = vpack.c.b16 %v3195, %v3193
    %v3242 = vpack.c.b16 %v3198, %v3196
    %v3243 = vpack.c.b16 %v3199, %v3197
    %v3244 = vpack.c.b16 %v3202, %v3200
    %v3245 = vpack.c.b16 %v3203, %v3201
    %v3246 = vpack.c.b16 %v3206, %v3204
    %v3247 = vpack.c.b16 %v3207, %v3205
    %v3248 = vpack.c.b16 %v3210, %v3208
    %v3249 = vpack.c.b16 %v3211, %v3209
    %v3250 = vpack.c.b16 %v3214, %v3212
    %v3251 = vpack.c.b16 %v3215, %v3213
    %v3252 = vpack.c.b16 %v3218, %v3216
    %v3253 = vpack.c.b16 %v3219, %v3217
    %v3254 = vpack.c.b16 %v3222, %v3220
    %v3255 = vpack.c.b16 %v3223, %v3221
    %3288 = vmatprep.subr.bf16.mxu0 %v3239
    %3289 = vmatpush1.bf16.msra.mxu0 %v3238
    %3290 = vmatprep.subr.bf16.mxu0 %v3237
    %3291 = vmatpush1.bf16.msra.mxu0 %v3236
    %3292 = vmatprep.subr.bf16.mxu0 %v3235
    %3293 = vmatpush1.bf16.msra.mxu0 %v3234
    %3294 = vmatprep.subr.bf16.mxu0 %v3233
    %3295 = vmatpush1.bf16.msra.mxu0 %v3232
    %3296 = vmatprep.subr.bf16.mxu0 %v3231
    %3297 = vmatpush1.bf16.msra.mxu0 %v3230
    %3298 = vmatprep.subr.bf16.mxu0 %v3229
    %3299 = vmatpush1.bf16.msra.mxu0 %v3228
    %3300 = vmatprep.subr.bf16.mxu0 %v3227
    %3301 = vmatpush1.bf16.msra.mxu0 %v3226
    %3302 = vmatprep.subr.bf16.mxu0 %v3225
    %3303 = vmatpush1.bf16.msra.mxu0 %v3224
    %3304 = vmatprep.subr.bf16.mxu0 %v3255
    %3305 = vmatpush2.bf16.msra.mxu0 %v3254
    %3306 = vmatprep.subr.bf16.mxu0 %v3253
    %3307 = vmatpush2.bf16.msra.mxu0 %v3252
    %3308 = vmatprep.subr.bf16.mxu0 %v3251
    %3309 = vmatpush2.bf16.msra.mxu0 %v3250
    %3310 = vmatprep.subr.bf16.mxu0 %v3249
    %3311 = vmatpush2.bf16.msra.mxu0 %v3248
    %3312 = vmatprep.subr.bf16.mxu0 %v3247
    %3313 = vmatpush2.bf16.msra.mxu0 %v3246
    %3314 = vmatprep.subr.bf16.mxu0 %v3245
    %3315 = vmatpush2.bf16.msra.mxu0 %v3244
    %3316 = vmatprep.subr.bf16.mxu0 %v3243
    %3317 = vmatpush2.bf16.msra.mxu0 %v3242
    %3318 = vmatprep.subr.bf16.mxu0 %v3241
    %3319 = vmatpush2.bf16.msra.mxu0 %v3240
    %3320 = vmatprep.mubr.bf16.mxu0 %v3083
    %3321 = vmatmul.mubr.bf16.gmra.mxu0 %v3082
    %v3322 = vpop.f32.mrf.mxu0
    %v3323 = vadd.f32 %v3121, %v3322
    %v3324 = vpop.f32.mrf.mxu0
    %v3325 = vadd.f32 %v3125, %v3324
    %v3326 = vpop.f32.mrf.mxu0
    %v3327 = vpop.f32.mrf.mxu0
    %3328 = vdwg.mxu0
    %v3329 = vmax.f32 %v3323, 0.0
    %v3330 = vmax.f32 %v3325, 0.0
    %v3331 = vpack.c.bf16 %v3329, %v3329
    %v3332 = vpack.c.bf16 %v3330, %v3330
    %v3333 = vld [vmem:[#allocation16] sm:$0xf]
    %v3334 = vld [vmem:[#allocation16 + $0x4] sm:$0xf]
    %v3335 = vld [vmem:[#allocation16 + $0x8] sm:$0xf]
    %v3336 = vld [vmem:[#allocation16 + $0xc] sm:$0xf]
    %v3337 = vld [vmem:[#allocation16 + $0x10] sm:$0xf]
    %v3338 = vld [vmem:[#allocation16 + $0x14] sm:$0xf]
    %v3339 = vld [vmem:[#allocation16 + $0x18] sm:$0xf]
    %v3340 = vld [vmem:[#allocation16 + $0x1c] sm:$0xf]
    %v3341 = vld [vmem:[#allocation16 + $0x20] sm:$0xf]
    %v3342 = vld [vmem:[#allocation16 + $0x24] sm:$0xf]
    %v3343 = vld [vmem:[#allocation16 + $0x28] sm:$0xf]
    %v3344 = vld [vmem:[#allocation16 + $0x2c] sm:$0xf]
    %v3345 = vld [vmem:[#allocation16 + $0x30] sm:$0xf]
    %v3346 = vld [vmem:[#allocation16 + $0x34] sm:$0xf]
    %v3347 = vld [vmem:[#allocation16 + $0x38] sm:$0xf]
    %v3348 = vld [vmem:[#allocation16 + $0x3c] sm:$0xf]
    %v3349 = vld [vmem:[#allocation16 + $0x40] sm:$0xf]
    %v3350 = vld [vmem:[#allocation16 + $0x44] sm:$0xf]
    %v3351 = vld [vmem:[#allocation16 + $0x48] sm:$0xf]
    %v3352 = vld [vmem:[#allocation16 + $0x4c] sm:$0xf]
    %v3353 = vld [vmem:[#allocation16 + $0x50] sm:$0xf]
    %v3354 = vld [vmem:[#allocation16 + $0x54] sm:$0xf]
    %v3355 = vld [vmem:[#allocation16 + $0x58] sm:$0xf]
    %v3356 = vld [vmem:[#allocation16 + $0x5c] sm:$0xf]
    %v3357 = vld [vmem:[#allocation16 + $0x60] sm:$0xf]
    %v3358 = vld [vmem:[#allocation16 + $0x64] sm:$0xf]
    %v3359 = vld [vmem:[#allocation16 + $0x68] sm:$0xf]
    %v3360 = vld [vmem:[#allocation16 + $0x6c] sm:$0xf]
    %v3361 = vld [vmem:[#allocation16 + $0x70] sm:$0xf]
    %v3362 = vld [vmem:[#allocation16 + $0x74] sm:$0xf]
    %v3363 = vld [vmem:[#allocation16 + $0x78] sm:$0xf]
    %v3364 = vld [vmem:[#allocation16 + $0x7c] sm:$0xf]
    %v3365 = vld [vmem:[#allocation18] sm:$0x1]
    %v3367 = vlaneseq
    %v3368 = vshrl.u32 %v3367, 7
    %v3369 = vsub.s32 0, %v3368
    %v3370 = vrot.slane %v3365, %v3369
    %v3404 = vunpack.c.l.b16 %v3333
    %v3405 = vunpack.c.l.b16 %v3334
    %v3406 = vunpack.c.l.b16 %v3335
    %v3407 = vunpack.c.l.b16 %v3336
    %v3408 = vunpack.c.l.b16 %v3337
    %v3409 = vunpack.c.l.b16 %v3338
    %v3410 = vunpack.c.l.b16 %v3339
    %v3411 = vunpack.c.l.b16 %v3340
    %v3412 = vunpack.c.l.b16 %v3341
    %v3413 = vunpack.c.l.b16 %v3342
    %v3414 = vunpack.c.l.b16 %v3343
    %v3415 = vunpack.c.l.b16 %v3344
    %v3416 = vunpack.c.l.b16 %v3345
    %v3417 = vunpack.c.l.b16 %v3346
    %v3418 = vunpack.c.l.b16 %v3347
    %v3419 = vunpack.c.l.b16 %v3348
    %v3420 = vunpack.c.l.b16 %v3349
    %v3421 = vunpack.c.l.b16 %v3350
    %v3422 = vunpack.c.l.b16 %v3351
    %v3423 = vunpack.c.l.b16 %v3352
    %v3424 = vunpack.c.l.b16 %v3353
    %v3425 = vunpack.c.l.b16 %v3354
    %v3426 = vunpack.c.l.b16 %v3355
    %v3427 = vunpack.c.l.b16 %v3356
    %v3428 = vunpack.c.l.b16 %v3357
    %v3429 = vunpack.c.l.b16 %v3358
    %v3430 = vunpack.c.l.b16 %v3359
    %v3431 = vunpack.c.l.b16 %v3360
    %v3432 = vunpack.c.l.b16 %v3361
    %v3433 = vunpack.c.l.b16 %v3362
    %v3434 = vunpack.c.l.b16 %v3363
    %v3435 = vunpack.c.l.b16 %v3364
    %v3436 = vpack.c.b16 %v3405, %v3404
    %v3437 = vpack.c.b16 %v3407, %v3406
    %v3438 = vpack.c.b16 %v3409, %v3408
    %v3439 = vpack.c.b16 %v3411, %v3410
    %v3440 = vpack.c.b16 %v3413, %v3412
    %v3441 = vpack.c.b16 %v3415, %v3414
    %v3442 = vpack.c.b16 %v3417, %v3416
    %v3443 = vpack.c.b16 %v3419, %v3418
    %v3444 = vpack.c.b16 %v3421, %v3420
    %v3445 = vpack.c.b16 %v3423, %v3422
    %v3446 = vpack.c.b16 %v3425, %v3424
    %v3447 = vpack.c.b16 %v3427, %v3426
    %v3448 = vpack.c.b16 %v3429, %v3428
    %v3449 = vpack.c.b16 %v3431, %v3430
    %v3450 = vpack.c.b16 %v3433, %v3432
    %v3451 = vpack.c.b16 %v3435, %v3434
    %3468 = vmatprep.subr.bf16.mxu0 0
    %3469 = vmatpush1.bf16.msra.mxu0 %v3443
    %3470 = vmatprep.subr.bf16.mxu0 0
    %3471 = vmatpush1.bf16.msra.mxu0 %v3442
    %3472 = vmatprep.subr.bf16.mxu0 0
    %3473 = vmatpush1.bf16.msra.mxu0 %v3441
    %3474 = vmatprep.subr.bf16.mxu0 0
    %3475 = vmatpush1.bf16.msra.mxu0 %v3440
    %3476 = vmatprep.subr.bf16.mxu0 0
    %3477 = vmatpush1.bf16.msra.mxu0 %v3439
    %3478 = vmatprep.subr.bf16.mxu0 0
    %3479 = vmatpush1.bf16.msra.mxu0 %v3438
    %3480 = vmatprep.subr.bf16.mxu0 0
    %3481 = vmatpush1.bf16.msra.mxu0 %v3437
    %3482 = vmatprep.subr.bf16.mxu0 0
    %3483 = vmatpush1.bf16.msra.mxu0 %v3436
    %3484 = vmatprep.subr.bf16.mxu0 0
    %3485 = vmatpush2.bf16.msra.mxu0 %v3451
    %3486 = vmatprep.subr.bf16.mxu0 0
    %3487 = vmatpush2.bf16.msra.mxu0 %v3450
    %3488 = vmatprep.subr.bf16.mxu0 0
    %3489 = vmatpush2.bf16.msra.mxu0 %v3449
    %3490 = vmatprep.subr.bf16.mxu0 0
    %3491 = vmatpush2.bf16.msra.mxu0 %v3448
    %3492 = vmatprep.subr.bf16.mxu0 0
    %3493 = vmatpush2.bf16.msra.mxu0 %v3447
    %3494 = vmatprep.subr.bf16.mxu0 0
    %3495 = vmatpush2.bf16.msra.mxu0 %v3446
    %3496 = vmatprep.subr.bf16.mxu0 0
    %3497 = vmatpush2.bf16.msra.mxu0 %v3445
    %3498 = vmatprep.subr.bf16.mxu0 0
    %3499 = vmatpush2.bf16.msra.mxu0 %v3444
    %3500 = vmatprep.mubr.bf16.mxu0 %v3332
    %3501 = vmatmul.mubr.bf16.gmra.mxu0 %v3331
    %v3502 = vpop.f32.mrf.mxu0
    %v3503 = vadd.f32 %v3370, %v3502
    %v3504 = vpop.f32.mrf.mxu0
    %v3505 = vpop.f32.mrf.mxu0
    %v3506 = vpop.f32.mrf.mxu0
    %3507 = vdwg.mxu0
    %v3514 = vcombine.low %v2415, %v2417
    %v3515 = vcombine.low %v3076, %v3078
    %v3517 = vunpack.c.l.s4 1983009808
    %v3518 = vunpack.c.0.s8 %v3517
    %v3519 = vlaneseq
    %v3520 = vshrl.u32 %v3519, 7
    %v3521 = vsub.s32 %v3518, %v3520
    %v3522 = vrot.slane %v3514, %v3521
    %v3524 = vunpack.c.l.s4 1983009808
    %v3525 = vunpack.c.0.s8 %v3524
    %v3526 = vlaneseq
    %v3527 = vshrl.u32 %v3526, 7
    %v3528 = vsub.s32 %v3525, %v3527
    %v3529 = vrot.slane %v3515, %v3528
    %v3530 = vcombine.low %v3522, %v3529
    %v3531 = vcombine.low %v2842, %v3503
    %v3533 = vunpack.c.l.s4 1983009808
    %v3534 = vunpack.c.0.s8 %v3533
    %v3535 = vlaneseq
    %v3536 = vshrl.u32 %v3535, 7
    %v3537 = vsub.s32 %v3534, %v3536
    %v3538 = vrot.slane %v3531, %v3537
    %3541 = vst [vmem:[%s17] sm:$0xff] %v3530
    %3542 = vst [vmem:[%s17 + $0x8] sm:$0xf] %v3538
    // Predicated region
    $region114: #{cnn_ae_forward.1} parent=1 // pred_check
      _
    $region115: #{cnn_ae_forward.1} parent=1 // pred_check_branch
      %3544 = sbr.rel (0) target = $region117
    $region116: #{cnn_ae_forward.1} parent=1 // pred_region
      _
    $region117: #{cnn_ae_forward.1} parent=1 // pred_fallthru
      _
    // Predicated region
    $region118: #{cnn_ae_forward.1} parent=1 // pred_check
      _
    $region119: #{cnn_ae_forward.1} parent=1 // pred_check_branch
      %3546 = sbr.rel (0) target = $region121
    $region120: #{cnn_ae_forward.1} parent=1 // pred_region
      _
    $region121: #{cnn_ae_forward.1} parent=1 // pred_fallthru
      _
    %3547 = vsyncpa [#allocation3], 1
    %3548 = vsyncpa [#allocation5], 1
    %3549 = vsyncpa [#allocation8], 1
    %3550 = vsyncpa [#allocation11], 1
    %3551 = vsyncpa [#allocation14], 1
    %3552 = vsyncpa [#allocation17], 1

</llo_original>
